<compile_context>
chip_gen: v5e
topology: v5e:2x2
jax: 0.10.0
libtpu: 0.0.40
codegen_flags: <defaults>
</compile_context>

<pallas_src>
import functools

import numpy as np
import jax
import jax.numpy as jnp
from jax.experimental import pallas as pl
from jax.experimental.pallas import tpu as pltpu


# ----------------------------- fused Pallas kernel -----------------------------

def _encoder_kernel(x_ref,
                    w1_ref, s1_ref, b1_ref,
                    t2_ref, w2_ref, s2_ref, b2_ref,
                    t3_ref, w3_ref, s3_ref, b3_ref,
                    wh_ref, bh_ref,
                    out_ref,
                    *, p2, p3):
    """Whole encoder for ONE sample (grid axis = batch); everything on-chip."""

    def bn_relu(acc, s_ref, b_ref):          # folded BN + conv-bias + ReLU, f32
        return jnp.maximum(acc * s_ref[...] + b_ref[...], 0.0)

    # ---- layer 1: wrapper-side im2col -> single (P1, 27) @ (27, 64) dot ----
    a = jnp.dot(x_ref[0], w1_ref[...], preferred_element_type=jnp.float32)
    a = bn_relu(a, s1_ref, b1_ref).astype(jnp.bfloat16)

    # ---- layers 2/3: one fused 0/1 tap-selection dot + 9 per-tap weight dots
    def conv_bn_relu(a_bf, t_ref, w_ref, s_ref, b_ref, m_out):
        c_out = w_ref.shape[2]
        # (9*m_out, m_in) @ (m_in, c_in): pure row gather (each T row one-hot)
        taps = jnp.dot(t_ref[...], a_bf, preferred_element_type=jnp.float32)
        acc = jnp.zeros((m_out, c_out), jnp.float32)
        for t in range(9):                    # unrolled 3x3 taps
            acc = acc + jnp.dot(
                taps[t * m_out:(t + 1) * m_out, :].astype(jnp.bfloat16),
                w_ref[t], preferred_element_type=jnp.float32)
        return bn_relu(acc, s_ref, b_ref)

    a = conv_bn_relu(a, t2_ref, w2_ref, s2_ref, b2_ref, p2).astype(jnp.bfloat16)
    a3 = conv_bn_relu(a, t3_ref, w3_ref, s3_ref, b3_ref, p3)     # (p3, 256) f32

    # ---- merged mean/log_var head; NCHW flatten folded into wh offline ----
    # (unrolled over the p3 spatial rows to avoid an in-kernel sublane->lane
    #  reshape; per-sample M=1 so this is equivalent to one K=hidden dot)
    res = bh_ref[...]                                           # (1, 2*latent)
    for q in range(p3):
        res = res + jnp.dot(a3[q:q + 1, :].astype(jnp.bfloat16), wh_ref[q],
                            preferred_element_type=jnp.float32)
    out_ref[0] = res


# ------------------------------ jit-able wrapper ------------------------------

def _im2col_layer1(x_nchw):
    """(N,3,H,W) -> (N, Ho*Wo, 27) bf16 patches for 3x3 / stride 2 / pad 1."""
    n, c, h, w = x_nchw.shape
    ho, wo = (h - 1) // 2 + 1, (w - 1) // 2 + 1
    xp = jnp.pad(jnp.transpose(x_nchw, (0, 2, 3, 1)),
                 ((0, 0), (1, 1), (1, 1), (0, 0)))               # NHWC, padded
    cols = [xp[:, kh:kh + 2 * ho - 1:2, kw:kw + 2 * wo - 1:2, :]
            for kh in range(3) for kw in range(3)]               # 9 x (N,Ho,Wo,3)
    return jnp.stack(cols, axis=3).reshape(n, ho * wo, 9 * c).astype(jnp.bfloat16)


def encoder_forward(x_nchw, prep):
    """Tiny XLA-side im2col + one fused pallas_call over a batch grid + split."""
    n = x_nchw.shape[0]
    patches = _im2col_layer1(x_nchw)                             # (N, P1, 27)

    args = (patches,
            prep["w1"], prep["s1"], prep["b1"],
            prep["t2"], prep["w2"], prep["s2"], prep["b2"],
            prep["t3"], prep["w3"], prep["s3"], prep["b3"],
            prep["wh"], prep["bh"])
    p2 = prep["t2"].shape[0] // 9
    p3 = prep["t3"].shape[0] // 9
    two_latent = prep["bh"].shape[1]

    def const_spec(a):                       # constant across the batch grid
        nd = a.ndim
        return pl.BlockSpec(a.shape, lambda b: (0,) * nd)

    in_specs = ([pl.BlockSpec((1,) + patches.shape[1:], lambda b: (b, 0, 0))]
                + [const_spec(a) for a in args[1:]])

    kern = functools.partial(_encoder_kernel, p2=p2, p3=p3)
    out = pl.pallas_call(
        kern,
        out_shape=jax.ShapeDtypeStruct((n, 1, two_latent), jnp.float32),
        grid=(n,),
        in_specs=in_specs,
        out_specs=pl.BlockSpec((1, 1, two_latent), lambda b: (b, 0, 0)),
        compiler_params=pltpu.CompilerParams(
            dimension_semantics=("parallel",)),   # v7x: shard batch over 2 TCs
    )(*args)

    lat = two_latent // 2
    return out[:, 0, :lat], out[:, 0, lat:]


# --------------------- one-time parameter preparation (host) ---------------------

def _build_tap_select(h, w):
    """Per-sample 0/1 matrix (9*M_out, M_in): row t*M_out+m selects the input
    row feeding output position m through tap t=(kh*3+kw) of a 3x3/s2/p1 conv."""
    ho, wo = (h - 1) // 2 + 1, (w - 1) // 2 + 1
    m_in, m_out = h * w, ho * wo
    t_mat = np.zeros((9 * m_out, m_in), np.float32)
    for oh in range(ho):
        for ow in range(wo):
            m = oh * wo + ow
            for kh in range(3):
                for kw in range(3):
                    hh, ww = 2 * oh + kh - 1, 2 * ow + kw - 1
                    if 0 <= hh < h and 0 <= ww < w:       # zero pad -> no entry
                        t_mat[(kh * 3 + kw) * m_out + m, hh * w + ww] = 1.0
    return t_mat, ho, wo


def prepare_encoder(params, spatial):
    """Fold BN, permute weights to bf16 tap layout, merge heads, build T2/T3."""
    prep = {}

    # layer 1: no selection matrix (im2col happens in the wrapper)
    l1 = params["cnn"][0]
    c_out1, c_in1 = l1["w"].shape[:2]
    prep["w1"] = jnp.transpose(l1["w"], (2, 3, 1, 0)).reshape(
        9 * c_in1, c_out1).astype(jnp.bfloat16)                  # (27, 64)
    scale1 = l1["gamma"] / jnp.sqrt(l1["rvar"] + 1e-5)
    prep["s1"] = scale1.reshape(1, c_out1).astype(jnp.float32)
    prep["b1"] = (l1["beta"] + (l1["b"] - l1["rmean"]) * scale1
                  ).reshape(1, c_out1).astype(jnp.float32)

    h = w = (spatial - 1) // 2 + 1                                # after layer 1
    c_out = c_out1
    for li, layer in enumerate(params["cnn"][1:], start=2):
        t_mat, ho, wo = _build_tap_select(h, w)
        c_out, c_in = layer["w"].shape[:2]
        w_taps = jnp.transpose(layer["w"], (2, 3, 1, 0)).reshape(9, c_in, c_out)
        scale = layer["gamma"] / jnp.sqrt(layer["rvar"] + 1e-5)
        shift = layer["beta"] + (layer["b"] - layer["rmean"]) * scale
        prep[f"t{li}"] = jnp.asarray(t_mat, jnp.bfloat16)         # 0/1: exact
        prep[f"w{li}"] = w_taps.astype(jnp.bfloat16)
        prep[f"s{li}"] = scale.reshape(1, c_out).astype(jnp.float32)
        prep[f"b{li}"] = shift.reshape(1, c_out).astype(jnp.float32)
        h, w = ho, wo

    p3 = h * w
    hidden = c_out * p3
    latent = params["mean"]["w"].shape[0]
    assert params["mean"]["w"].shape[1] == hidden, "hidden_dim mismatch"
    # merge mean/var heads and fold the NCHW flatten order into the weights:
    # wh[q, c, j] = Wcat[j, c*P3 + q]   (q = oh*W3 + ow)
    w_cat = jnp.concatenate([params["mean"]["w"], params["var"]["w"]], axis=0)
    prep["wh"] = jnp.transpose(
        w_cat.reshape(2 * latent, c_out, p3), (2, 1, 0)).astype(jnp.bfloat16)
    prep["bh"] = jnp.concatenate(
        [params["mean"]["b"], params["var"]["b"]]
    ).reshape(1, 2 * latent).astype(jnp.float32)
    return prep


# ------------------------------ params / reference ------------------------------

def init_params(key, hidden_dim, latent_dim):
    conv_dims = [(3, 64), (64, 128), (128, 256)]
    params = {"cnn": []}
    for c_in, c_out in conv_dims:
        key, kw, kb, kg, kbe, km, kv = jax.random.split(key, 7)
        params["cnn"].append({
            "w": 0.05 * jax.random.normal(kw, (c_out, c_in, 3, 3), jnp.float32),
            "b": 0.05 * jax.random.normal(kb, (c_out,), jnp.float32),
            "gamma": 1.0 + 0.05 * jax.random.normal(kg, (c_out,), jnp.float32),
            "beta": 0.05 * jax.random.normal(kbe, (c_out,), jnp.float32),
            "rmean": 0.05 * jax.random.normal(km, (c_out,), jnp.float32),
            "rvar": jax.random.uniform(kv, (c_out,), jnp.float32, 0.5, 1.5),
        })
    key, kmw, kmb, kvw, kvb = jax.random.split(key, 5)
    params["mean"] = {
        "w": 0.05 * jax.random.normal(kmw, (latent_dim, hidden_dim), jnp.float32),
        "b": 0.05 * jax.random.normal(kmb, (latent_dim,), jnp.float32),
    }
    params["var"] = {
        "w": 0.05 * jax.random.normal(kvw, (latent_dim, hidden_dim), jnp.float32),
        "b": 0.05 * jax.random.normal(kvb, (latent_dim,), jnp.float32),
    }
    return params


def _reference_forward(x_nchw, params):
    """Pure-JAX reference (eval-mode BN) for a correctness sanity check."""
    x = x_nchw
    for layer in params["cnn"]:
        x = jax.lax.conv_general_dilated(
            x, layer["w"], window_strides=(2, 2), padding=((1, 1), (1, 1)),
            dimension_numbers=("NCHW", "OIHW", "NCHW"),
            precision=jax.lax.Precision.HIGHEST)
        x = x + layer["b"].reshape(1, -1, 1, 1)
        scale = (layer["gamma"] / jnp.sqrt(layer["rvar"] + 1e-5)).reshape(1, -1, 1, 1)
        x = scale * (x - layer["rmean"].reshape(1, -1, 1, 1)) \
            + layer["beta"].reshape(1, -1, 1, 1)
        x = jnp.maximum(x, 0.0)
    feat = x.reshape(x.shape[0], -1)
    mean = feat @ params["mean"]["w"].T + params["mean"]["b"]
    log_var = feat @ params["var"]["w"].T + params["var"]["b"]
    return mean, log_var


# ------------------------------------- main -------------------------------------

if __name__ == "__main__":
    # batch=2, in_channels=3, spatial=16 -> after 3 stride-2 convs the feature
    # map is (256, 2, 2), so hidden_dim = 256*2*2 = 1024.
    batch, spatial = 2, 16
    hidden_dim = 256 * (spatial // 8) * (spatial // 8)
    latent_dim = 32

    key = jax.random.PRNGKey(0)
    key, kx = jax.random.split(key)
    x = jax.random.normal(kx, (batch, 3, spatial, spatial), jnp.float32)  # NCHW
    params = init_params(key, hidden_dim, latent_dim)

    prep = prepare_encoder(params, spatial)               # one-time, host side
    fwd = jax.jit(encoder_forward)
    mean, log_var = fwd(x, prep)
    jax.block_until_ready((mean, log_var))
    assert mean.shape == (batch, latent_dim) and log_var.shape == (batch, latent_dim)

    # sanity check against the pure-JAX reference; tolerance sized for bf16
    # matmul operands with f32 accumulation (structural bugs would be O(1) off).
    mean_ref, logvar_ref = _reference_forward(x, params)
    np.testing.assert_allclose(np.asarray(mean), np.asarray(mean_ref),
                               rtol=2e-2, atol=2e-2)
    np.testing.assert_allclose(np.asarray(log_var), np.asarray(logvar_ref),
                               rtol=2e-2, atol=2e-2)
    print("KERNEL_OK")
</pallas_src>

<mosaic_0001>
module attributes {stable_mosaic.version = 11 : i64} {
  func.func @_encoder_kernel(%arg0: i32, %arg1: memref<1x64x27xbf16, #tpu.memory_space<vmem>>, %arg2: memref<27x64xbf16, #tpu.memory_space<vmem>>, %arg3: memref<1x64xf32, #tpu.memory_space<vmem>>, %arg4: memref<1x64xf32, #tpu.memory_space<vmem>>, %arg5: memref<144x64xbf16, #tpu.memory_space<vmem>>, %arg6: memref<9x64x128xbf16, #tpu.memory_space<vmem>>, %arg7: memref<1x128xf32, #tpu.memory_space<vmem>>, %arg8: memref<1x128xf32, #tpu.memory_space<vmem>>, %arg9: memref<36x16xbf16, #tpu.memory_space<vmem>>, %arg10: memref<9x128x256xbf16, #tpu.memory_space<vmem>>, %arg11: memref<1x256xf32, #tpu.memory_space<vmem>>, %arg12: memref<1x256xf32, #tpu.memory_space<vmem>>, %arg13: memref<4x256x64xbf16, #tpu.memory_space<vmem>>, %arg14: memref<1x64xf32, #tpu.memory_space<vmem>>, %arg15: memref<1x1x64xf32, #tpu.memory_space<vmem>>) attributes {dimension_semantics = [#tpu.dimension_semantics<parallel>], iteration_bounds = array<i64: 2>, scalar_prefetch = 0 : i64, scratch_operands = 0 : i64, tpu.core_type = #tpu.core_type<tc>, window_params = [{transform_indices = @transform_0, window_bounds = array<i64: 1, 64, 27>}, {pipeline_mode = #tpu.pipeline_mode<synchronous>, transform_indices = @transform_1, window_bounds = array<i64: 27, 64>}, {pipeline_mode = #tpu.pipeline_mode<synchronous>, transform_indices = @transform_2, window_bounds = array<i64: 1, 64>}, {pipeline_mode = #tpu.pipeline_mode<synchronous>, transform_indices = @transform_3, window_bounds = array<i64: 1, 64>}, {pipeline_mode = #tpu.pipeline_mode<synchronous>, transform_indices = @transform_4, window_bounds = array<i64: 144, 64>}, {pipeline_mode = #tpu.pipeline_mode<synchronous>, transform_indices = @transform_5, window_bounds = array<i64: 9, 64, 128>}, {pipeline_mode = #tpu.pipeline_mode<synchronous>, transform_indices = @transform_6, window_bounds = array<i64: 1, 128>}, {pipeline_mode = #tpu.pipeline_mode<synchronous>, transform_indices = @transform_7, window_bounds = array<i64: 1, 128>}, {pipeline_mode = #tpu.pipeline_mode<synchronous>, transform_indices = @transform_8, window_bounds = array<i64: 36, 16>}, {pipeline_mode = #tpu.pipeline_mode<synchronous>, transform_indices = @transform_9, window_bounds = array<i64: 9, 128, 256>}, {pipeline_mode = #tpu.pipeline_mode<synchronous>, transform_indices = @transform_10, window_bounds = array<i64: 1, 256>}, {pipeline_mode = #tpu.pipeline_mode<synchronous>, transform_indices = @transform_11, window_bounds = array<i64: 1, 256>}, {pipeline_mode = #tpu.pipeline_mode<synchronous>, transform_indices = @transform_12, window_bounds = array<i64: 4, 256, 64>}, {pipeline_mode = #tpu.pipeline_mode<synchronous>, transform_indices = @transform_13, window_bounds = array<i64: 1, 64>}, {transform_indices = @transform_14, window_bounds = array<i64: 1, 1, 64>}]} {
    %c0 = arith.constant 0 : index
    %c0_0 = arith.constant 0 : index
    %c0_1 = arith.constant 0 : index
    %0 = vector.load %arg1[%c0, %c0_0, %c0_1] : memref<1x64x27xbf16, #tpu.memory_space<vmem>>, vector<1x64x27xbf16>
    %1 = vector.shape_cast %0 : vector<1x64x27xbf16> to vector<64x27xbf16>
    %c0_2 = arith.constant 0 : index
    %c0_3 = arith.constant 0 : index
    %2 = vector.load %arg2[%c0_2, %c0_3] : memref<27x64xbf16, #tpu.memory_space<vmem>>, vector<27x64xbf16>
    %cst = arith.constant dense<0.000000e+00> : vector<64x64xf32>
    %3 = tpu.matmul %1, %2, %cst {dimension_numbers = #tpu.dot_dimension_numbers<[1], [0], [0], [1], [0, 0, 1, 1], [], []>} : vector<64x27xbf16>, vector<27x64xbf16>, vector<64x64xf32> -> vector<64x64xf32>
    %c0_4 = arith.constant 0 : index
    %c0_5 = arith.constant 0 : index
    %4 = vector.load %arg3[%c0_4, %c0_5] : memref<1x64xf32, #tpu.memory_space<vmem>>, vector<1x64xf32>
    %5 = vector.broadcast %4 : vector<1x64xf32> to vector<64x64xf32>
    %6 = arith.mulf %3, %5 : vector<64x64xf32>
    %c0_6 = arith.constant 0 : index
    %c0_7 = arith.constant 0 : index
    %7 = vector.load %arg4[%c0_6, %c0_7] : memref<1x64xf32, #tpu.memory_space<vmem>>, vector<1x64xf32>
    %8 = vector.broadcast %7 : vector<1x64xf32> to vector<64x64xf32>
    %9 = arith.addf %6, %8 : vector<64x64xf32>
    %cst_8 = arith.constant 0.000000e+00 : f32
    %10 = vector.broadcast %cst_8 : f32 to vector<64x64xf32>
    %11 = arith.maximumf %9, %10 : vector<64x64xf32>
    %12 = arith.truncf %11 : vector<64x64xf32> to vector<64x64xbf16>
    %c0_9 = arith.constant 0 : index
    %c0_10 = arith.constant 0 : index
    %13 = vector.load %arg5[%c0_9, %c0_10] : memref<144x64xbf16, #tpu.memory_space<vmem>>, vector<144x64xbf16>
    %cst_11 = arith.constant dense<0.000000e+00> : vector<144x64xf32>
    %14 = tpu.matmul %13, %12, %cst_11 {dimension_numbers = #tpu.dot_dimension_numbers<[1], [0], [0], [1], [0, 0, 1, 1], [], []>} : vector<144x64xbf16>, vector<64x64xbf16>, vector<144x64xf32> -> vector<144x64xf32>
    %cst_12 = arith.constant 0.000000e+00 : f32
    %15 = vector.broadcast %cst_12 : f32 to vector<16x128xf32>
    %16 = vector.extract_strided_slice %14 {offsets = [0, 0], sizes = [16, 64], strides = [1, 1]} : vector<144x64xf32> to vector<16x64xf32>
    %17 = arith.truncf %16 : vector<16x64xf32> to vector<16x64xbf16>
    %c0_13 = arith.constant 0 : index
    %c0_14 = arith.constant 0 : index
    %c0_15 = arith.constant 0 : index
    %18 = vector.load %arg6[%c0_13, %c0_14, %c0_15] : memref<9x64x128xbf16, #tpu.memory_space<vmem>>, vector<1x64x128xbf16>
    %19 = vector.shape_cast %18 : vector<1x64x128xbf16> to vector<64x128xbf16>
    %cst_16 = arith.constant dense<0.000000e+00> : vector<16x128xf32>
    %20 = tpu.matmul %17, %19, %cst_16 {dimension_numbers = #tpu.dot_dimension_numbers<[1], [0], [0], [1], [0, 0, 1, 1], [], []>} : vector<16x64xbf16>, vector<64x128xbf16>, vector<16x128xf32> -> vector<16x128xf32>
    %21 = arith.addf %15, %20 : vector<16x128xf32>
    %22 = vector.extract_strided_slice %14 {offsets = [16, 0], sizes = [16, 64], strides = [1, 1]} : vector<144x64xf32> to vector<16x64xf32>
    %23 = arith.truncf %22 : vector<16x64xf32> to vector<16x64xbf16>
    %c1 = arith.constant 1 : index
    %c0_17 = arith.constant 0 : index
    %c0_18 = arith.constant 0 : index
    %24 = vector.load %arg6[%c1, %c0_17, %c0_18] : memref<9x64x128xbf16, #tpu.memory_space<vmem>>, vector<1x64x128xbf16>
    %25 = vector.shape_cast %24 : vector<1x64x128xbf16> to vector<64x128xbf16>
    %cst_19 = arith.constant dense<0.000000e+00> : vector<16x128xf32>
    %26 = tpu.matmul %23, %25, %cst_19 {dimension_numbers = #tpu.dot_dimension_numbers<[1], [0], [0], [1], [0, 0, 1, 1], [], []>} : vector<16x64xbf16>, vector<64x128xbf16>, vector<16x128xf32> -> vector<16x128xf32>
    %27 = arith.addf %21, %26 : vector<16x128xf32>
    %28 = vector.extract_strided_slice %14 {offsets = [32, 0], sizes = [16, 64], strides = [1, 1]} : vector<144x64xf32> to vector<16x64xf32>
    %29 = arith.truncf %28 : vector<16x64xf32> to vector<16x64xbf16>
    %c2 = arith.constant 2 : index
    %c0_20 = arith.constant 0 : index
    %c0_21 = arith.constant 0 : index
    %30 = vector.load %arg6[%c2, %c0_20, %c0_21] : memref<9x64x128xbf16, #tpu.memory_space<vmem>>, vector<1x64x128xbf16>
    %31 = vector.shape_cast %30 : vector<1x64x128xbf16> to vector<64x128xbf16>
    %cst_22 = arith.constant dense<0.000000e+00> : vector<16x128xf32>
    %32 = tpu.matmul %29, %31, %cst_22 {dimension_numbers = #tpu.dot_dimension_numbers<[1], [0], [0], [1], [0, 0, 1, 1], [], []>} : vector<16x64xbf16>, vector<64x128xbf16>, vector<16x128xf32> -> vector<16x128xf32>
    %33 = arith.addf %27, %32 : vector<16x128xf32>
    %34 = vector.extract_strided_slice %14 {offsets = [48, 0], sizes = [16, 64], strides = [1, 1]} : vector<144x64xf32> to vector<16x64xf32>
    %35 = arith.truncf %34 : vector<16x64xf32> to vector<16x64xbf16>
    %c3 = arith.constant 3 : index
    %c0_23 = arith.constant 0 : index
    %c0_24 = arith.constant 0 : index
    %36 = vector.load %arg6[%c3, %c0_23, %c0_24] : memref<9x64x128xbf16, #tpu.memory_space<vmem>>, vector<1x64x128xbf16>
    %37 = vector.shape_cast %36 : vector<1x64x128xbf16> to vector<64x128xbf16>
    %cst_25 = arith.constant dense<0.000000e+00> : vector<16x128xf32>
    %38 = tpu.matmul %35, %37, %cst_25 {dimension_numbers = #tpu.dot_dimension_numbers<[1], [0], [0], [1], [0, 0, 1, 1], [], []>} : vector<16x64xbf16>, vector<64x128xbf16>, vector<16x128xf32> -> vector<16x128xf32>
    %39 = arith.addf %33, %38 : vector<16x128xf32>
    %40 = vector.extract_strided_slice %14 {offsets = [64, 0], sizes = [16, 64], strides = [1, 1]} : vector<144x64xf32> to vector<16x64xf32>
    %41 = arith.truncf %40 : vector<16x64xf32> to vector<16x64xbf16>
    %c4 = arith.constant 4 : index
    %c0_26 = arith.constant 0 : index
    %c0_27 = arith.constant 0 : index
    %42 = vector.load %arg6[%c4, %c0_26, %c0_27] : memref<9x64x128xbf16, #tpu.memory_space<vmem>>, vector<1x64x128xbf16>
    %43 = vector.shape_cast %42 : vector<1x64x128xbf16> to vector<64x128xbf16>
    %cst_28 = arith.constant dense<0.000000e+00> : vector<16x128xf32>
    %44 = tpu.matmul %41, %43, %cst_28 {dimension_numbers = #tpu.dot_dimension_numbers<[1], [0], [0], [1], [0, 0, 1, 1], [], []>} : vector<16x64xbf16>, vector<64x128xbf16>, vector<16x128xf32> -> vector<16x128xf32>
    %45 = arith.addf %39, %44 : vector<16x128xf32>
    %46 = vector.extract_strided_slice %14 {offsets = [80, 0], sizes = [16, 64], strides = [1, 1]} : vector<144x64xf32> to vector<16x64xf32>
    %47 = arith.truncf %46 : vector<16x64xf32> to vector<16x64xbf16>
    %c5 = arith.constant 5 : index
    %c0_29 = arith.constant 0 : index
    %c0_30 = arith.constant 0 : index
    %48 = vector.load %arg6[%c5, %c0_29, %c0_30] : memref<9x64x128xbf16, #tpu.memory_space<vmem>>, vector<1x64x128xbf16>
    %49 = vector.shape_cast %48 : vector<1x64x128xbf16> to vector<64x128xbf16>
    %cst_31 = arith.constant dense<0.000000e+00> : vector<16x128xf32>
    %50 = tpu.matmul %47, %49, %cst_31 {dimension_numbers = #tpu.dot_dimension_numbers<[1], [0], [0], [1], [0, 0, 1, 1], [], []>} : vector<16x64xbf16>, vector<64x128xbf16>, vector<16x128xf32> -> vector<16x128xf32>
    %51 = arith.addf %45, %50 : vector<16x128xf32>
    %52 = vector.extract_strided_slice %14 {offsets = [96, 0], sizes = [16, 64], strides = [1, 1]} : vector<144x64xf32> to vector<16x64xf32>
    %53 = arith.truncf %52 : vector<16x64xf32> to vector<16x64xbf16>
    %c6 = arith.constant 6 : index
    %c0_32 = arith.constant 0 : index
    %c0_33 = arith.constant 0 : index
    %54 = vector.load %arg6[%c6, %c0_32, %c0_33] : memref<9x64x128xbf16, #tpu.memory_space<vmem>>, vector<1x64x128xbf16>
    %55 = vector.shape_cast %54 : vector<1x64x128xbf16> to vector<64x128xbf16>
    %cst_34 = arith.constant dense<0.000000e+00> : vector<16x128xf32>
    %56 = tpu.matmul %53, %55, %cst_34 {dimension_numbers = #tpu.dot_dimension_numbers<[1], [0], [0], [1], [0, 0, 1, 1], [], []>} : vector<16x64xbf16>, vector<64x128xbf16>, vector<16x128xf32> -> vector<16x128xf32>
    %57 = arith.addf %51, %56 : vector<16x128xf32>
    %58 = vector.extract_strided_slice %14 {offsets = [112, 0], sizes = [16, 64], strides = [1, 1]} : vector<144x64xf32> to vector<16x64xf32>
    %59 = arith.truncf %58 : vector<16x64xf32> to vector<16x64xbf16>
    %c7 = arith.constant 7 : index
    %c0_35 = arith.constant 0 : index
    %c0_36 = arith.constant 0 : index
    %60 = vector.load %arg6[%c7, %c0_35, %c0_36] : memref<9x64x128xbf16, #tpu.memory_space<vmem>>, vector<1x64x128xbf16>
    %61 = vector.shape_cast %60 : vector<1x64x128xbf16> to vector<64x128xbf16>
    %cst_37 = arith.constant dense<0.000000e+00> : vector<16x128xf32>
    %62 = tpu.matmul %59, %61, %cst_37 {dimension_numbers = #tpu.dot_dimension_numbers<[1], [0], [0], [1], [0, 0, 1, 1], [], []>} : vector<16x64xbf16>, vector<64x128xbf16>, vector<16x128xf32> -> vector<16x128xf32>
    %63 = arith.addf %57, %62 : vector<16x128xf32>
    %64 = vector.extract_strided_slice %14 {offsets = [128, 0], sizes = [16, 64], strides = [1, 1]} : vector<144x64xf32> to vector<16x64xf32>
    %65 = arith.truncf %64 : vector<16x64xf32> to vector<16x64xbf16>
    %c8 = arith.constant 8 : index
    %c0_38 = arith.constant 0 : index
    %c0_39 = arith.constant 0 : index
    %66 = vector.load %arg6[%c8, %c0_38, %c0_39] : memref<9x64x128xbf16, #tpu.memory_space<vmem>>, vector<1x64x128xbf16>
    %67 = vector.shape_cast %66 : vector<1x64x128xbf16> to vector<64x128xbf16>
    %cst_40 = arith.constant dense<0.000000e+00> : vector<16x128xf32>
    %68 = tpu.matmul %65, %67, %cst_40 {dimension_numbers = #tpu.dot_dimension_numbers<[1], [0], [0], [1], [0, 0, 1, 1], [], []>} : vector<16x64xbf16>, vector<64x128xbf16>, vector<16x128xf32> -> vector<16x128xf32>
    %69 = arith.addf %63, %68 : vector<16x128xf32>
    %c0_41 = arith.constant 0 : index
    %c0_42 = arith.constant 0 : index
    %70 = vector.load %arg7[%c0_41, %c0_42] : memref<1x128xf32, #tpu.memory_space<vmem>>, vector<1x128xf32>
    %71 = vector.broadcast %70 : vector<1x128xf32> to vector<16x128xf32>
    %72 = arith.mulf %69, %71 : vector<16x128xf32>
    %c0_43 = arith.constant 0 : index
    %c0_44 = arith.constant 0 : index
    %73 = vector.load %arg8[%c0_43, %c0_44] : memref<1x128xf32, #tpu.memory_space<vmem>>, vector<1x128xf32>
    %74 = vector.broadcast %73 : vector<1x128xf32> to vector<16x128xf32>
    %75 = arith.addf %72, %74 : vector<16x128xf32>
    %cst_45 = arith.constant 0.000000e+00 : f32
    %76 = vector.broadcast %cst_45 : f32 to vector<16x128xf32>
    %77 = arith.maximumf %75, %76 : vector<16x128xf32>
    %78 = arith.truncf %77 : vector<16x128xf32> to vector<16x128xbf16>
    %c0_46 = arith.constant 0 : index
    %c0_47 = arith.constant 0 : index
    %79 = vector.load %arg9[%c0_46, %c0_47] : memref<36x16xbf16, #tpu.memory_space<vmem>>, vector<36x16xbf16>
    %cst_48 = arith.constant dense<0.000000e+00> : vector<36x128xf32>
    %80 = tpu.matmul %79, %78, %cst_48 {dimension_numbers = #tpu.dot_dimension_numbers<[1], [0], [0], [1], [0, 0, 1, 1], [], []>} : vector<36x16xbf16>, vector<16x128xbf16>, vector<36x128xf32> -> vector<36x128xf32>
    %cst_49 = arith.constant 0.000000e+00 : f32
    %81 = vector.broadcast %cst_49 : f32 to vector<4x256xf32>
    %82 = vector.extract_strided_slice %80 {offsets = [0, 0], sizes = [4, 128], strides = [1, 1]} : vector<36x128xf32> to vector<4x128xf32>
    %83 = arith.truncf %82 : vector<4x128xf32> to vector<4x128xbf16>
    %c0_50 = arith.constant 0 : index
    %c0_51 = arith.constant 0 : index
    %c0_52 = arith.constant 0 : index
    %84 = vector.load %arg10[%c0_50, %c0_51, %c0_52] : memref<9x128x256xbf16, #tpu.memory_space<vmem>>, vector<1x128x256xbf16>
    %85 = vector.shape_cast %84 : vector<1x128x256xbf16> to vector<128x256xbf16>
    %cst_53 = arith.constant dense<0.000000e+00> : vector<4x256xf32>
    %86 = tpu.matmul %83, %85, %cst_53 {dimension_numbers = #tpu.dot_dimension_numbers<[1], [0], [0], [1], [0, 0, 1, 1], [], []>} : vector<4x128xbf16>, vector<128x256xbf16>, vector<4x256xf32> -> vector<4x256xf32>
    %87 = arith.addf %81, %86 : vector<4x256xf32>
    %88 = vector.extract_strided_slice %80 {offsets = [4, 0], sizes = [4, 128], strides = [1, 1]} : vector<36x128xf32> to vector<4x128xf32>
    %89 = arith.truncf %88 : vector<4x128xf32> to vector<4x128xbf16>
    %c1_54 = arith.constant 1 : index
    %c0_55 = arith.constant 0 : index
    %c0_56 = arith.constant 0 : index
    %90 = vector.load %arg10[%c1_54, %c0_55, %c0_56] : memref<9x128x256xbf16, #tpu.memory_space<vmem>>, vector<1x128x256xbf16>
    %91 = vector.shape_cast %90 : vector<1x128x256xbf16> to vector<128x256xbf16>
    %cst_57 = arith.constant dense<0.000000e+00> : vector<4x256xf32>
    %92 = tpu.matmul %89, %91, %cst_57 {dimension_numbers = #tpu.dot_dimension_numbers<[1], [0], [0], [1], [0, 0, 1, 1], [], []>} : vector<4x128xbf16>, vector<128x256xbf16>, vector<4x256xf32> -> vector<4x256xf32>
    %93 = arith.addf %87, %92 : vector<4x256xf32>
    %94 = vector.extract_strided_slice %80 {offsets = [8, 0], sizes = [4, 128], strides = [1, 1]} : vector<36x128xf32> to vector<4x128xf32>
    %95 = arith.truncf %94 : vector<4x128xf32> to vector<4x128xbf16>
    %c2_58 = arith.constant 2 : index
    %c0_59 = arith.constant 0 : index
    %c0_60 = arith.constant 0 : index
    %96 = vector.load %arg10[%c2_58, %c0_59, %c0_60] : memref<9x128x256xbf16, #tpu.memory_space<vmem>>, vector<1x128x256xbf16>
    %97 = vector.shape_cast %96 : vector<1x128x256xbf16> to vector<128x256xbf16>
    %cst_61 = arith.constant dense<0.000000e+00> : vector<4x256xf32>
    %98 = tpu.matmul %95, %97, %cst_61 {dimension_numbers = #tpu.dot_dimension_numbers<[1], [0], [0], [1], [0, 0, 1, 1], [], []>} : vector<4x128xbf16>, vector<128x256xbf16>, vector<4x256xf32> -> vector<4x256xf32>
    %99 = arith.addf %93, %98 : vector<4x256xf32>
    %100 = vector.extract_strided_slice %80 {offsets = [12, 0], sizes = [4, 128], strides = [1, 1]} : vector<36x128xf32> to vector<4x128xf32>
    %101 = arith.truncf %100 : vector<4x128xf32> to vector<4x128xbf16>
    %c3_62 = arith.constant 3 : index
    %c0_63 = arith.constant 0 : index
    %c0_64 = arith.constant 0 : index
    %102 = vector.load %arg10[%c3_62, %c0_63, %c0_64] : memref<9x128x256xbf16, #tpu.memory_space<vmem>>, vector<1x128x256xbf16>
    %103 = vector.shape_cast %102 : vector<1x128x256xbf16> to vector<128x256xbf16>
    %cst_65 = arith.constant dense<0.000000e+00> : vector<4x256xf32>
    %104 = tpu.matmul %101, %103, %cst_65 {dimension_numbers = #tpu.dot_dimension_numbers<[1], [0], [0], [1], [0, 0, 1, 1], [], []>} : vector<4x128xbf16>, vector<128x256xbf16>, vector<4x256xf32> -> vector<4x256xf32>
    %105 = arith.addf %99, %104 : vector<4x256xf32>
    %106 = vector.extract_strided_slice %80 {offsets = [16, 0], sizes = [4, 128], strides = [1, 1]} : vector<36x128xf32> to vector<4x128xf32>
    %107 = arith.truncf %106 : vector<4x128xf32> to vector<4x128xbf16>
    %c4_66 = arith.constant 4 : index
    %c0_67 = arith.constant 0 : index
    %c0_68 = arith.constant 0 : index
    %108 = vector.load %arg10[%c4_66, %c0_67, %c0_68] : memref<9x128x256xbf16, #tpu.memory_space<vmem>>, vector<1x128x256xbf16>
    %109 = vector.shape_cast %108 : vector<1x128x256xbf16> to vector<128x256xbf16>
    %cst_69 = arith.constant dense<0.000000e+00> : vector<4x256xf32>
    %110 = tpu.matmul %107, %109, %cst_69 {dimension_numbers = #tpu.dot_dimension_numbers<[1], [0], [0], [1], [0, 0, 1, 1], [], []>} : vector<4x128xbf16>, vector<128x256xbf16>, vector<4x256xf32> -> vector<4x256xf32>
    %111 = arith.addf %105, %110 : vector<4x256xf32>
    %112 = vector.extract_strided_slice %80 {offsets = [20, 0], sizes = [4, 128], strides = [1, 1]} : vector<36x128xf32> to vector<4x128xf32>
    %113 = arith.truncf %112 : vector<4x128xf32> to vector<4x128xbf16>
    %c5_70 = arith.constant 5 : index
    %c0_71 = arith.constant 0 : index
    %c0_72 = arith.constant 0 : index
    %114 = vector.load %arg10[%c5_70, %c0_71, %c0_72] : memref<9x128x256xbf16, #tpu.memory_space<vmem>>, vector<1x128x256xbf16>
    %115 = vector.shape_cast %114 : vector<1x128x256xbf16> to vector<128x256xbf16>
    %cst_73 = arith.constant dense<0.000000e+00> : vector<4x256xf32>
    %116 = tpu.matmul %113, %115, %cst_73 {dimension_numbers = #tpu.dot_dimension_numbers<[1], [0], [0], [1], [0, 0, 1, 1], [], []>} : vector<4x128xbf16>, vector<128x256xbf16>, vector<4x256xf32> -> vector<4x256xf32>
    %117 = arith.addf %111, %116 : vector<4x256xf32>
    %118 = vector.extract_strided_slice %80 {offsets = [24, 0], sizes = [4, 128], strides = [1, 1]} : vector<36x128xf32> to vector<4x128xf32>
    %119 = arith.truncf %118 : vector<4x128xf32> to vector<4x128xbf16>
    %c6_74 = arith.constant 6 : index
    %c0_75 = arith.constant 0 : index
    %c0_76 = arith.constant 0 : index
    %120 = vector.load %arg10[%c6_74, %c0_75, %c0_76] : memref<9x128x256xbf16, #tpu.memory_space<vmem>>, vector<1x128x256xbf16>
    %121 = vector.shape_cast %120 : vector<1x128x256xbf16> to vector<128x256xbf16>
    %cst_77 = arith.constant dense<0.000000e+00> : vector<4x256xf32>
    %122 = tpu.matmul %119, %121, %cst_77 {dimension_numbers = #tpu.dot_dimension_numbers<[1], [0], [0], [1], [0, 0, 1, 1], [], []>} : vector<4x128xbf16>, vector<128x256xbf16>, vector<4x256xf32> -> vector<4x256xf32>
    %123 = arith.addf %117, %122 : vector<4x256xf32>
    %124 = vector.extract_strided_slice %80 {offsets = [28, 0], sizes = [4, 128], strides = [1, 1]} : vector<36x128xf32> to vector<4x128xf32>
    %125 = arith.truncf %124 : vector<4x128xf32> to vector<4x128xbf16>
    %c7_78 = arith.constant 7 : index
    %c0_79 = arith.constant 0 : index
    %c0_80 = arith.constant 0 : index
    %126 = vector.load %arg10[%c7_78, %c0_79, %c0_80] : memref<9x128x256xbf16, #tpu.memory_space<vmem>>, vector<1x128x256xbf16>
    %127 = vector.shape_cast %126 : vector<1x128x256xbf16> to vector<128x256xbf16>
    %cst_81 = arith.constant dense<0.000000e+00> : vector<4x256xf32>
    %128 = tpu.matmul %125, %127, %cst_81 {dimension_numbers = #tpu.dot_dimension_numbers<[1], [0], [0], [1], [0, 0, 1, 1], [], []>} : vector<4x128xbf16>, vector<128x256xbf16>, vector<4x256xf32> -> vector<4x256xf32>
    %129 = arith.addf %123, %128 : vector<4x256xf32>
    %130 = vector.extract_strided_slice %80 {offsets = [32, 0], sizes = [4, 128], strides = [1, 1]} : vector<36x128xf32> to vector<4x128xf32>
    %131 = arith.truncf %130 : vector<4x128xf32> to vector<4x128xbf16>
    %c8_82 = arith.constant 8 : index
    %c0_83 = arith.constant 0 : index
    %c0_84 = arith.constant 0 : index
    %132 = vector.load %arg10[%c8_82, %c0_83, %c0_84] : memref<9x128x256xbf16, #tpu.memory_space<vmem>>, vector<1x128x256xbf16>
    %133 = vector.shape_cast %132 : vector<1x128x256xbf16> to vector<128x256xbf16>
    %cst_85 = arith.constant dense<0.000000e+00> : vector<4x256xf32>
    %134 = tpu.matmul %131, %133, %cst_85 {dimension_numbers = #tpu.dot_dimension_numbers<[1], [0], [0], [1], [0, 0, 1, 1], [], []>} : vector<4x128xbf16>, vector<128x256xbf16>, vector<4x256xf32> -> vector<4x256xf32>
    %135 = arith.addf %129, %134 : vector<4x256xf32>
    %c0_86 = arith.constant 0 : index
    %c0_87 = arith.constant 0 : index
    %136 = vector.load %arg11[%c0_86, %c0_87] : memref<1x256xf32, #tpu.memory_space<vmem>>, vector<1x256xf32>
    %137 = vector.broadcast %136 : vector<1x256xf32> to vector<4x256xf32>
    %138 = arith.mulf %135, %137 : vector<4x256xf32>
    %c0_88 = arith.constant 0 : index
    %c0_89 = arith.constant 0 : index
    %139 = vector.load %arg12[%c0_88, %c0_89] : memref<1x256xf32, #tpu.memory_space<vmem>>, vector<1x256xf32>
    %140 = vector.broadcast %139 : vector<1x256xf32> to vector<4x256xf32>
    %141 = arith.addf %138, %140 : vector<4x256xf32>
    %cst_90 = arith.constant 0.000000e+00 : f32
    %142 = vector.broadcast %cst_90 : f32 to vector<4x256xf32>
    %143 = arith.maximumf %141, %142 : vector<4x256xf32>
    %c0_91 = arith.constant 0 : index
    %c0_92 = arith.constant 0 : index
    %144 = vector.load %arg14[%c0_91, %c0_92] : memref<1x64xf32, #tpu.memory_space<vmem>>, vector<1x64xf32>
    %145 = vector.extract_strided_slice %143 {offsets = [0, 0], sizes = [1, 256], strides = [1, 1]} : vector<4x256xf32> to vector<1x256xf32>
    %146 = arith.truncf %145 : vector<1x256xf32> to vector<1x256xbf16>
    %c0_93 = arith.constant 0 : index
    %c0_94 = arith.constant 0 : index
    %c0_95 = arith.constant 0 : index
    %147 = vector.load %arg13[%c0_93, %c0_94, %c0_95] : memref<4x256x64xbf16, #tpu.memory_space<vmem>>, vector<1x256x64xbf16>
    %148 = vector.shape_cast %147 : vector<1x256x64xbf16> to vector<256x64xbf16>
    %cst_96 = arith.constant dense<0.000000e+00> : vector<1x64xf32>
    %149 = tpu.matmul %146, %148, %cst_96 {dimension_numbers = #tpu.dot_dimension_numbers<[1], [0], [0], [1], [0, 0, 1, 1], [], []>} : vector<1x256xbf16>, vector<256x64xbf16>, vector<1x64xf32> -> vector<1x64xf32>
    %150 = arith.addf %144, %149 : vector<1x64xf32>
    %151 = vector.extract_strided_slice %143 {offsets = [1, 0], sizes = [1, 256], strides = [1, 1]} : vector<4x256xf32> to vector<1x256xf32>
    %152 = arith.truncf %151 : vector<1x256xf32> to vector<1x256xbf16>
    %c1_97 = arith.constant 1 : index
    %c0_98 = arith.constant 0 : index
    %c0_99 = arith.constant 0 : index
    %153 = vector.load %arg13[%c1_97, %c0_98, %c0_99] : memref<4x256x64xbf16, #tpu.memory_space<vmem>>, vector<1x256x64xbf16>
    %154 = vector.shape_cast %153 : vector<1x256x64xbf16> to vector<256x64xbf16>
    %cst_100 = arith.constant dense<0.000000e+00> : vector<1x64xf32>
    %155 = tpu.matmul %152, %154, %cst_100 {dimension_numbers = #tpu.dot_dimension_numbers<[1], [0], [0], [1], [0, 0, 1, 1], [], []>} : vector<1x256xbf16>, vector<256x64xbf16>, vector<1x64xf32> -> vector<1x64xf32>
    %156 = arith.addf %150, %155 : vector<1x64xf32>
    %157 = vector.extract_strided_slice %143 {offsets = [2, 0], sizes = [1, 256], strides = [1, 1]} : vector<4x256xf32> to vector<1x256xf32>
    %158 = arith.truncf %157 : vector<1x256xf32> to vector<1x256xbf16>
    %c2_101 = arith.constant 2 : index
    %c0_102 = arith.constant 0 : index
    %c0_103 = arith.constant 0 : index
    %159 = vector.load %arg13[%c2_101, %c0_102, %c0_103] : memref<4x256x64xbf16, #tpu.memory_space<vmem>>, vector<1x256x64xbf16>
    %160 = vector.shape_cast %159 : vector<1x256x64xbf16> to vector<256x64xbf16>
    %cst_104 = arith.constant dense<0.000000e+00> : vector<1x64xf32>
    %161 = tpu.matmul %158, %160, %cst_104 {dimension_numbers = #tpu.dot_dimension_numbers<[1], [0], [0], [1], [0, 0, 1, 1], [], []>} : vector<1x256xbf16>, vector<256x64xbf16>, vector<1x64xf32> -> vector<1x64xf32>
    %162 = arith.addf %156, %161 : vector<1x64xf32>
    %163 = vector.extract_strided_slice %143 {offsets = [3, 0], sizes = [1, 256], strides = [1, 1]} : vector<4x256xf32> to vector<1x256xf32>
    %164 = arith.truncf %163 : vector<1x256xf32> to vector<1x256xbf16>
    %c3_105 = arith.constant 3 : index
    %c0_106 = arith.constant 0 : index
    %c0_107 = arith.constant 0 : index
    %165 = vector.load %arg13[%c3_105, %c0_106, %c0_107] : memref<4x256x64xbf16, #tpu.memory_space<vmem>>, vector<1x256x64xbf16>
    %166 = vector.shape_cast %165 : vector<1x256x64xbf16> to vector<256x64xbf16>
    %cst_108 = arith.constant dense<0.000000e+00> : vector<1x64xf32>
    %167 = tpu.matmul %164, %166, %cst_108 {dimension_numbers = #tpu.dot_dimension_numbers<[1], [0], [0], [1], [0, 0, 1, 1], [], []>} : vector<1x256xbf16>, vector<256x64xbf16>, vector<1x64xf32> -> vector<1x64xf32>
    %168 = arith.addf %162, %167 : vector<1x64xf32>
    %c0_109 = arith.constant 0 : index
    %c0_110 = arith.constant 0 : index
    %c0_111 = arith.constant 0 : index
    %169 = vector.load %arg15[%c0_109, %c0_110, %c0_111] : memref<1x1x64xf32, #tpu.memory_space<vmem>>, vector<1x1x64xf32>
    %170 = vector.shape_cast %169 : vector<1x1x64xf32> to vector<1x64xf32>
    %171 = vector.shape_cast %168 : vector<1x64xf32> to vector<1x1x64xf32>
    tpu.vector_store %arg15[%c0_109, %c0_110, %c0_111], %171 {strides = array<i32>} : memref<1x1x64xf32, #tpu.memory_space<vmem>>, vector<1x1x64xf32>,
    return
  }
  func.func @transform_0(%arg0: i32) -> (i32, i32, i32) {
    %c0_i32 = arith.constant 0 : i32
    %c0_i32_0 = arith.constant 0 : i32
    %c0_i32_1 = arith.constant 0 : i32
    return %arg0, %c0_i32, %c0_i32_0 : i32, i32, i32
  }
  func.func @transform_1(%arg0: i32) -> (i32, i32) {
    %c0_i32 = arith.constant 0 : i32
    %c0_i32_0 = arith.constant 0 : i32
    %c0_i32_1 = arith.constant 0 : i32
    return %c0_i32, %c0_i32_0 : i32, i32
  }
  func.func @transform_2(%arg0: i32) -> (i32, i32) {
    %c0_i32 = arith.constant 0 : i32
    %c0_i32_0 = arith.constant 0 : i32
    %c0_i32_1 = arith.constant 0 : i32
    return %c0_i32, %c0_i32_0 : i32, i32
  }
  func.func @transform_3(%arg0: i32) -> (i32, i32) {
    %c0_i32 = arith.constant 0 : i32
    %c0_i32_0 = arith.constant 0 : i32
    %c0_i32_1 = arith.constant 0 : i32
    return %c0_i32, %c0_i32_0 : i32, i32
  }
  func.func @transform_4(%arg0: i32) -> (i32, i32) {
    %c0_i32 = arith.constant 0 : i32
    %c0_i32_0 = arith.constant 0 : i32
    %c0_i32_1 = arith.constant 0 : i32
    return %c0_i32, %c0_i32_0 : i32, i32
  }
  func.func @transform_5(%arg0: i32) -> (i32, i32, i32) {
    %c0_i32 = arith.constant 0 : i32
    %c0_i32_0 = arith.constant 0 : i32
    %c0_i32_1 = arith.constant 0 : i32
    %c0_i32_2 = arith.constant 0 : i32
    return %c0_i32, %c0_i32_0, %c0_i32_1 : i32, i32, i32
  }
  func.func @transform_6(%arg0: i32) -> (i32, i32) {
    %c0_i32 = arith.constant 0 : i32
    %c0_i32_0 = arith.constant 0 : i32
    %c0_i32_1 = arith.constant 0 : i32
    return %c0_i32, %c0_i32_0 : i32, i32
  }
  func.func @transform_7(%arg0: i32) -> (i32, i32) {
    %c0_i32 = arith.constant 0 : i32
    %c0_i32_0 = arith.constant 0 : i32
    %c0_i32_1 = arith.constant 0 : i32
    return %c0_i32, %c0_i32_0 : i32, i32
  }
  func.func @transform_8(%arg0: i32) -> (i32, i32) {
    %c0_i32 = arith.constant 0 : i32
    %c0_i32_0 = arith.constant 0 : i32
    %c0_i32_1 = arith.constant 0 : i32
    return %c0_i32, %c0_i32_0 : i32, i32
  }
  func.func @transform_9(%arg0: i32) -> (i32, i32, i32) {
    %c0_i32 = arith.constant 0 : i32
    %c0_i32_0 = arith.constant 0 : i32
    %c0_i32_1 = arith.constant 0 : i32
    %c0_i32_2 = arith.constant 0 : i32
    return %c0_i32, %c0_i32_0, %c0_i32_1 : i32, i32, i32
  }
  func.func @transform_10(%arg0: i32) -> (i32, i32) {
    %c0_i32 = arith.constant 0 : i32
    %c0_i32_0 = arith.constant 0 : i32
    %c0_i32_1 = arith.constant 0 : i32
    return %c0_i32, %c0_i32_0 : i32, i32
  }
  func.func @transform_11(%arg0: i32) -> (i32, i32) {
    %c0_i32 = arith.constant 0 : i32
    %c0_i32_0 = arith.constant 0 : i32
    %c0_i32_1 = arith.constant 0 : i32
    return %c0_i32, %c0_i32_0 : i32, i32
  }
  func.func @transform_12(%arg0: i32) -> (i32, i32, i32) {
    %c0_i32 = arith.constant 0 : i32
    %c0_i32_0 = arith.constant 0 : i32
    %c0_i32_1 = arith.constant 0 : i32
    %c0_i32_2 = arith.constant 0 : i32
    return %c0_i32, %c0_i32_0, %c0_i32_1 : i32, i32, i32
  }
  func.func @transform_13(%arg0: i32) -> (i32, i32) {
    %c0_i32 = arith.constant 0 : i32
    %c0_i32_0 = arith.constant 0 : i32
    %c0_i32_1 = arith.constant 0 : i32
    return %c0_i32, %c0_i32_0 : i32, i32
  }
  func.func @transform_14(%arg0: i32) -> (i32, i32, i32) {
    %c0_i32 = arith.constant 0 : i32
    %c0_i32_0 = arith.constant 0 : i32
    %c0_i32_1 = arith.constant 0 : i32
    return %arg0, %c0_i32, %c0_i32_0 : i32, i32, i32
  }
}

</mosaic_0001>

<llo_original>
// kernel: encoder_forward.1
$region0: #{encoder_forward.1}
  #allocation0 [shape = 'u32[]', space=smem, size = 0x4, offset = 0x4, fixed_abs, tag = 'smem constant byte address 0x4 - core index']
  #allocation1 [shape = 'u32[72,128]{1,0:T(1,128)}', space=vmem, size = 0x9000, scoped, tag = 'internal scratch']
  %s0 = inlined_call_operand.vmem [shape: bf16[2,64,27], index: 0, kind: input, shape index: {}]
  %s1 = inlined_call_operand.vmem [shape: bf16[27,64], index: 1, kind: input, shape index: {}]
  %s2 = inlined_call_operand.vmem [shape: f32[1,64], index: 2, kind: input, shape index: {}]
  %s3 = inlined_call_operand.vmem [shape: f32[1,64], index: 3, kind: input, shape index: {}]
  %s4 = inlined_call_operand.vmem [shape: bf16[144,64], index: 4, kind: input, shape index: {}]
  %s5 = inlined_call_operand.vmem [shape: bf16[9,64,128], index: 5, kind: input, shape index: {}]
  %s6 = inlined_call_operand.vmem [shape: f32[1,128], index: 6, kind: input, shape index: {}]
  %s7 = inlined_call_operand.vmem [shape: f32[1,128], index: 7, kind: input, shape index: {}]
  %s8 = inlined_call_operand.vmem [shape: bf16[36,16], index: 8, kind: input, shape index: {}]
  %s9 = inlined_call_operand.vmem [shape: bf16[9,128,256], index: 9, kind: input, shape index: {}]
  %s10 = inlined_call_operand.vmem [shape: f32[1,256], index: 10, kind: input, shape index: {}]
  %s11 = inlined_call_operand.vmem [shape: f32[1,256], index: 11, kind: input, shape index: {}]
  %s12 = inlined_call_operand.vmem [shape: bf16[4,256,64], index: 12, kind: input, shape index: {}]
  %s13 = inlined_call_operand.vmem [shape: f32[1,64], index: 13, kind: input, shape index: {}]
  %s14 = inlined_call_operand.vmem [shape: f32[2,1,64], index: 14, kind: output, shape index: {}]
  %s15 = sld [smem:[#allocation0]]
  $region89: #{encoder_forward.1} parent=0
    _
  %s17 = ssub.s32 1, %s15
  %s18 = scalar_select 0, %s17, %s15
  loop: start=0, step=1, limit=4
  $region2: #{encoder_forward.1} parent=0 // loop_pre_header
    _
  $region3: #{encoder_forward.1} parent=0 // loop_header
    %s20 = sphi 0, %s24
    %p21 = scmp.ge.s32.totalorder %s20, 4
    %s30 = sphi 0, %s32
    %s33 = sphi 0, %s30
    %s34 = sphi 0, %s33
    %s50 = sphi 0, %s34
    %s54 = sphi 0, %s54
    %s56 = sphi 0, %s54
    %s57 = sphi 0, %s56
    %s71 = sphi 0, %s57
    %s75 = sphi 0, %s75
    %s77 = sphi 0, %s75
    %s78 = sphi 0, %s77
    %s92 = sphi 0, %s78
    %s96 = sphi 0, %s96
    %s98 = sphi 0, %s96
    %s99 = sphi 0, %s98
    %s113 = sphi 0, %s99
    %s117 = sphi 0, %s117
    %s119 = sphi 0, %s117
    %s120 = sphi 0, %s119
    %s134 = sphi 0, %s120
    %s138 = sphi 0, %s138
    %s140 = sphi 0, %s138
    %s141 = sphi 0, %s140
    %s155 = sphi 0, %s141
    %s159 = sphi 0, %s159
    %s161 = sphi 0, %s159
    %s162 = sphi 0, %s161
    %s176 = sphi 0, %s162
    %s180 = sphi 0, %s180
    %s182 = sphi 0, %s180
    %s183 = sphi 0, %s182
    %s197 = sphi 0, %s183
    %s201 = sphi 0, %s201
    %s203 = sphi 0, %s201
    %s204 = sphi 0, %s203
    %s218 = sphi 0, %s204
    %s222 = sphi 0, %s222
    %s224 = sphi 0, %s222
    %s225 = sphi 0, %s224
    %s239 = sphi 0, %s225
    %s243 = sphi 0, %s243
    %s245 = sphi 0, %s243
    %s246 = sphi 0, %s245
    %s260 = sphi 0, %s246
    %s264 = sphi 0, %s264
    %s266 = sphi 0, %s264
    %s267 = sphi 0, %s266
    %s281 = sphi 0, %s267
    %s285 = sphi 0, %s285
    %s287 = sphi 0, %s285
    %s288 = sphi 0, %s287
    %s302 = sphi 0, %s288
    %s306 = sphi 0, %s306
    %s308 = sphi 0, %s306
    %s309 = sphi 0, %s308
    %s323 = sphi 0, %s309
    %s329 = sphi 0, %s331
    %s332 = sphi 0, %s329
    %s333 = sphi 0, %s332
    %s349 = sphi 0, %s333
  $region4: #{encoder_forward.1} parent=0 // loop_header_branch
    %23 = sbr.rel (%p21) target = $region8
  $region5: #{encoder_forward.1} parent=0 // loop_body
    %s25 = ssub.s32 %s20, 1
    %s26 = ssub.s32 %s20, 2
    %s27 = sadd.s32 %s20, 1
    %s28 = ssub.s32 %s20, %s27
    %p29 = scmp.eq.s32.totalorder %s28, 0
    %s31 = sadd.s32 %s30, 1
    %s32 = scalar_select %p29, %s30, %s31
    %p35 = pneg %p29
    %p36 = scmp.eq.s32.totalorder %s20, 1
    %p37 = por %p35, %p36
    %p38 = scmp.ne.s32.totalorder %s30, %s33
    %p39 = scmp.eq.s32.totalorder %s20, 0
    %p40 = por %p38, %p39
    %p41 = scmp.ne.s32.totalorder %s30, %s33
    %p42 = scmp.eq.s32.totalorder %s25, 1
    %p43 = por %p41, %p42
    %p44 = scmp.ne.s32.totalorder %s33, %s34
    %p45 = scmp.eq.s32.totalorder %s25, 0
    %p46 = por %p44, %p45
    %p47 = scmp.ne.s32.totalorder %s33, %s34
    %p48 = scmp.eq.s32.totalorder %s26, 1
    %p49 = por %p47, %p48
    %p51 = scmp.ne.s32.totalorder %s34, %s50
    %p52 = scmp.eq.s32.totalorder %s26, 0
    %p53 = por %p51, %p52
    %s55 = sadd.s32 %s54, 1
    %p58 = scmp.eq.s32.totalorder %s20, 1
    %p59 = scmp.ne.s32.totalorder %s54, %s56
    %p60 = scmp.eq.s32.totalorder %s20, 0
    %p61 = por %p59, %p60
    %p62 = scmp.ne.s32.totalorder %s54, %s56
    %p63 = scmp.eq.s32.totalorder %s25, 1
    %p64 = por %p62, %p63
    %p65 = scmp.ne.s32.totalorder %s56, %s57
    %p66 = scmp.eq.s32.totalorder %s25, 0
    %p67 = por %p65, %p66
    %p68 = scmp.ne.s32.totalorder %s56, %s57
    %p69 = scmp.eq.s32.totalorder %s26, 1
    %p70 = por %p68, %p69
    %p72 = scmp.ne.s32.totalorder %s57, %s71
    %p73 = scmp.eq.s32.totalorder %s26, 0
    %p74 = por %p72, %p73
    %s76 = sadd.s32 %s75, 1
    %p79 = scmp.eq.s32.totalorder %s20, 1
    %p80 = scmp.ne.s32.totalorder %s75, %s77
    %p81 = scmp.eq.s32.totalorder %s20, 0
    %p82 = por %p80, %p81
    %p83 = scmp.ne.s32.totalorder %s75, %s77
    %p84 = scmp.eq.s32.totalorder %s25, 1
    %p85 = por %p83, %p84
    %p86 = scmp.ne.s32.totalorder %s77, %s78
    %p87 = scmp.eq.s32.totalorder %s25, 0
    %p88 = por %p86, %p87
    %p89 = scmp.ne.s32.totalorder %s77, %s78
    %p90 = scmp.eq.s32.totalorder %s26, 1
    %p91 = por %p89, %p90
    %p93 = scmp.ne.s32.totalorder %s78, %s92
    %p94 = scmp.eq.s32.totalorder %s26, 0
    %p95 = por %p93, %p94
    %s97 = sadd.s32 %s96, 1
    %p100 = scmp.eq.s32.totalorder %s20, 1
    %p101 = scmp.ne.s32.totalorder %s96, %s98
    %p102 = scmp.eq.s32.totalorder %s20, 0
    %p103 = por %p101, %p102
    %p104 = scmp.ne.s32.totalorder %s96, %s98
    %p105 = scmp.eq.s32.totalorder %s25, 1
    %p106 = por %p104, %p105
    %p107 = scmp.ne.s32.totalorder %s98, %s99
    %p108 = scmp.eq.s32.totalorder %s25, 0
    %p109 = por %p107, %p108
    %p110 = scmp.ne.s32.totalorder %s98, %s99
    %p111 = scmp.eq.s32.totalorder %s26, 1
    %p112 = por %p110, %p111
    %p114 = scmp.ne.s32.totalorder %s99, %s113
    %p115 = scmp.eq.s32.totalorder %s26, 0
    %p116 = por %p114, %p115
    %s118 = sadd.s32 %s117, 1
    %p121 = scmp.eq.s32.totalorder %s20, 1
    %p122 = scmp.ne.s32.totalorder %s117, %s119
    %p123 = scmp.eq.s32.totalorder %s20, 0
    %p124 = por %p122, %p123
    %p125 = scmp.ne.s32.totalorder %s117, %s119
    %p126 = scmp.eq.s32.totalorder %s25, 1
    %p127 = por %p125, %p126
    %p128 = scmp.ne.s32.totalorder %s119, %s120
    %p129 = scmp.eq.s32.totalorder %s25, 0
    %p130 = por %p128, %p129
    %p131 = scmp.ne.s32.totalorder %s119, %s120
    %p132 = scmp.eq.s32.totalorder %s26, 1
    %p133 = por %p131, %p132
    %p135 = scmp.ne.s32.totalorder %s120, %s134
    %p136 = scmp.eq.s32.totalorder %s26, 0
    %p137 = por %p135, %p136
    %s139 = sadd.s32 %s138, 1
    %p142 = scmp.eq.s32.totalorder %s20, 1
    %p143 = scmp.ne.s32.totalorder %s138, %s140
    %p144 = scmp.eq.s32.totalorder %s20, 0
    %p145 = por %p143, %p144
    %p146 = scmp.ne.s32.totalorder %s138, %s140
    %p147 = scmp.eq.s32.totalorder %s25, 1
    %p148 = por %p146, %p147
    %p149 = scmp.ne.s32.totalorder %s140, %s141
    %p150 = scmp.eq.s32.totalorder %s25, 0
    %p151 = por %p149, %p150
    %p152 = scmp.ne.s32.totalorder %s140, %s141
    %p153 = scmp.eq.s32.totalorder %s26, 1
    %p154 = por %p152, %p153
    %p156 = scmp.ne.s32.totalorder %s141, %s155
    %p157 = scmp.eq.s32.totalorder %s26, 0
    %p158 = por %p156, %p157
    %s160 = sadd.s32 %s159, 1
    %p163 = scmp.eq.s32.totalorder %s20, 1
    %p164 = scmp.ne.s32.totalorder %s159, %s161
    %p165 = scmp.eq.s32.totalorder %s20, 0
    %p166 = por %p164, %p165
    %p167 = scmp.ne.s32.totalorder %s159, %s161
    %p168 = scmp.eq.s32.totalorder %s25, 1
    %p169 = por %p167, %p168
    %p170 = scmp.ne.s32.totalorder %s161, %s162
    %p171 = scmp.eq.s32.totalorder %s25, 0
    %p172 = por %p170, %p171
    %p173 = scmp.ne.s32.totalorder %s161, %s162
    %p174 = scmp.eq.s32.totalorder %s26, 1
    %p175 = por %p173, %p174
    %p177 = scmp.ne.s32.totalorder %s162, %s176
    %p178 = scmp.eq.s32.totalorder %s26, 0
    %p179 = por %p177, %p178
    %s181 = sadd.s32 %s180, 1
    %p184 = scmp.eq.s32.totalorder %s20, 1
    %p185 = scmp.ne.s32.totalorder %s180, %s182
    %p186 = scmp.eq.s32.totalorder %s20, 0
    %p187 = por %p185, %p186
    %p188 = scmp.ne.s32.totalorder %s180, %s182
    %p189 = scmp.eq.s32.totalorder %s25, 1
    %p190 = por %p188, %p189
    %p191 = scmp.ne.s32.totalorder %s182, %s183
    %p192 = scmp.eq.s32.totalorder %s25, 0
    %p193 = por %p191, %p192
    %p194 = scmp.ne.s32.totalorder %s182, %s183
    %p195 = scmp.eq.s32.totalorder %s26, 1
    %p196 = por %p194, %p195
    %p198 = scmp.ne.s32.totalorder %s183, %s197
    %p199 = scmp.eq.s32.totalorder %s26, 0
    %p200 = por %p198, %p199
    %s202 = sadd.s32 %s201, 1
    %p205 = scmp.eq.s32.totalorder %s20, 1
    %p206 = scmp.ne.s32.totalorder %s201, %s203
    %p207 = scmp.eq.s32.totalorder %s20, 0
    %p208 = por %p206, %p207
    %p209 = scmp.ne.s32.totalorder %s201, %s203
    %p210 = scmp.eq.s32.totalorder %s25, 1
    %p211 = por %p209, %p210
    %p212 = scmp.ne.s32.totalorder %s203, %s204
    %p213 = scmp.eq.s32.totalorder %s25, 0
    %p214 = por %p212, %p213
    %p215 = scmp.ne.s32.totalorder %s203, %s204
    %p216 = scmp.eq.s32.totalorder %s26, 1
    %p217 = por %p215, %p216
    %p219 = scmp.ne.s32.totalorder %s204, %s218
    %p220 = scmp.eq.s32.totalorder %s26, 0
    %p221 = por %p219, %p220
    %s223 = sadd.s32 %s222, 1
    %p226 = scmp.eq.s32.totalorder %s20, 1
    %p227 = scmp.ne.s32.totalorder %s222, %s224
    %p228 = scmp.eq.s32.totalorder %s20, 0
    %p229 = por %p227, %p228
    %p230 = scmp.ne.s32.totalorder %s222, %s224
    %p231 = scmp.eq.s32.totalorder %s25, 1
    %p232 = por %p230, %p231
    %p233 = scmp.ne.s32.totalorder %s224, %s225
    %p234 = scmp.eq.s32.totalorder %s25, 0
    %p235 = por %p233, %p234
    %p236 = scmp.ne.s32.totalorder %s224, %s225
    %p237 = scmp.eq.s32.totalorder %s26, 1
    %p238 = por %p236, %p237
    %p240 = scmp.ne.s32.totalorder %s225, %s239
    %p241 = scmp.eq.s32.totalorder %s26, 0
    %p242 = por %p240, %p241
    %s244 = sadd.s32 %s243, 1
    %p247 = scmp.eq.s32.totalorder %s20, 1
    %p248 = scmp.ne.s32.totalorder %s243, %s245
    %p249 = scmp.eq.s32.totalorder %s20, 0
    %p250 = por %p248, %p249
    %p251 = scmp.ne.s32.totalorder %s243, %s245
    %p252 = scmp.eq.s32.totalorder %s25, 1
    %p253 = por %p251, %p252
    %p254 = scmp.ne.s32.totalorder %s245, %s246
    %p255 = scmp.eq.s32.totalorder %s25, 0
    %p256 = por %p254, %p255
    %p257 = scmp.ne.s32.totalorder %s245, %s246
    %p258 = scmp.eq.s32.totalorder %s26, 1
    %p259 = por %p257, %p258
    %p261 = scmp.ne.s32.totalorder %s246, %s260
    %p262 = scmp.eq.s32.totalorder %s26, 0
    %p263 = por %p261, %p262
    %s265 = sadd.s32 %s264, 1
    %p268 = scmp.eq.s32.totalorder %s20, 1
    %p269 = scmp.ne.s32.totalorder %s264, %s266
    %p270 = scmp.eq.s32.totalorder %s20, 0
    %p271 = por %p269, %p270
    %p272 = scmp.ne.s32.totalorder %s264, %s266
    %p273 = scmp.eq.s32.totalorder %s25, 1
    %p274 = por %p272, %p273
    %p275 = scmp.ne.s32.totalorder %s266, %s267
    %p276 = scmp.eq.s32.totalorder %s25, 0
    %p277 = por %p275, %p276
    %p278 = scmp.ne.s32.totalorder %s266, %s267
    %p279 = scmp.eq.s32.totalorder %s26, 1
    %p280 = por %p278, %p279
    %p282 = scmp.ne.s32.totalorder %s267, %s281
    %p283 = scmp.eq.s32.totalorder %s26, 0
    %p284 = por %p282, %p283
    %s286 = sadd.s32 %s285, 1
    %p289 = scmp.eq.s32.totalorder %s20, 1
    %p290 = scmp.ne.s32.totalorder %s285, %s287
    %p291 = scmp.eq.s32.totalorder %s20, 0
    %p292 = por %p290, %p291
    %p293 = scmp.ne.s32.totalorder %s285, %s287
    %p294 = scmp.eq.s32.totalorder %s25, 1
    %p295 = por %p293, %p294
    %p296 = scmp.ne.s32.totalorder %s287, %s288
    %p297 = scmp.eq.s32.totalorder %s25, 0
    %p298 = por %p296, %p297
    %p299 = scmp.ne.s32.totalorder %s287, %s288
    %p300 = scmp.eq.s32.totalorder %s26, 1
    %p301 = por %p299, %p300
    %p303 = scmp.ne.s32.totalorder %s288, %s302
    %p304 = scmp.eq.s32.totalorder %s26, 0
    %p305 = por %p303, %p304
    %s307 = sadd.s32 %s306, 1
    %p310 = scmp.eq.s32.totalorder %s20, 1
    %p311 = scmp.ne.s32.totalorder %s306, %s308
    %p312 = scmp.eq.s32.totalorder %s20, 0
    %p313 = por %p311, %p312
    %p314 = scmp.ne.s32.totalorder %s306, %s308
    %p315 = scmp.eq.s32.totalorder %s25, 1
    %p316 = por %p314, %p315
    %p317 = scmp.ne.s32.totalorder %s308, %s309
    %p318 = scmp.eq.s32.totalorder %s25, 0
    %p319 = por %p317, %p318
    %p320 = scmp.ne.s32.totalorder %s308, %s309
    %p321 = scmp.eq.s32.totalorder %s26, 1
    %p322 = por %p320, %p321
    %p324 = scmp.ne.s32.totalorder %s309, %s323
    %p325 = scmp.eq.s32.totalorder %s26, 0
    %p326 = por %p324, %p325
    %s327 = ssub.s32 %s20, %s27
    %p328 = scmp.eq.s32.totalorder %s327, 0
    %s330 = sadd.s32 %s329, 1
    %s331 = scalar_select %p328, %s329, %s330
    %p334 = pneg %p328
    %p335 = scmp.eq.s32.totalorder %s20, 1
    %p336 = por %p334, %p335
    %p337 = scmp.ne.s32.totalorder %s329, %s332
    %p338 = scmp.eq.s32.totalorder %s20, 0
    %p339 = por %p337, %p338
    %p340 = scmp.ne.s32.totalorder %s329, %s332
    %p341 = scmp.eq.s32.totalorder %s25, 1
    %p342 = por %p340, %p341
    %p343 = scmp.ne.s32.totalorder %s332, %s333
    %p344 = scmp.eq.s32.totalorder %s25, 0
    %p345 = por %p343, %p344
    %p346 = scmp.ne.s32.totalorder %s332, %s333
    %p347 = scmp.eq.s32.totalorder %s26, 1
    %p348 = por %p346, %p347
    %p350 = scmp.ne.s32.totalorder %s333, %s349
    %p351 = scmp.eq.s32.totalorder %s26, 0
    %p352 = por %p350, %p351
    %p353 = scmp.le.s32.totalorder 1, %s20
    %p354 = scmp.lt.s32.totalorder %s20, 3
    %p355 = pnand %p353, %p354
    %p356 = pneg %p355
    // Predicated region
    $region9: #{encoder_forward.1} parent=5 // pred_check
      _
    $region10: #{encoder_forward.1} parent=5 // pred_check_branch
      %358 = sbr.rel (%p355) target = $region12
    $region11: #{encoder_forward.1} parent=5 // pred_region
      %s359 = ssub.s32 %s20, 1
      // Predicated region
      $region13: #{encoder_forward.1} parent=11 // pred_check
        %p360 = pneg %p67
      $region14: #{encoder_forward.1} parent=11 // pred_check_branch
        %362 = sbr.rel (%p360) target = $region16
      $region15: #{encoder_forward.1} parent=11 // pred_region
        _
      $region16: #{encoder_forward.1} parent=11 // pred_fallthru
        _
      // Predicated region
      $region17: #{encoder_forward.1} parent=11 // pred_check
        %p363 = pneg %p88
      $region18: #{encoder_forward.1} parent=11 // pred_check_branch
        %365 = sbr.rel (%p363) target = $region20
      $region19: #{encoder_forward.1} parent=11 // pred_region
        _
      $region20: #{encoder_forward.1} parent=11 // pred_fallthru
        _
      // Predicated region
      $region21: #{encoder_forward.1} parent=11 // pred_check
        %p366 = pneg %p109
      $region22: #{encoder_forward.1} parent=11 // pred_check_branch
        %368 = sbr.rel (%p366) target = $region24
      $region23: #{encoder_forward.1} parent=11 // pred_region
        _
      $region24: #{encoder_forward.1} parent=11 // pred_fallthru
        _
      // Predicated region
      $region25: #{encoder_forward.1} parent=11 // pred_check
        %p369 = pneg %p130
      $region26: #{encoder_forward.1} parent=11 // pred_check_branch
        %371 = sbr.rel (%p369) target = $region28
      $region27: #{encoder_forward.1} parent=11 // pred_region
        _
      $region28: #{encoder_forward.1} parent=11 // pred_fallthru
        _
      // Predicated region
      $region29: #{encoder_forward.1} parent=11 // pred_check
        %p372 = pneg %p151
      $region30: #{encoder_forward.1} parent=11 // pred_check_branch
        %374 = sbr.rel (%p372) target = $region32
      $region31: #{encoder_forward.1} parent=11 // pred_region
        _
      $region32: #{encoder_forward.1} parent=11 // pred_fallthru
        _
      // Predicated region
      $region33: #{encoder_forward.1} parent=11 // pred_check
        %p375 = pneg %p172
      $region34: #{encoder_forward.1} parent=11 // pred_check_branch
        %377 = sbr.rel (%p375) target = $region36
      $region35: #{encoder_forward.1} parent=11 // pred_region
        _
      $region36: #{encoder_forward.1} parent=11 // pred_fallthru
        _
      // Predicated region
      $region37: #{encoder_forward.1} parent=11 // pred_check
        %p378 = pneg %p193
      $region38: #{encoder_forward.1} parent=11 // pred_check_branch
        %380 = sbr.rel (%p378) target = $region40
      $region39: #{encoder_forward.1} parent=11 // pred_region
        _
      $region40: #{encoder_forward.1} parent=11 // pred_fallthru
        _
      // Predicated region
      $region41: #{encoder_forward.1} parent=11 // pred_check
        %p381 = pneg %p214
      $region42: #{encoder_forward.1} parent=11 // pred_check_branch
        %383 = sbr.rel (%p381) target = $region44
      $region43: #{encoder_forward.1} parent=11 // pred_region
        _
      $region44: #{encoder_forward.1} parent=11 // pred_fallthru
        _
      // Predicated region
      $region45: #{encoder_forward.1} parent=11 // pred_check
        %p384 = pneg %p235
      $region46: #{encoder_forward.1} parent=11 // pred_check_branch
        %386 = sbr.rel (%p384) target = $region48
      $region47: #{encoder_forward.1} parent=11 // pred_region
        _
      $region48: #{encoder_forward.1} parent=11 // pred_fallthru
        _
      // Predicated region
      $region49: #{encoder_forward.1} parent=11 // pred_check
        %p387 = pneg %p256
      $region50: #{encoder_forward.1} parent=11 // pred_check_branch
        %389 = sbr.rel (%p387) target = $region52
      $region51: #{encoder_forward.1} parent=11 // pred_region
        _
      $region52: #{encoder_forward.1} parent=11 // pred_fallthru
        _
      // Predicated region
      $region53: #{encoder_forward.1} parent=11 // pred_check
        %p390 = pneg %p277
      $region54: #{encoder_forward.1} parent=11 // pred_check_branch
        %392 = sbr.rel (%p390) target = $region56
      $region55: #{encoder_forward.1} parent=11 // pred_region
        _
      $region56: #{encoder_forward.1} parent=11 // pred_fallthru
        _
      // Predicated region
      $region57: #{encoder_forward.1} parent=11 // pred_check
        %p393 = pneg %p298
      $region58: #{encoder_forward.1} parent=11 // pred_check_branch
        %395 = sbr.rel (%p393) target = $region60
      $region59: #{encoder_forward.1} parent=11 // pred_region
        _
      $region60: #{encoder_forward.1} parent=11 // pred_fallthru
        _
      // Predicated region
      $region61: #{encoder_forward.1} parent=11 // pred_check
        %p396 = pneg %p319
      $region62: #{encoder_forward.1} parent=11 // pred_check_branch
        %398 = sbr.rel (%p396) target = $region64
      $region63: #{encoder_forward.1} parent=11 // pred_region
        _
      $region64: #{encoder_forward.1} parent=11 // pred_fallthru
        _
    $region12: #{encoder_forward.1} parent=5 // pred_fallthru
      _
    %p399 = scmp.lt.s32.totalorder %s20, 2
    // Predicated region
    $region65: #{encoder_forward.1} parent=5 // pred_check
      %p400 = pneg %p399
    $region66: #{encoder_forward.1} parent=5 // pred_check_branch
      %402 = sbr.rel (%p400) target = $region68
    $region67: #{encoder_forward.1} parent=5 // pred_region
      // Predicated region
      $region69: #{encoder_forward.1} parent=67 // pred_check
        %p403 = pneg %p40
      $region70: #{encoder_forward.1} parent=67 // pred_check_branch
        %405 = sbr.rel (%p403) target = $region72
      $region71: #{encoder_forward.1} parent=67 // pred_region
        %p406 = scmp.lt.s32.totalorder %s20, 1
        %s407 = scalar_select %p406, %s20, 1
        %s408 = smul.addr %s407, 8
        %s409 = smul.addr %s408, 4
        %s410 = scalar_lea.vmem %s0, %s409
      $region72: #{encoder_forward.1} parent=67 // pred_fallthru
        _
    $region68: #{encoder_forward.1} parent=5 // pred_fallthru
      _
    %p411 = scmp.le.s32.totalorder 1, %s20
    %p412 = scmp.lt.s32.totalorder %s20, 3
    %p413 = pnand %p411, %p412
    %p414 = pneg %p413
    // Predicated region
    $region73: #{encoder_forward.1} parent=5 // pred_check
      _
    $region74: #{encoder_forward.1} parent=5 // pred_check_branch
      %416 = sbr.rel (%p413) target = $region76
    $region75: #{encoder_forward.1} parent=5 // pred_region
      %s417 = ssub.s32 %s20, 1
      %p418 = scmp.lt.s32.totalorder %s25, 1
      %s419 = scalar_select %p418, %s25, 1
      %s420 = smul.addr %s419, 8
      %s421 = smul.addr %s420, 4
      %s422 = scalar_lea.vmem %s0, %s421
      %p423 = pneg %p46
      %p424 = pneg %p43
      %p425 = pneg %p67
      %p426 = pneg %p64
      %p427 = pneg %p88
      %p428 = pneg %p85
      %p429 = pneg %p109
      %p430 = pneg %p106
      %p431 = pneg %p130
      %p432 = pneg %p127
      %p433 = pneg %p151
      %p434 = pneg %p148
      %p435 = pneg %p172
      %p436 = pneg %p169
      %p437 = pneg %p193
      %p438 = pneg %p190
      %p439 = pneg %p214
      %p440 = pneg %p211
      %p441 = pneg %p235
      %p442 = pneg %p232
      %p443 = pneg %p256
      %p444 = pneg %p253
      %p445 = pneg %p277
      %p446 = pneg %p274
      %p447 = pneg %p298
      %p448 = pneg %p295
      %p449 = pneg %p319
      %p450 = pneg %p316
      %p451 = pneg %p345
      %p452 = pneg %p342
      %p453 = scmp.lt.s32.totalorder %s25, 1
      %s454 = scalar_select %p453, %s25, 1
      %s455 = scalar_lea.vmem %s14, %s454
      %p456 = scmp.lt.s32.totalorder %s25, 1
      %s457 = scalar_select %p456, %s25, 1
      %s458 = smul.addr %s457, 8
      %s459 = smul.addr %s458, 4
      %s460 = scalar_lea.vmem %s0, %s459
      %p461 = scmp.lt.s32.totalorder %s25, 1
      %s462 = scalar_select %p461, %s25, 1
      %s463 = scalar_lea.vmem %s14, %s462
      %v465 = vld [vmem:[%s460] sm:$0xf]
      %v466 = vld [vmem:[%s460 + $0x4] sm:$0xf]
      %v467 = vld [vmem:[%s460 + $0x8] sm:$0xf]
      %v468 = vld [vmem:[%s460 + $0xc] sm:$0xf]
      %v469 = vld [vmem:[%s460 + $0x10] sm:$0xf]
      %v470 = vld [vmem:[%s460 + $0x14] sm:$0xf]
      %v471 = vld [vmem:[%s460 + $0x18] sm:$0xf]
      %v472 = vld [vmem:[%s460 + $0x1c] sm:$0xf]
      %v473 = vld [vmem:[%s1] sm:$0xf]
      %v474 = vld [vmem:[%s1 + $0x4] sm:$0xf]
      %v475 = vld [vmem:[%s1 + $0x8] sm:$0xf]
      %v476 = vld [vmem:[%s1 + $0xc] sm:$0x3]
      %v485 = vunpack.c.l.b16 %v465
      %v486 = vunpack.c.l.b16 %v466
      %v487 = vunpack.c.l.b16 %v467
      %v488 = vunpack.c.l.b16 %v468
      %v489 = vunpack.c.l.b16 %v469
      %v490 = vunpack.c.l.b16 %v470
      %v491 = vunpack.c.l.b16 %v471
      %v492 = vunpack.c.l.b16 %v472
      %v493 = vpack.c.b16 %v486, %v485
      %v494 = vpack.c.b16 %v488, %v487
      %v495 = vpack.c.b16 %v490, %v489
      %v496 = vpack.c.b16 %v492, %v491
      %v501 = vunpack.c.l.b16 %v473
      %v502 = vunpack.c.l.b16 %v474
      %v503 = vunpack.c.l.b16 %v475
      %v504 = vunpack.c.l.b16 %v476
      %v505 = vpack.c.b16 %v502, %v501
      %v506 = vpack.c.b16 %v504, %v503
      %vm508 = vcmask 220160
      %v510 = vsel %vm508, %v493, 0
      %v513 = vsel %vm508, %v494, 0
      %v516 = vsel %vm508, %v495, 0
      %v519 = vsel %vm508, %v496, 0
      %vm521 = vcmask 1044480
      %vm522 = vcmask 1045504
      %v523 = vsel %vm521, 4294967295, 65535
      %v524 = vsel %vm522, %v523, 0
      %v526 = vand.u32 %v506, %v524
      %528 = vmatpush.bf16.msra.mxu0 0
      %529 = vmatpush.bf16.msra.mxu0 0
      %530 = vmatpush.bf16.msra.mxu0 0
      %531 = vmatpush.bf16.msra.mxu0 0
      %532 = vmatpush.bf16.msra.mxu0 0
      %533 = vmatpush.bf16.msra.mxu0 0
      %534 = vmatpush.bf16.msra.mxu0 %v526
      %535 = vmatpush.bf16.msra.mxu0 %v505
      %536 = vmatmul.bf16.gmra.mxu0 %v510
      %v537 = vpop.f32.mrf.mxu0
      %v538 = vadd.f32 0.0, %v537
      %v539 = vpop.f32.mrf.mxu0
      %v540 = vadd.f32 0.0, %v539
      %541 = vmatmul.bf16.gmra.mxu0 %v513
      %v542 = vpop.f32.mrf.mxu0
      %v543 = vadd.f32 0.0, %v542
      %v544 = vpop.f32.mrf.mxu0
      %v545 = vadd.f32 0.0, %v544
      %546 = vmatmul.bf16.gmra.mxu0 %v516
      %v547 = vpop.f32.mrf.mxu0
      %v548 = vadd.f32 0.0, %v547
      %v549 = vpop.f32.mrf.mxu0
      %v550 = vadd.f32 0.0, %v549
      %551 = vmatmul.bf16.gmra.mxu0 %v519
      %v552 = vpop.f32.mrf.mxu0
      %v553 = vadd.f32 0.0, %v552
      %v554 = vpop.f32.mrf.mxu0
      %v555 = vadd.f32 0.0, %v554
      %556 = vdwg.mxu0
      %v557 = vld [vmem:[%s2] sm:$0x1]
      %v559 = vperm.slane %v557, 0
      %v561 = vmul.f32 %v538, %v559
      %v562 = vmul.f32 %v540, %v559
      %v563 = vmul.f32 %v543, %v559
      %v564 = vmul.f32 %v545, %v559
      %v565 = vmul.f32 %v548, %v559
      %v566 = vmul.f32 %v550, %v559
      %v567 = vmul.f32 %v553, %v559
      %v568 = vmul.f32 %v555, %v559
      %v569 = vld [vmem:[%s3] sm:$0x1]
      %v571 = vperm.slane %v569, 0
      %v573 = vadd.f32 %v561, %v571
      %v574 = vadd.f32 %v562, %v571
      %v575 = vadd.f32 %v563, %v571
      %v576 = vadd.f32 %v564, %v571
      %v577 = vadd.f32 %v565, %v571
      %v578 = vadd.f32 %v566, %v571
      %v579 = vadd.f32 %v567, %v571
      %v580 = vadd.f32 %v568, %v571
      %v581 = vmax.f32 %v573, 0.0
      %v582 = vmax.f32 %v574, 0.0
      %v583 = vmax.f32 %v575, 0.0
      %v584 = vmax.f32 %v576, 0.0
      %v585 = vmax.f32 %v577, 0.0
      %v586 = vmax.f32 %v578, 0.0
      %v587 = vmax.f32 %v579, 0.0
      %v588 = vmax.f32 %v580, 0.0
      %v589 = vpack.c.bf16 %v582, %v581
      %v590 = vpack.c.bf16 %v584, %v583
      %v591 = vpack.c.bf16 %v586, %v585
      %v592 = vpack.c.bf16 %v588, %v587
      %v593 = vld [vmem:[%s4] sm:$0xf]
      %v594 = vld [vmem:[%s4 + $0x4] sm:$0xf]
      %v595 = vld [vmem:[%s4 + $0x8] sm:$0xf]
      %v596 = vld [vmem:[%s4 + $0xc] sm:$0xf]
      %v597 = vld [vmem:[%s4 + $0x10] sm:$0xf]
      %v598 = vld [vmem:[%s4 + $0x14] sm:$0xf]
      %v599 = vld [vmem:[%s4 + $0x18] sm:$0xf]
      %v600 = vld [vmem:[%s4 + $0x1c] sm:$0xf]
      %v601 = vld [vmem:[%s4 + $0x20] sm:$0xf]
      %v602 = vld [vmem:[%s4 + $0x24] sm:$0xf]
      %v603 = vld [vmem:[%s4 + $0x28] sm:$0xf]
      %v604 = vld [vmem:[%s4 + $0x2c] sm:$0xf]
      %v605 = vld [vmem:[%s4 + $0x30] sm:$0xf]
      %v606 = vld [vmem:[%s4 + $0x34] sm:$0xf]
      %v607 = vld [vmem:[%s4 + $0x38] sm:$0xf]
      %v608 = vld [vmem:[%s4 + $0x3c] sm:$0xf]
      %v609 = vld [vmem:[%s4 + $0x40] sm:$0xf]
      %v610 = vld [vmem:[%s4 + $0x44] sm:$0xf]
      %v629 = vunpack.c.l.b16 %v593
      %v630 = vunpack.c.l.b16 %v594
      %v631 = vunpack.c.l.b16 %v595
      %v632 = vunpack.c.l.b16 %v596
      %v633 = vunpack.c.l.b16 %v597
      %v634 = vunpack.c.l.b16 %v598
      %v635 = vunpack.c.l.b16 %v599
      %v636 = vunpack.c.l.b16 %v600
      %v637 = vunpack.c.l.b16 %v601
      %v638 = vunpack.c.l.b16 %v602
      %v639 = vunpack.c.l.b16 %v603
      %v640 = vunpack.c.l.b16 %v604
      %v641 = vunpack.c.l.b16 %v605
      %v642 = vunpack.c.l.b16 %v606
      %v643 = vunpack.c.l.b16 %v607
      %v644 = vunpack.c.l.b16 %v608
      %v645 = vunpack.c.l.b16 %v609
      %v646 = vunpack.c.l.b16 %v610
      %v647 = vpack.c.b16 %v630, %v629
      %v648 = vpack.c.b16 %v632, %v631
      %v649 = vpack.c.b16 %v634, %v633
      %v650 = vpack.c.b16 %v636, %v635
      %v651 = vpack.c.b16 %v638, %v637
      %v652 = vpack.c.b16 %v640, %v639
      %v653 = vpack.c.b16 %v642, %v641
      %v654 = vpack.c.b16 %v644, %v643
      %v655 = vpack.c.b16 %v646, %v645
      %vm656 = vcmask 523264
      %v658 = vsel %vm656, %v647, 0
      %v661 = vsel %vm656, %v648, 0
      %v664 = vsel %vm656, %v649, 0
      %v667 = vsel %vm656, %v650, 0
      %v670 = vsel %vm656, %v651, 0
      %v673 = vsel %vm656, %v652, 0
      %v676 = vsel %vm656, %v653, 0
      %v679 = vsel %vm656, %v654, 0
      %v682 = vsel %vm656, %v655, 0
      %684 = vmatpush.bf16.msra.mxu0 0
      %685 = vmatpush.bf16.msra.mxu0 0
      %686 = vmatpush.bf16.msra.mxu0 0
      %687 = vmatpush.bf16.msra.mxu0 0
      %688 = vmatpush.bf16.msra.mxu0 %v592
      %689 = vmatpush.bf16.msra.mxu0 %v591
      %690 = vmatpush.bf16.msra.mxu0 %v590
      %691 = vmatpush.bf16.msra.mxu0 %v589
      %692 = vmatmul.bf16.gmra.mxu0 %v658
      %v693 = vpop.f32.mrf.mxu0
      %v694 = vadd.f32 0.0, %v693
      %v695 = vpop.f32.mrf.mxu0
      %v696 = vadd.f32 0.0, %v695
      %697 = vmatmul.bf16.gmra.mxu0 %v661
      %v698 = vpop.f32.mrf.mxu0
      %v699 = vadd.f32 0.0, %v698
      %v700 = vpop.f32.mrf.mxu0
      %v701 = vadd.f32 0.0, %v700
      %702 = vmatmul.bf16.gmra.mxu0 %v664
      %v703 = vpop.f32.mrf.mxu0
      %v704 = vadd.f32 0.0, %v703
      %v705 = vpop.f32.mrf.mxu0
      %v706 = vadd.f32 0.0, %v705
      %707 = vmatmul.bf16.gmra.mxu0 %v667
      %v708 = vpop.f32.mrf.mxu0
      %v709 = vadd.f32 0.0, %v708
      %v710 = vpop.f32.mrf.mxu0
      %v711 = vadd.f32 0.0, %v710
      %712 = vmatmul.bf16.gmra.mxu0 %v670
      %v713 = vpop.f32.mrf.mxu0
      %v714 = vadd.f32 0.0, %v713
      %v715 = vpop.f32.mrf.mxu0
      %v716 = vadd.f32 0.0, %v715
      %717 = vmatmul.bf16.gmra.mxu0 %v673
      %v718 = vpop.f32.mrf.mxu0
      %v719 = vadd.f32 0.0, %v718
      %v720 = vpop.f32.mrf.mxu0
      %v721 = vadd.f32 0.0, %v720
      %722 = vmatmul.bf16.gmra.mxu0 %v676
      %v723 = vpop.f32.mrf.mxu0
      %v724 = vadd.f32 0.0, %v723
      %v725 = vpop.f32.mrf.mxu0
      %v726 = vadd.f32 0.0, %v725
      %727 = vmatmul.bf16.gmra.mxu0 %v679
      %v728 = vpop.f32.mrf.mxu0
      %v729 = vadd.f32 0.0, %v728
      %v730 = vpop.f32.mrf.mxu0
      %v731 = vadd.f32 0.0, %v730
      %732 = vmatmul.bf16.gmra.mxu0 %v682
      %v733 = vpop.f32.mrf.mxu0
      %v734 = vadd.f32 0.0, %v733
      %v735 = vpop.f32.mrf.mxu0
      %v736 = vadd.f32 0.0, %v735
      %737 = vdwg.mxu0
      %v738 = vpack.c.bf16 %v696, %v694
      %v739 = vld [vmem:[%s5] sm:$0xf]
      %v740 = vld [vmem:[%s5 + $0x4] sm:$0xf]
      %v741 = vld [vmem:[%s5 + $0x8] sm:$0xf]
      %v742 = vld [vmem:[%s5 + $0xc] sm:$0xf]
      %v743 = vld [vmem:[%s5 + $0x10] sm:$0xf]
      %v744 = vld [vmem:[%s5 + $0x14] sm:$0xf]
      %v745 = vld [vmem:[%s5 + $0x18] sm:$0xf]
      %v746 = vld [vmem:[%s5 + $0x1c] sm:$0xf]
      %v747 = vpack.c.bf16 %v701, %v699
      %s748 = scalar_lea.vmem %s5, 32
      %v749 = vld [vmem:[%s748] sm:$0xf]
      %v750 = vld [vmem:[%s748 + $0x4] sm:$0xf]
      %v751 = vld [vmem:[%s748 + $0x8] sm:$0xf]
      %v752 = vld [vmem:[%s748 + $0xc] sm:$0xf]
      %v753 = vld [vmem:[%s748 + $0x10] sm:$0xf]
      %v754 = vld [vmem:[%s748 + $0x14] sm:$0xf]
      %v755 = vld [vmem:[%s748 + $0x18] sm:$0xf]
      %v756 = vld [vmem:[%s748 + $0x1c] sm:$0xf]
      %v765 = vunpack.c.l.b16 %v749
      %v766 = vunpack.c.l.b16 %v750
      %v767 = vunpack.c.l.b16 %v751
      %v768 = vunpack.c.l.b16 %v752
      %v769 = vunpack.c.l.b16 %v753
      %v770 = vunpack.c.l.b16 %v754
      %v771 = vunpack.c.l.b16 %v755
      %v772 = vunpack.c.l.b16 %v756
      %v773 = vpack.c.b16 %v766, %v765
      %v774 = vpack.c.b16 %v768, %v767
      %v775 = vpack.c.b16 %v770, %v769
      %v776 = vpack.c.b16 %v772, %v771
      %v782 = vsel %vm656, %v747, 0
      %784 = vmatpush.bf16.msra.mxu0 0
      %785 = vmatpush.bf16.msra.mxu0 0
      %786 = vmatpush.bf16.msra.mxu0 0
      %787 = vmatpush.bf16.msra.mxu0 0
      %788 = vmatpush.bf16.msra.mxu0 %v776
      %789 = vmatpush.bf16.msra.mxu0 %v775
      %790 = vmatpush.bf16.msra.mxu0 %v774
      %791 = vmatpush.bf16.msra.mxu0 %v773
      %792 = vmatmul.bf16.gmra.mxu0 %v782
      %v793 = vpop.f32.mrf.mxu0
      %v794 = vadd.f32 0.0, %v793
      %v795 = vpop.f32.mrf.mxu0
      %v796 = vadd.f32 0.0, %v795
      %797 = vdwg.mxu0
      %v806 = vunpack.c.l.b16 %v739
      %v807 = vunpack.c.l.b16 %v740
      %v808 = vunpack.c.l.b16 %v741
      %v809 = vunpack.c.l.b16 %v742
      %v810 = vunpack.c.l.b16 %v743
      %v811 = vunpack.c.l.b16 %v744
      %v812 = vunpack.c.l.b16 %v745
      %v813 = vunpack.c.l.b16 %v746
      %v814 = vpack.c.b16 %v807, %v806
      %v815 = vpack.c.b16 %v809, %v808
      %v816 = vpack.c.b16 %v811, %v810
      %v817 = vpack.c.b16 %v813, %v812
      %v823 = vsel %vm656, %v738, 0
      %825 = vmatpush.bf16.msra.mxu0 0
      %826 = vmatpush.bf16.msra.mxu0 0
      %827 = vmatpush.bf16.msra.mxu0 0
      %828 = vmatpush.bf16.msra.mxu0 0
      %829 = vmatpush.bf16.msra.mxu0 %v817
      %830 = vmatpush.bf16.msra.mxu0 %v816
      %831 = vmatpush.bf16.msra.mxu0 %v815
      %832 = vmatpush.bf16.msra.mxu0 %v814
      %833 = vmatmul.bf16.gmra.mxu0 %v823
      %v834 = vpop.f32.mrf.mxu0
      %v835 = vadd.f32 %v794, %v834
      %v836 = vpop.f32.mrf.mxu0
      %v837 = vadd.f32 %v796, %v836
      %838 = vdwg.mxu0
      %v839 = vpack.c.bf16 %v706, %v704
      %s840 = scalar_lea.vmem %s5, 64
      %v841 = vld [vmem:[%s840] sm:$0xf]
      %v842 = vld [vmem:[%s840 + $0x4] sm:$0xf]
      %v843 = vld [vmem:[%s840 + $0x8] sm:$0xf]
      %v844 = vld [vmem:[%s840 + $0xc] sm:$0xf]
      %v845 = vld [vmem:[%s840 + $0x10] sm:$0xf]
      %v846 = vld [vmem:[%s840 + $0x14] sm:$0xf]
      %v847 = vld [vmem:[%s840 + $0x18] sm:$0xf]
      %v848 = vld [vmem:[%s840 + $0x1c] sm:$0xf]
      %v857 = vunpack.c.l.b16 %v841
      %v858 = vunpack.c.l.b16 %v842
      %v859 = vunpack.c.l.b16 %v843
      %v860 = vunpack.c.l.b16 %v844
      %v861 = vunpack.c.l.b16 %v845
      %v862 = vunpack.c.l.b16 %v846
      %v863 = vunpack.c.l.b16 %v847
      %v864 = vunpack.c.l.b16 %v848
      %v865 = vpack.c.b16 %v858, %v857
      %v866 = vpack.c.b16 %v860, %v859
      %v867 = vpack.c.b16 %v862, %v861
      %v868 = vpack.c.b16 %v864, %v863
      %v874 = vsel %vm656, %v839, 0
      %876 = vmatpush.bf16.msra.mxu0 0
      %877 = vmatpush.bf16.msra.mxu0 0
      %878 = vmatpush.bf16.msra.mxu0 0
      %879 = vmatpush.bf16.msra.mxu0 0
      %880 = vmatpush.bf16.msra.mxu0 %v868
      %881 = vmatpush.bf16.msra.mxu0 %v867
      %882 = vmatpush.bf16.msra.mxu0 %v866
      %883 = vmatpush.bf16.msra.mxu0 %v865
      %884 = vmatmul.bf16.gmra.mxu0 %v874
      %v885 = vpop.f32.mrf.mxu0
      %v886 = vadd.f32 0.0, %v885
      %v887 = vpop.f32.mrf.mxu0
      %v888 = vadd.f32 0.0, %v887
      %889 = vdwg.mxu0
      %v890 = vadd.f32 %v835, %v886
      %v891 = vadd.f32 %v837, %v888
      %v892 = vpack.c.bf16 %v711, %v709
      %s893 = scalar_lea.vmem %s5, 96
      %v894 = vld [vmem:[%s893] sm:$0xf]
      %v895 = vld [vmem:[%s893 + $0x4] sm:$0xf]
      %v896 = vld [vmem:[%s893 + $0x8] sm:$0xf]
      %v897 = vld [vmem:[%s893 + $0xc] sm:$0xf]
      %v898 = vld [vmem:[%s893 + $0x10] sm:$0xf]
      %v899 = vld [vmem:[%s893 + $0x14] sm:$0xf]
      %v900 = vld [vmem:[%s893 + $0x18] sm:$0xf]
      %v901 = vld [vmem:[%s893 + $0x1c] sm:$0xf]
      %v910 = vunpack.c.l.b16 %v894
      %v911 = vunpack.c.l.b16 %v895
      %v912 = vunpack.c.l.b16 %v896
      %v913 = vunpack.c.l.b16 %v897
      %v914 = vunpack.c.l.b16 %v898
      %v915 = vunpack.c.l.b16 %v899
      %v916 = vunpack.c.l.b16 %v900
      %v917 = vunpack.c.l.b16 %v901
      %v918 = vpack.c.b16 %v911, %v910
      %v919 = vpack.c.b16 %v913, %v912
      %v920 = vpack.c.b16 %v915, %v914
      %v921 = vpack.c.b16 %v917, %v916
      %v927 = vsel %vm656, %v892, 0
      %929 = vmatpush.bf16.msra.mxu0 0
      %930 = vmatpush.bf16.msra.mxu0 0
      %931 = vmatpush.bf16.msra.mxu0 0
      %932 = vmatpush.bf16.msra.mxu0 0
      %933 = vmatpush.bf16.msra.mxu0 %v921
      %934 = vmatpush.bf16.msra.mxu0 %v920
      %935 = vmatpush.bf16.msra.mxu0 %v919
      %936 = vmatpush.bf16.msra.mxu0 %v918
      %937 = vmatmul.bf16.gmra.mxu0 %v927
      %v938 = vpop.f32.mrf.mxu0
      %v939 = vadd.f32 0.0, %v938
      %v940 = vpop.f32.mrf.mxu0
      %v941 = vadd.f32 0.0, %v940
      %942 = vdwg.mxu0
      %v943 = vadd.f32 %v890, %v939
      %v944 = vadd.f32 %v891, %v941
      %v945 = vpack.c.bf16 %v716, %v714
      %s946 = scalar_lea.vmem %s5, 128
      %v947 = vld [vmem:[%s946] sm:$0xf]
      %v948 = vld [vmem:[%s946 + $0x4] sm:$0xf]
      %v949 = vld [vmem:[%s946 + $0x8] sm:$0xf]
      %v950 = vld [vmem:[%s946 + $0xc] sm:$0xf]
      %v951 = vld [vmem:[%s946 + $0x10] sm:$0xf]
      %v952 = vld [vmem:[%s946 + $0x14] sm:$0xf]
      %v953 = vld [vmem:[%s946 + $0x18] sm:$0xf]
      %v954 = vld [vmem:[%s946 + $0x1c] sm:$0xf]
      %v963 = vunpack.c.l.b16 %v947
      %v964 = vunpack.c.l.b16 %v948
      %v965 = vunpack.c.l.b16 %v949
      %v966 = vunpack.c.l.b16 %v950
      %v967 = vunpack.c.l.b16 %v951
      %v968 = vunpack.c.l.b16 %v952
      %v969 = vunpack.c.l.b16 %v953
      %v970 = vunpack.c.l.b16 %v954
      %v971 = vpack.c.b16 %v964, %v963
      %v972 = vpack.c.b16 %v966, %v965
      %v973 = vpack.c.b16 %v968, %v967
      %v974 = vpack.c.b16 %v970, %v969
      %v980 = vsel %vm656, %v945, 0
      %982 = vmatpush.bf16.msra.mxu0 0
      %983 = vmatpush.bf16.msra.mxu0 0
      %984 = vmatpush.bf16.msra.mxu0 0
      %985 = vmatpush.bf16.msra.mxu0 0
      %986 = vmatpush.bf16.msra.mxu0 %v974
      %987 = vmatpush.bf16.msra.mxu0 %v973
      %988 = vmatpush.bf16.msra.mxu0 %v972
      %989 = vmatpush.bf16.msra.mxu0 %v971
      %990 = vmatmul.bf16.gmra.mxu0 %v980
      %v991 = vpop.f32.mrf.mxu0
      %v992 = vadd.f32 0.0, %v991
      %v993 = vpop.f32.mrf.mxu0
      %v994 = vadd.f32 0.0, %v993
      %995 = vdwg.mxu0
      %v996 = vadd.f32 %v943, %v992
      %v997 = vadd.f32 %v944, %v994
      %v998 = vpack.c.bf16 %v721, %v719
      %s999 = scalar_lea.vmem %s5, 160
      %v1000 = vld [vmem:[%s999] sm:$0xf]
      %v1001 = vld [vmem:[%s999 + $0x4] sm:$0xf]
      %v1002 = vld [vmem:[%s999 + $0x8] sm:$0xf]
      %v1003 = vld [vmem:[%s999 + $0xc] sm:$0xf]
      %v1004 = vld [vmem:[%s999 + $0x10] sm:$0xf]
      %v1005 = vld [vmem:[%s999 + $0x14] sm:$0xf]
      %v1006 = vld [vmem:[%s999 + $0x18] sm:$0xf]
      %v1007 = vld [vmem:[%s999 + $0x1c] sm:$0xf]
      %v1016 = vunpack.c.l.b16 %v1000
      %v1017 = vunpack.c.l.b16 %v1001
      %v1018 = vunpack.c.l.b16 %v1002
      %v1019 = vunpack.c.l.b16 %v1003
      %v1020 = vunpack.c.l.b16 %v1004
      %v1021 = vunpack.c.l.b16 %v1005
      %v1022 = vunpack.c.l.b16 %v1006
      %v1023 = vunpack.c.l.b16 %v1007
      %v1024 = vpack.c.b16 %v1017, %v1016
      %v1025 = vpack.c.b16 %v1019, %v1018
      %v1026 = vpack.c.b16 %v1021, %v1020
      %v1027 = vpack.c.b16 %v1023, %v1022
      %v1033 = vsel %vm656, %v998, 0
      %1035 = vmatpush.bf16.msra.mxu0 0
      %1036 = vmatpush.bf16.msra.mxu0 0
      %1037 = vmatpush.bf16.msra.mxu0 0
      %1038 = vmatpush.bf16.msra.mxu0 0
      %1039 = vmatpush.bf16.msra.mxu0 %v1027
      %1040 = vmatpush.bf16.msra.mxu0 %v1026
      %1041 = vmatpush.bf16.msra.mxu0 %v1025
      %1042 = vmatpush.bf16.msra.mxu0 %v1024
      %1043 = vmatmul.bf16.gmra.mxu0 %v1033
      %v1044 = vpop.f32.mrf.mxu0
      %v1045 = vadd.f32 0.0, %v1044
      %v1046 = vpop.f32.mrf.mxu0
      %v1047 = vadd.f32 0.0, %v1046
      %1048 = vdwg.mxu0
      %v1049 = vadd.f32 %v996, %v1045
      %v1050 = vadd.f32 %v997, %v1047
      %v1051 = vpack.c.bf16 %v726, %v724
      %s1052 = scalar_lea.vmem %s5, 192
      %v1053 = vld [vmem:[%s1052] sm:$0xf]
      %v1054 = vld [vmem:[%s1052 + $0x4] sm:$0xf]
      %v1055 = vld [vmem:[%s1052 + $0x8] sm:$0xf]
      %v1056 = vld [vmem:[%s1052 + $0xc] sm:$0xf]
      %v1057 = vld [vmem:[%s1052 + $0x10] sm:$0xf]
      %v1058 = vld [vmem:[%s1052 + $0x14] sm:$0xf]
      %v1059 = vld [vmem:[%s1052 + $0x18] sm:$0xf]
      %v1060 = vld [vmem:[%s1052 + $0x1c] sm:$0xf]
      %v1069 = vunpack.c.l.b16 %v1053
      %v1070 = vunpack.c.l.b16 %v1054
      %v1071 = vunpack.c.l.b16 %v1055
      %v1072 = vunpack.c.l.b16 %v1056
      %v1073 = vunpack.c.l.b16 %v1057
      %v1074 = vunpack.c.l.b16 %v1058
      %v1075 = vunpack.c.l.b16 %v1059
      %v1076 = vunpack.c.l.b16 %v1060
      %v1077 = vpack.c.b16 %v1070, %v1069
      %v1078 = vpack.c.b16 %v1072, %v1071
      %v1079 = vpack.c.b16 %v1074, %v1073
      %v1080 = vpack.c.b16 %v1076, %v1075
      %v1086 = vsel %vm656, %v1051, 0
      %1088 = vmatpush.bf16.msra.mxu0 0
      %1089 = vmatpush.bf16.msra.mxu0 0
      %1090 = vmatpush.bf16.msra.mxu0 0
      %1091 = vmatpush.bf16.msra.mxu0 0
      %1092 = vmatpush.bf16.msra.mxu0 %v1080
      %1093 = vmatpush.bf16.msra.mxu0 %v1079
      %1094 = vmatpush.bf16.msra.mxu0 %v1078
      %1095 = vmatpush.bf16.msra.mxu0 %v1077
      %1096 = vmatmul.bf16.gmra.mxu0 %v1086
      %v1097 = vpop.f32.mrf.mxu0
      %v1098 = vadd.f32 0.0, %v1097
      %v1099 = vpop.f32.mrf.mxu0
      %v1100 = vadd.f32 0.0, %v1099
      %1101 = vdwg.mxu0
      %v1102 = vadd.f32 %v1049, %v1098
      %v1103 = vadd.f32 %v1050, %v1100
      %v1104 = vpack.c.bf16 %v731, %v729
      %s1105 = scalar_lea.vmem %s5, 224
      %v1106 = vld [vmem:[%s1105] sm:$0xf]
      %v1107 = vld [vmem:[%s1105 + $0x4] sm:$0xf]
      %v1108 = vld [vmem:[%s1105 + $0x8] sm:$0xf]
      %v1109 = vld [vmem:[%s1105 + $0xc] sm:$0xf]
      %v1110 = vld [vmem:[%s1105 + $0x10] sm:$0xf]
      %v1111 = vld [vmem:[%s1105 + $0x14] sm:$0xf]
      %v1112 = vld [vmem:[%s1105 + $0x18] sm:$0xf]
      %v1113 = vld [vmem:[%s1105 + $0x1c] sm:$0xf]
      %v1122 = vunpack.c.l.b16 %v1106
      %v1123 = vunpack.c.l.b16 %v1107
      %v1124 = vunpack.c.l.b16 %v1108
      %v1125 = vunpack.c.l.b16 %v1109
      %v1126 = vunpack.c.l.b16 %v1110
      %v1127 = vunpack.c.l.b16 %v1111
      %v1128 = vunpack.c.l.b16 %v1112
      %v1129 = vunpack.c.l.b16 %v1113
      %v1130 = vpack.c.b16 %v1123, %v1122
      %v1131 = vpack.c.b16 %v1125, %v1124
      %v1132 = vpack.c.b16 %v1127, %v1126
      %v1133 = vpack.c.b16 %v1129, %v1128
      %v1139 = vsel %vm656, %v1104, 0
      %1141 = vmatpush.bf16.msra.mxu0 0
      %1142 = vmatpush.bf16.msra.mxu0 0
      %1143 = vmatpush.bf16.msra.mxu0 0
      %1144 = vmatpush.bf16.msra.mxu0 0
      %1145 = vmatpush.bf16.msra.mxu0 %v1133
      %1146 = vmatpush.bf16.msra.mxu0 %v1132
      %1147 = vmatpush.bf16.msra.mxu0 %v1131
      %1148 = vmatpush.bf16.msra.mxu0 %v1130
      %1149 = vmatmul.bf16.gmra.mxu0 %v1139
      %v1150 = vpop.f32.mrf.mxu0
      %v1151 = vadd.f32 0.0, %v1150
      %v1152 = vpop.f32.mrf.mxu0
      %v1153 = vadd.f32 0.0, %v1152
      %1154 = vdwg.mxu0
      %v1155 = vadd.f32 %v1102, %v1151
      %v1156 = vadd.f32 %v1103, %v1153
      %v1157 = vpack.c.bf16 %v736, %v734
      %s1158 = scalar_lea.vmem %s5, 256
      %v1159 = vld [vmem:[%s1158] sm:$0xf]
      %v1160 = vld [vmem:[%s1158 + $0x4] sm:$0xf]
      %v1161 = vld [vmem:[%s1158 + $0x8] sm:$0xf]
      %v1162 = vld [vmem:[%s1158 + $0xc] sm:$0xf]
      %v1163 = vld [vmem:[%s1158 + $0x10] sm:$0xf]
      %v1164 = vld [vmem:[%s1158 + $0x14] sm:$0xf]
      %v1165 = vld [vmem:[%s1158 + $0x18] sm:$0xf]
      %v1166 = vld [vmem:[%s1158 + $0x1c] sm:$0xf]
      %v1175 = vunpack.c.l.b16 %v1159
      %v1176 = vunpack.c.l.b16 %v1160
      %v1177 = vunpack.c.l.b16 %v1161
      %v1178 = vunpack.c.l.b16 %v1162
      %v1179 = vunpack.c.l.b16 %v1163
      %v1180 = vunpack.c.l.b16 %v1164
      %v1181 = vunpack.c.l.b16 %v1165
      %v1182 = vunpack.c.l.b16 %v1166
      %v1183 = vpack.c.b16 %v1176, %v1175
      %v1184 = vpack.c.b16 %v1178, %v1177
      %v1185 = vpack.c.b16 %v1180, %v1179
      %v1186 = vpack.c.b16 %v1182, %v1181
      %v1192 = vsel %vm656, %v1157, 0
      %1194 = vmatpush.bf16.msra.mxu0 0
      %1195 = vmatpush.bf16.msra.mxu0 0
      %1196 = vmatpush.bf16.msra.mxu0 0
      %1197 = vmatpush.bf16.msra.mxu0 0
      %1198 = vmatpush.bf16.msra.mxu0 %v1186
      %1199 = vmatpush.bf16.msra.mxu0 %v1185
      %1200 = vmatpush.bf16.msra.mxu0 %v1184
      %1201 = vmatpush.bf16.msra.mxu0 %v1183
      %1202 = vmatmul.bf16.gmra.mxu0 %v1192
      %v1203 = vpop.f32.mrf.mxu0
      %v1204 = vadd.f32 0.0, %v1203
      %v1205 = vpop.f32.mrf.mxu0
      %v1206 = vadd.f32 0.0, %v1205
      %1207 = vdwg.mxu0
      %v1208 = vadd.f32 %v1155, %v1204
      %v1209 = vadd.f32 %v1156, %v1206
      %v1210 = vld [vmem:[%s6] sm:$0x1]
      %v1212 = vperm.slane %v1210, 0
      %v1214 = vmul.f32 %v1208, %v1212
      %v1215 = vmul.f32 %v1209, %v1212
      %v1216 = vld [vmem:[%s7] sm:$0x1]
      %v1218 = vperm.slane %v1216, 0
      %v1220 = vadd.f32 %v1214, %v1218
      %v1221 = vadd.f32 %v1215, %v1218
      %v1222 = vmax.f32 %v1220, 0.0
      %v1223 = vmax.f32 %v1221, 0.0
      %v1224 = vpack.c.bf16 %v1223, %v1222
      %v1225 = vld [vmem:[%s8] sm:$0xf]
      %v1226 = vld [vmem:[%s8 + $0x4] sm:$0xf]
      %v1227 = vld [vmem:[%s8 + $0x8] sm:$0xf]
      %v1228 = vld [vmem:[%s8 + $0xc] sm:$0xf]
      %v1229 = vld [vmem:[%s8 + $0x10] sm:$0x3]
      %v1235 = vunpack.c.l.b16 %v1225
      %v1236 = vunpack.c.l.b16 %v1226
      %v1237 = vunpack.c.l.b16 %v1227
      %v1238 = vunpack.c.l.b16 %v1228
      %v1239 = vunpack.c.l.b16 %v1229
      %v1240 = vpack.c.b16 %v1236, %v1235
      %v1241 = vpack.c.b16 %v1238, %v1237
      %v1242 = vpack.c.b16 %v1239, %v1239
      %vm1243 = vcmask 130048
      %v1245 = vsel %vm1243, %v1240, 0
      %v1248 = vsel %vm1243, %v1241, 0
      %v1251 = vsel %vm1243, %v1242, 0
      %1253 = vmatpush.bf16.msra.mxu0 0
      %1254 = vmatpush.bf16.msra.mxu0 0
      %1255 = vmatpush.bf16.msra.mxu0 0
      %1256 = vmatpush.bf16.msra.mxu0 0
      %1257 = vmatpush.bf16.msra.mxu0 0
      %1258 = vmatpush.bf16.msra.mxu0 0
      %1259 = vmatpush.bf16.msra.mxu0 0
      %1260 = vmatpush.bf16.msra.mxu0 %v1224
      %1261 = vmatmul.bf16.gmra.mxu0 %v1245
      %v1262 = vpop.f32.mrf.mxu0
      %v1263 = vadd.f32 0.0, %v1262
      %v1264 = vpop.f32.mrf.mxu0
      %v1265 = vadd.f32 0.0, %v1264
      %1266 = vmatmul.bf16.gmra.mxu0 %v1248
      %v1267 = vpop.f32.mrf.mxu0
      %v1268 = vadd.f32 0.0, %v1267
      %v1269 = vpop.f32.mrf.mxu0
      %v1270 = vadd.f32 0.0, %v1269
      %1271 = vmatmul.bf16.gmra.mxu0 %v1251
      %v1272 = vpop.f32.mrf.mxu0
      %v1273 = vadd.f32 0.0, %v1272
      %v1274 = vpop.f32.mrf.mxu0
      %1275 = vdwg.mxu0
      %v1276 = vpack.c.bf16 %v1263, %v1263
      %v1277 = vld [vmem:[%s9] sm:$0xff]
      %v1278 = vld [vmem:[%s9 + $0x8] sm:$0xff]
      %v1279 = vld [vmem:[%s9 + $0x10] sm:$0xff]
      %v1280 = vld [vmem:[%s9 + $0x18] sm:$0xff]
      %v1281 = vld [vmem:[%s9 + $0x20] sm:$0xff]
      %v1282 = vld [vmem:[%s9 + $0x28] sm:$0xff]
      %v1283 = vld [vmem:[%s9 + $0x30] sm:$0xff]
      %v1284 = vld [vmem:[%s9 + $0x38] sm:$0xff]
      %v1285 = vld [vmem:[%s9 + $0x40] sm:$0xff]
      %v1286 = vld [vmem:[%s9 + $0x48] sm:$0xff]
      %v1287 = vld [vmem:[%s9 + $0x50] sm:$0xff]
      %v1288 = vld [vmem:[%s9 + $0x58] sm:$0xff]
      %v1289 = vld [vmem:[%s9 + $0x60] sm:$0xff]
      %v1290 = vld [vmem:[%s9 + $0x68] sm:$0xff]
      %v1291 = vld [vmem:[%s9 + $0x70] sm:$0xff]
      %v1292 = vld [vmem:[%s9 + $0x78] sm:$0xff]
      %s1293 = scalar_lea.vmem %s9, 128
      %v1294 = vld [vmem:[%s1293] sm:$0xff]
      %v1295 = vld [vmem:[%s1293 + $0x8] sm:$0xff]
      %v1296 = vld [vmem:[%s1293 + $0x10] sm:$0xff]
      %v1297 = vld [vmem:[%s1293 + $0x18] sm:$0xff]
      %v1298 = vld [vmem:[%s1293 + $0x20] sm:$0xff]
      %v1299 = vld [vmem:[%s1293 + $0x28] sm:$0xff]
      %v1300 = vld [vmem:[%s1293 + $0x30] sm:$0xff]
      %v1301 = vld [vmem:[%s1293 + $0x38] sm:$0xff]
      %v1302 = vld [vmem:[%s1293 + $0x40] sm:$0xff]
      %v1303 = vld [vmem:[%s1293 + $0x48] sm:$0xff]
      %v1304 = vld [vmem:[%s1293 + $0x50] sm:$0xff]
      %v1305 = vld [vmem:[%s1293 + $0x58] sm:$0xff]
      %v1306 = vld [vmem:[%s1293 + $0x60] sm:$0xff]
      %v1307 = vld [vmem:[%s1293 + $0x68] sm:$0xff]
      %v1308 = vld [vmem:[%s1293 + $0x70] sm:$0xff]
      %v1309 = vld [vmem:[%s1293 + $0x78] sm:$0xff]
      %v1311 = vrot.slane %v1276, 2
      %v1329 = vunpack.c.l.b16 %v1294
      %v1330 = vunpack.c.h.b16 %v1294
      %v1331 = vunpack.c.l.b16 %v1295
      %v1332 = vunpack.c.h.b16 %v1295
      %v1333 = vunpack.c.l.b16 %v1296
      %v1334 = vunpack.c.h.b16 %v1296
      %v1335 = vunpack.c.l.b16 %v1297
      %v1336 = vunpack.c.h.b16 %v1297
      %v1337 = vunpack.c.l.b16 %v1298
      %v1338 = vunpack.c.h.b16 %v1298
      %v1339 = vunpack.c.l.b16 %v1299
      %v1340 = vunpack.c.h.b16 %v1299
      %v1341 = vunpack.c.l.b16 %v1300
      %v1342 = vunpack.c.h.b16 %v1300
      %v1343 = vunpack.c.l.b16 %v1301
      %v1344 = vunpack.c.h.b16 %v1301
      %v1345 = vunpack.c.l.b16 %v1302
      %v1346 = vunpack.c.h.b16 %v1302
      %v1347 = vunpack.c.l.b16 %v1303
      %v1348 = vunpack.c.h.b16 %v1303
      %v1349 = vunpack.c.l.b16 %v1304
      %v1350 = vunpack.c.h.b16 %v1304
      %v1351 = vunpack.c.l.b16 %v1305
      %v1352 = vunpack.c.h.b16 %v1305
      %v1353 = vunpack.c.l.b16 %v1306
      %v1354 = vunpack.c.h.b16 %v1306
      %v1355 = vunpack.c.l.b16 %v1307
      %v1356 = vunpack.c.h.b16 %v1307
      %v1357 = vunpack.c.l.b16 %v1308
      %v1358 = vunpack.c.h.b16 %v1308
      %v1359 = vunpack.c.l.b16 %v1309
      %v1360 = vunpack.c.h.b16 %v1309
      %v1361 = vpack.c.b16 %v1331, %v1329
      %v1362 = vpack.c.b16 %v1332, %v1330
      %v1363 = vpack.c.b16 %v1335, %v1333
      %v1364 = vpack.c.b16 %v1336, %v1334
      %v1365 = vpack.c.b16 %v1339, %v1337
      %v1366 = vpack.c.b16 %v1340, %v1338
      %v1367 = vpack.c.b16 %v1343, %v1341
      %v1368 = vpack.c.b16 %v1344, %v1342
      %v1369 = vpack.c.b16 %v1347, %v1345
      %v1370 = vpack.c.b16 %v1348, %v1346
      %v1371 = vpack.c.b16 %v1351, %v1349
      %v1372 = vpack.c.b16 %v1352, %v1350
      %v1373 = vpack.c.b16 %v1355, %v1353
      %v1374 = vpack.c.b16 %v1356, %v1354
      %v1375 = vpack.c.b16 %v1359, %v1357
      %v1376 = vpack.c.b16 %v1360, %v1358
      %1393 = vmatpush.bf16.msra.mxu0 %v1375
      %1394 = vmatpush.bf16.msra.mxu0 %v1373
      %1395 = vmatpush.bf16.msra.mxu0 %v1371
      %1396 = vmatpush.bf16.msra.mxu0 %v1369
      %1397 = vmatpush.bf16.msra.mxu0 %v1367
      %1398 = vmatpush.bf16.msra.mxu0 %v1365
      %1399 = vmatpush.bf16.msra.mxu0 %v1363
      %1400 = vmatpush.bf16.msra.mxu0 %v1361
      %1401 = vmatmul.bf16.gmra.mxu0 %v1311
      %v1402 = vpop.f32.mrf.mxu0
      %v1403 = vadd.f32 0.0, %v1402
      %v1404 = vpop.f32.mrf.mxu0
      %1405 = vdwg.mxu0
      %1406 = vmatpush.bf16.msra.mxu0 %v1376
      %1407 = vmatpush.bf16.msra.mxu0 %v1374
      %1408 = vmatpush.bf16.msra.mxu0 %v1372
      %1409 = vmatpush.bf16.msra.mxu0 %v1370
      %1410 = vmatpush.bf16.msra.mxu0 %v1368
      %1411 = vmatpush.bf16.msra.mxu0 %v1366
      %1412 = vmatpush.bf16.msra.mxu0 %v1364
      %1413 = vmatpush.bf16.msra.mxu0 %v1362
      %1414 = vmatmul.bf16.gmra.mxu0 %v1311
      %v1415 = vpop.f32.mrf.mxu0
      %v1416 = vadd.f32 0.0, %v1415
      %v1417 = vpop.f32.mrf.mxu0
      %1418 = vdwg.mxu0
      %v1435 = vunpack.c.l.b16 %v1277
      %v1436 = vunpack.c.h.b16 %v1277
      %v1437 = vunpack.c.l.b16 %v1278
      %v1438 = vunpack.c.h.b16 %v1278
      %v1439 = vunpack.c.l.b16 %v1279
      %v1440 = vunpack.c.h.b16 %v1279
      %v1441 = vunpack.c.l.b16 %v1280
      %v1442 = vunpack.c.h.b16 %v1280
      %v1443 = vunpack.c.l.b16 %v1281
      %v1444 = vunpack.c.h.b16 %v1281
      %v1445 = vunpack.c.l.b16 %v1282
      %v1446 = vunpack.c.h.b16 %v1282
      %v1447 = vunpack.c.l.b16 %v1283
      %v1448 = vunpack.c.h.b16 %v1283
      %v1449 = vunpack.c.l.b16 %v1284
      %v1450 = vunpack.c.h.b16 %v1284
      %v1451 = vunpack.c.l.b16 %v1285
      %v1452 = vunpack.c.h.b16 %v1285
      %v1453 = vunpack.c.l.b16 %v1286
      %v1454 = vunpack.c.h.b16 %v1286
      %v1455 = vunpack.c.l.b16 %v1287
      %v1456 = vunpack.c.h.b16 %v1287
      %v1457 = vunpack.c.l.b16 %v1288
      %v1458 = vunpack.c.h.b16 %v1288
      %v1459 = vunpack.c.l.b16 %v1289
      %v1460 = vunpack.c.h.b16 %v1289
      %v1461 = vunpack.c.l.b16 %v1290
      %v1462 = vunpack.c.h.b16 %v1290
      %v1463 = vunpack.c.l.b16 %v1291
      %v1464 = vunpack.c.h.b16 %v1291
      %v1465 = vunpack.c.l.b16 %v1292
      %v1466 = vunpack.c.h.b16 %v1292
      %v1467 = vpack.c.b16 %v1437, %v1435
      %v1468 = vpack.c.b16 %v1438, %v1436
      %v1469 = vpack.c.b16 %v1441, %v1439
      %v1470 = vpack.c.b16 %v1442, %v1440
      %v1471 = vpack.c.b16 %v1445, %v1443
      %v1472 = vpack.c.b16 %v1446, %v1444
      %v1473 = vpack.c.b16 %v1449, %v1447
      %v1474 = vpack.c.b16 %v1450, %v1448
      %v1475 = vpack.c.b16 %v1453, %v1451
      %v1476 = vpack.c.b16 %v1454, %v1452
      %v1477 = vpack.c.b16 %v1457, %v1455
      %v1478 = vpack.c.b16 %v1458, %v1456
      %v1479 = vpack.c.b16 %v1461, %v1459
      %v1480 = vpack.c.b16 %v1462, %v1460
      %v1481 = vpack.c.b16 %v1465, %v1463
      %v1482 = vpack.c.b16 %v1466, %v1464
      %1499 = vmatpush.bf16.msra.mxu0 %v1481
      %1500 = vmatpush.bf16.msra.mxu0 %v1479
      %1501 = vmatpush.bf16.msra.mxu0 %v1477
      %1502 = vmatpush.bf16.msra.mxu0 %v1475
      %1503 = vmatpush.bf16.msra.mxu0 %v1473
      %1504 = vmatpush.bf16.msra.mxu0 %v1471
      %1505 = vmatpush.bf16.msra.mxu0 %v1469
      %1506 = vmatpush.bf16.msra.mxu0 %v1467
      %1507 = vmatmul.bf16.gmra.mxu0 %v1276
      %v1508 = vpop.f32.mrf.mxu0
      %v1509 = vadd.f32 %v1403, %v1508
      %v1510 = vpop.f32.mrf.mxu0
      %1511 = vdwg.mxu0
      %1512 = vmatpush.bf16.msra.mxu0 %v1482
      %1513 = vmatpush.bf16.msra.mxu0 %v1480
      %1514 = vmatpush.bf16.msra.mxu0 %v1478
      %1515 = vmatpush.bf16.msra.mxu0 %v1476
      %1516 = vmatpush.bf16.msra.mxu0 %v1474
      %1517 = vmatpush.bf16.msra.mxu0 %v1472
      %1518 = vmatpush.bf16.msra.mxu0 %v1470
      %1519 = vmatpush.bf16.msra.mxu0 %v1468
      %1520 = vmatmul.bf16.gmra.mxu0 %v1276
      %v1521 = vpop.f32.mrf.mxu0
      %v1522 = vadd.f32 %v1416, %v1521
      %v1523 = vpop.f32.mrf.mxu0
      %1524 = vdwg.mxu0
      %v1525 = vpack.c.bf16 %v1265, %v1265
      %s1526 = scalar_lea.vmem %s9, 256
      %v1527 = vld [vmem:[%s1526] sm:$0xff]
      %v1528 = vld [vmem:[%s1526 + $0x8] sm:$0xff]
      %v1529 = vld [vmem:[%s1526 + $0x10] sm:$0xff]
      %v1530 = vld [vmem:[%s1526 + $0x18] sm:$0xff]
      %v1531 = vld [vmem:[%s1526 + $0x20] sm:$0xff]
      %v1532 = vld [vmem:[%s1526 + $0x28] sm:$0xff]
      %v1533 = vld [vmem:[%s1526 + $0x30] sm:$0xff]
      %v1534 = vld [vmem:[%s1526 + $0x38] sm:$0xff]
      %v1535 = vld [vmem:[%s1526 + $0x40] sm:$0xff]
      %v1536 = vld [vmem:[%s1526 + $0x48] sm:$0xff]
      %v1537 = vld [vmem:[%s1526 + $0x50] sm:$0xff]
      %v1538 = vld [vmem:[%s1526 + $0x58] sm:$0xff]
      %v1539 = vld [vmem:[%s1526 + $0x60] sm:$0xff]
      %v1540 = vld [vmem:[%s1526 + $0x68] sm:$0xff]
      %v1541 = vld [vmem:[%s1526 + $0x70] sm:$0xff]
      %v1542 = vld [vmem:[%s1526 + $0x78] sm:$0xff]
      %v1559 = vunpack.c.l.b16 %v1527
      %v1560 = vunpack.c.h.b16 %v1527
      %v1561 = vunpack.c.l.b16 %v1528
      %v1562 = vunpack.c.h.b16 %v1528
      %v1563 = vunpack.c.l.b16 %v1529
      %v1564 = vunpack.c.h.b16 %v1529
      %v1565 = vunpack.c.l.b16 %v1530
      %v1566 = vunpack.c.h.b16 %v1530
      %v1567 = vunpack.c.l.b16 %v1531
      %v1568 = vunpack.c.h.b16 %v1531
      %v1569 = vunpack.c.l.b16 %v1532
      %v1570 = vunpack.c.h.b16 %v1532
      %v1571 = vunpack.c.l.b16 %v1533
      %v1572 = vunpack.c.h.b16 %v1533
      %v1573 = vunpack.c.l.b16 %v1534
      %v1574 = vunpack.c.h.b16 %v1534
      %v1575 = vunpack.c.l.b16 %v1535
      %v1576 = vunpack.c.h.b16 %v1535
      %v1577 = vunpack.c.l.b16 %v1536
      %v1578 = vunpack.c.h.b16 %v1536
      %v1579 = vunpack.c.l.b16 %v1537
      %v1580 = vunpack.c.h.b16 %v1537
      %v1581 = vunpack.c.l.b16 %v1538
      %v1582 = vunpack.c.h.b16 %v1538
      %v1583 = vunpack.c.l.b16 %v1539
      %v1584 = vunpack.c.h.b16 %v1539
      %v1585 = vunpack.c.l.b16 %v1540
      %v1586 = vunpack.c.h.b16 %v1540
      %v1587 = vunpack.c.l.b16 %v1541
      %v1588 = vunpack.c.h.b16 %v1541
      %v1589 = vunpack.c.l.b16 %v1542
      %v1590 = vunpack.c.h.b16 %v1542
      %v1591 = vpack.c.b16 %v1561, %v1559
      %v1592 = vpack.c.b16 %v1562, %v1560
      %v1593 = vpack.c.b16 %v1565, %v1563
      %v1594 = vpack.c.b16 %v1566, %v1564
      %v1595 = vpack.c.b16 %v1569, %v1567
      %v1596 = vpack.c.b16 %v1570, %v1568
      %v1597 = vpack.c.b16 %v1573, %v1571
      %v1598 = vpack.c.b16 %v1574, %v1572
      %v1599 = vpack.c.b16 %v1577, %v1575
      %v1600 = vpack.c.b16 %v1578, %v1576
      %v1601 = vpack.c.b16 %v1581, %v1579
      %v1602 = vpack.c.b16 %v1582, %v1580
      %v1603 = vpack.c.b16 %v1585, %v1583
      %v1604 = vpack.c.b16 %v1586, %v1584
      %v1605 = vpack.c.b16 %v1589, %v1587
      %v1606 = vpack.c.b16 %v1590, %v1588
      %1623 = vmatpush.bf16.msra.mxu0 %v1605
      %1624 = vmatpush.bf16.msra.mxu0 %v1603
      %1625 = vmatpush.bf16.msra.mxu0 %v1601
      %1626 = vmatpush.bf16.msra.mxu0 %v1599
      %1627 = vmatpush.bf16.msra.mxu0 %v1597
      %1628 = vmatpush.bf16.msra.mxu0 %v1595
      %1629 = vmatpush.bf16.msra.mxu0 %v1593
      %1630 = vmatpush.bf16.msra.mxu0 %v1591
      %1631 = vmatmul.bf16.gmra.mxu0 %v1525
      %v1632 = vpop.f32.mrf.mxu0
      %v1633 = vadd.f32 0.0, %v1632
      %v1634 = vpop.f32.mrf.mxu0
      %1635 = vdwg.mxu0
      %1636 = vmatpush.bf16.msra.mxu0 %v1606
      %1637 = vmatpush.bf16.msra.mxu0 %v1604
      %1638 = vmatpush.bf16.msra.mxu0 %v1602
      %1639 = vmatpush.bf16.msra.mxu0 %v1600
      %1640 = vmatpush.bf16.msra.mxu0 %v1598
      %1641 = vmatpush.bf16.msra.mxu0 %v1596
      %1642 = vmatpush.bf16.msra.mxu0 %v1594
      %1643 = vmatpush.bf16.msra.mxu0 %v1592
      %1644 = vmatmul.bf16.gmra.mxu0 %v1525
      %v1645 = vpop.f32.mrf.mxu0
      %v1646 = vadd.f32 0.0, %v1645
      %v1647 = vpop.f32.mrf.mxu0
      %1648 = vdwg.mxu0
      %v1649 = vadd.f32 %v1509, %v1633
      %v1650 = vadd.f32 %v1522, %v1646
      %s1651 = scalar_lea.vmem %s9, 384
      %v1652 = vld [vmem:[%s1651] sm:$0xff]
      %v1653 = vld [vmem:[%s1651 + $0x8] sm:$0xff]
      %v1654 = vld [vmem:[%s1651 + $0x10] sm:$0xff]
      %v1655 = vld [vmem:[%s1651 + $0x18] sm:$0xff]
      %v1656 = vld [vmem:[%s1651 + $0x20] sm:$0xff]
      %v1657 = vld [vmem:[%s1651 + $0x28] sm:$0xff]
      %v1658 = vld [vmem:[%s1651 + $0x30] sm:$0xff]
      %v1659 = vld [vmem:[%s1651 + $0x38] sm:$0xff]
      %v1660 = vld [vmem:[%s1651 + $0x40] sm:$0xff]
      %v1661 = vld [vmem:[%s1651 + $0x48] sm:$0xff]
      %v1662 = vld [vmem:[%s1651 + $0x50] sm:$0xff]
      %v1663 = vld [vmem:[%s1651 + $0x58] sm:$0xff]
      %v1664 = vld [vmem:[%s1651 + $0x60] sm:$0xff]
      %v1665 = vld [vmem:[%s1651 + $0x68] sm:$0xff]
      %v1666 = vld [vmem:[%s1651 + $0x70] sm:$0xff]
      %v1667 = vld [vmem:[%s1651 + $0x78] sm:$0xff]
      %v1669 = vrot.slane %v1525, 2
      %v1687 = vunpack.c.l.b16 %v1652
      %v1688 = vunpack.c.h.b16 %v1652
      %v1689 = vunpack.c.l.b16 %v1653
      %v1690 = vunpack.c.h.b16 %v1653
      %v1691 = vunpack.c.l.b16 %v1654
      %v1692 = vunpack.c.h.b16 %v1654
      %v1693 = vunpack.c.l.b16 %v1655
      %v1694 = vunpack.c.h.b16 %v1655
      %v1695 = vunpack.c.l.b16 %v1656
      %v1696 = vunpack.c.h.b16 %v1656
      %v1697 = vunpack.c.l.b16 %v1657
      %v1698 = vunpack.c.h.b16 %v1657
      %v1699 = vunpack.c.l.b16 %v1658
      %v1700 = vunpack.c.h.b16 %v1658
      %v1701 = vunpack.c.l.b16 %v1659
      %v1702 = vunpack.c.h.b16 %v1659
      %v1703 = vunpack.c.l.b16 %v1660
      %v1704 = vunpack.c.h.b16 %v1660
      %v1705 = vunpack.c.l.b16 %v1661
      %v1706 = vunpack.c.h.b16 %v1661
      %v1707 = vunpack.c.l.b16 %v1662
      %v1708 = vunpack.c.h.b16 %v1662
      %v1709 = vunpack.c.l.b16 %v1663
      %v1710 = vunpack.c.h.b16 %v1663
      %v1711 = vunpack.c.l.b16 %v1664
      %v1712 = vunpack.c.h.b16 %v1664
      %v1713 = vunpack.c.l.b16 %v1665
      %v1714 = vunpack.c.h.b16 %v1665
      %v1715 = vunpack.c.l.b16 %v1666
      %v1716 = vunpack.c.h.b16 %v1666
      %v1717 = vunpack.c.l.b16 %v1667
      %v1718 = vunpack.c.h.b16 %v1667
      %v1719 = vpack.c.b16 %v1689, %v1687
      %v1720 = vpack.c.b16 %v1690, %v1688
      %v1721 = vpack.c.b16 %v1693, %v1691
      %v1722 = vpack.c.b16 %v1694, %v1692
      %v1723 = vpack.c.b16 %v1697, %v1695
      %v1724 = vpack.c.b16 %v1698, %v1696
      %v1725 = vpack.c.b16 %v1701, %v1699
      %v1726 = vpack.c.b16 %v1702, %v1700
      %v1727 = vpack.c.b16 %v1705, %v1703
      %v1728 = vpack.c.b16 %v1706, %v1704
      %v1729 = vpack.c.b16 %v1709, %v1707
      %v1730 = vpack.c.b16 %v1710, %v1708
      %v1731 = vpack.c.b16 %v1713, %v1711
      %v1732 = vpack.c.b16 %v1714, %v1712
      %v1733 = vpack.c.b16 %v1717, %v1715
      %v1734 = vpack.c.b16 %v1718, %v1716
      %1751 = vmatpush.bf16.msra.mxu0 %v1733
      %1752 = vmatpush.bf16.msra.mxu0 %v1731
      %1753 = vmatpush.bf16.msra.mxu0 %v1729
      %1754 = vmatpush.bf16.msra.mxu0 %v1727
      %1755 = vmatpush.bf16.msra.mxu0 %v1725
      %1756 = vmatpush.bf16.msra.mxu0 %v1723
      %1757 = vmatpush.bf16.msra.mxu0 %v1721
      %1758 = vmatpush.bf16.msra.mxu0 %v1719
      %1759 = vmatmul.bf16.gmra.mxu0 %v1669
      %v1760 = vpop.f32.mrf.mxu0
      %v1761 = vadd.f32 0.0, %v1760
      %v1762 = vpop.f32.mrf.mxu0
      %1763 = vdwg.mxu0
      %1764 = vmatpush.bf16.msra.mxu0 %v1734
      %1765 = vmatpush.bf16.msra.mxu0 %v1732
      %1766 = vmatpush.bf16.msra.mxu0 %v1730
      %1767 = vmatpush.bf16.msra.mxu0 %v1728
      %1768 = vmatpush.bf16.msra.mxu0 %v1726
      %1769 = vmatpush.bf16.msra.mxu0 %v1724
      %1770 = vmatpush.bf16.msra.mxu0 %v1722
      %1771 = vmatpush.bf16.msra.mxu0 %v1720
      %1772 = vmatmul.bf16.gmra.mxu0 %v1669
      %v1773 = vpop.f32.mrf.mxu0
      %v1774 = vadd.f32 0.0, %v1773
      %v1775 = vpop.f32.mrf.mxu0
      %1776 = vdwg.mxu0
      %v1777 = vadd.f32 %v1649, %v1761
      %v1778 = vadd.f32 %v1650, %v1774
      %v1779 = vpack.c.bf16 %v1268, %v1268
      %s1780 = scalar_lea.vmem %s9, 512
      %v1781 = vld [vmem:[%s1780] sm:$0xff]
      %v1782 = vld [vmem:[%s1780 + $0x8] sm:$0xff]
      %v1783 = vld [vmem:[%s1780 + $0x10] sm:$0xff]
      %v1784 = vld [vmem:[%s1780 + $0x18] sm:$0xff]
      %v1785 = vld [vmem:[%s1780 + $0x20] sm:$0xff]
      %v1786 = vld [vmem:[%s1780 + $0x28] sm:$0xff]
      %v1787 = vld [vmem:[%s1780 + $0x30] sm:$0xff]
      %v1788 = vld [vmem:[%s1780 + $0x38] sm:$0xff]
      %v1789 = vld [vmem:[%s1780 + $0x40] sm:$0xff]
      %v1790 = vld [vmem:[%s1780 + $0x48] sm:$0xff]
      %v1791 = vld [vmem:[%s1780 + $0x50] sm:$0xff]
      %v1792 = vld [vmem:[%s1780 + $0x58] sm:$0xff]
      %v1793 = vld [vmem:[%s1780 + $0x60] sm:$0xff]
      %v1794 = vld [vmem:[%s1780 + $0x68] sm:$0xff]
      %v1795 = vld [vmem:[%s1780 + $0x70] sm:$0xff]
      %v1796 = vld [vmem:[%s1780 + $0x78] sm:$0xff]
      %v1813 = vunpack.c.l.b16 %v1781
      %v1814 = vunpack.c.h.b16 %v1781
      %v1815 = vunpack.c.l.b16 %v1782
      %v1816 = vunpack.c.h.b16 %v1782
      %v1817 = vunpack.c.l.b16 %v1783
      %v1818 = vunpack.c.h.b16 %v1783
      %v1819 = vunpack.c.l.b16 %v1784
      %v1820 = vunpack.c.h.b16 %v1784
      %v1821 = vunpack.c.l.b16 %v1785
      %v1822 = vunpack.c.h.b16 %v1785
      %v1823 = vunpack.c.l.b16 %v1786
      %v1824 = vunpack.c.h.b16 %v1786
      %v1825 = vunpack.c.l.b16 %v1787
      %v1826 = vunpack.c.h.b16 %v1787
      %v1827 = vunpack.c.l.b16 %v1788
      %v1828 = vunpack.c.h.b16 %v1788
      %v1829 = vunpack.c.l.b16 %v1789
      %v1830 = vunpack.c.h.b16 %v1789
      %v1831 = vunpack.c.l.b16 %v1790
      %v1832 = vunpack.c.h.b16 %v1790
      %v1833 = vunpack.c.l.b16 %v1791
      %v1834 = vunpack.c.h.b16 %v1791
      %v1835 = vunpack.c.l.b16 %v1792
      %v1836 = vunpack.c.h.b16 %v1792
      %v1837 = vunpack.c.l.b16 %v1793
      %v1838 = vunpack.c.h.b16 %v1793
      %v1839 = vunpack.c.l.b16 %v1794
      %v1840 = vunpack.c.h.b16 %v1794
      %v1841 = vunpack.c.l.b16 %v1795
      %v1842 = vunpack.c.h.b16 %v1795
      %v1843 = vunpack.c.l.b16 %v1796
      %v1844 = vunpack.c.h.b16 %v1796
      %v1845 = vpack.c.b16 %v1815, %v1813
      %v1846 = vpack.c.b16 %v1816, %v1814
      %v1847 = vpack.c.b16 %v1819, %v1817
      %v1848 = vpack.c.b16 %v1820, %v1818
      %v1849 = vpack.c.b16 %v1823, %v1821
      %v1850 = vpack.c.b16 %v1824, %v1822
      %v1851 = vpack.c.b16 %v1827, %v1825
      %v1852 = vpack.c.b16 %v1828, %v1826
      %v1853 = vpack.c.b16 %v1831, %v1829
      %v1854 = vpack.c.b16 %v1832, %v1830
      %v1855 = vpack.c.b16 %v1835, %v1833
      %v1856 = vpack.c.b16 %v1836, %v1834
      %v1857 = vpack.c.b16 %v1839, %v1837
      %v1858 = vpack.c.b16 %v1840, %v1838
      %v1859 = vpack.c.b16 %v1843, %v1841
      %v1860 = vpack.c.b16 %v1844, %v1842
      %1877 = vmatpush.bf16.msra.mxu0 %v1859
      %1878 = vmatpush.bf16.msra.mxu0 %v1857
      %1879 = vmatpush.bf16.msra.mxu0 %v1855
      %1880 = vmatpush.bf16.msra.mxu0 %v1853
      %1881 = vmatpush.bf16.msra.mxu0 %v1851
      %1882 = vmatpush.bf16.msra.mxu0 %v1849
      %1883 = vmatpush.bf16.msra.mxu0 %v1847
      %1884 = vmatpush.bf16.msra.mxu0 %v1845
      %1885 = vmatmul.bf16.gmra.mxu0 %v1779
      %v1886 = vpop.f32.mrf.mxu0
      %v1887 = vadd.f32 0.0, %v1886
      %v1888 = vpop.f32.mrf.mxu0
      %1889 = vdwg.mxu0
      %1890 = vmatpush.bf16.msra.mxu0 %v1860
      %1891 = vmatpush.bf16.msra.mxu0 %v1858
      %1892 = vmatpush.bf16.msra.mxu0 %v1856
      %1893 = vmatpush.bf16.msra.mxu0 %v1854
      %1894 = vmatpush.bf16.msra.mxu0 %v1852
      %1895 = vmatpush.bf16.msra.mxu0 %v1850
      %1896 = vmatpush.bf16.msra.mxu0 %v1848
      %1897 = vmatpush.bf16.msra.mxu0 %v1846
      %1898 = vmatmul.bf16.gmra.mxu0 %v1779
      %v1899 = vpop.f32.mrf.mxu0
      %v1900 = vadd.f32 0.0, %v1899
      %v1901 = vpop.f32.mrf.mxu0
      %1902 = vdwg.mxu0
      %v1903 = vadd.f32 %v1777, %v1887
      %v1904 = vadd.f32 %v1778, %v1900
      %s1905 = scalar_lea.vmem %s9, 640
      %v1906 = vld [vmem:[%s1905] sm:$0xff]
      %v1907 = vld [vmem:[%s1905 + $0x8] sm:$0xff]
      %v1908 = vld [vmem:[%s1905 + $0x10] sm:$0xff]
      %v1909 = vld [vmem:[%s1905 + $0x18] sm:$0xff]
      %v1910 = vld [vmem:[%s1905 + $0x20] sm:$0xff]
      %v1911 = vld [vmem:[%s1905 + $0x28] sm:$0xff]
      %v1912 = vld [vmem:[%s1905 + $0x30] sm:$0xff]
      %v1913 = vld [vmem:[%s1905 + $0x38] sm:$0xff]
      %v1914 = vld [vmem:[%s1905 + $0x40] sm:$0xff]
      %v1915 = vld [vmem:[%s1905 + $0x48] sm:$0xff]
      %v1916 = vld [vmem:[%s1905 + $0x50] sm:$0xff]
      %v1917 = vld [vmem:[%s1905 + $0x58] sm:$0xff]
      %v1918 = vld [vmem:[%s1905 + $0x60] sm:$0xff]
      %v1919 = vld [vmem:[%s1905 + $0x68] sm:$0xff]
      %v1920 = vld [vmem:[%s1905 + $0x70] sm:$0xff]
      %v1921 = vld [vmem:[%s1905 + $0x78] sm:$0xff]
      %v1923 = vrot.slane %v1779, 2
      %v1941 = vunpack.c.l.b16 %v1906
      %v1942 = vunpack.c.h.b16 %v1906
      %v1943 = vunpack.c.l.b16 %v1907
      %v1944 = vunpack.c.h.b16 %v1907
      %v1945 = vunpack.c.l.b16 %v1908
      %v1946 = vunpack.c.h.b16 %v1908
      %v1947 = vunpack.c.l.b16 %v1909
      %v1948 = vunpack.c.h.b16 %v1909
      %v1949 = vunpack.c.l.b16 %v1910
      %v1950 = vunpack.c.h.b16 %v1910
      %v1951 = vunpack.c.l.b16 %v1911
      %v1952 = vunpack.c.h.b16 %v1911
      %v1953 = vunpack.c.l.b16 %v1912
      %v1954 = vunpack.c.h.b16 %v1912
      %v1955 = vunpack.c.l.b16 %v1913
      %v1956 = vunpack.c.h.b16 %v1913
      %v1957 = vunpack.c.l.b16 %v1914
      %v1958 = vunpack.c.h.b16 %v1914
      %v1959 = vunpack.c.l.b16 %v1915
      %v1960 = vunpack.c.h.b16 %v1915
      %v1961 = vunpack.c.l.b16 %v1916
      %v1962 = vunpack.c.h.b16 %v1916
      %v1963 = vunpack.c.l.b16 %v1917
      %v1964 = vunpack.c.h.b16 %v1917
      %v1965 = vunpack.c.l.b16 %v1918
      %v1966 = vunpack.c.h.b16 %v1918
      %v1967 = vunpack.c.l.b16 %v1919
      %v1968 = vunpack.c.h.b16 %v1919
      %v1969 = vunpack.c.l.b16 %v1920
      %v1970 = vunpack.c.h.b16 %v1920
      %v1971 = vunpack.c.l.b16 %v1921
      %v1972 = vunpack.c.h.b16 %v1921
      %v1973 = vpack.c.b16 %v1943, %v1941
      %v1974 = vpack.c.b16 %v1944, %v1942
      %v1975 = vpack.c.b16 %v1947, %v1945
      %v1976 = vpack.c.b16 %v1948, %v1946
      %v1977 = vpack.c.b16 %v1951, %v1949
      %v1978 = vpack.c.b16 %v1952, %v1950
      %v1979 = vpack.c.b16 %v1955, %v1953
      %v1980 = vpack.c.b16 %v1956, %v1954
      %v1981 = vpack.c.b16 %v1959, %v1957
      %v1982 = vpack.c.b16 %v1960, %v1958
      %v1983 = vpack.c.b16 %v1963, %v1961
      %v1984 = vpack.c.b16 %v1964, %v1962
      %v1985 = vpack.c.b16 %v1967, %v1965
      %v1986 = vpack.c.b16 %v1968, %v1966
      %v1987 = vpack.c.b16 %v1971, %v1969
      %v1988 = vpack.c.b16 %v1972, %v1970
      %2005 = vmatpush.bf16.msra.mxu0 %v1987
      %2006 = vmatpush.bf16.msra.mxu0 %v1985
      %2007 = vmatpush.bf16.msra.mxu0 %v1983
      %2008 = vmatpush.bf16.msra.mxu0 %v1981
      %2009 = vmatpush.bf16.msra.mxu0 %v1979
      %2010 = vmatpush.bf16.msra.mxu0 %v1977
      %2011 = vmatpush.bf16.msra.mxu0 %v1975
      %2012 = vmatpush.bf16.msra.mxu0 %v1973
      %2013 = vmatmul.bf16.gmra.mxu0 %v1923
      %v2014 = vpop.f32.mrf.mxu0
      %v2015 = vadd.f32 0.0, %v2014
      %v2016 = vpop.f32.mrf.mxu0
      %2017 = vdwg.mxu0
      %2018 = vmatpush.bf16.msra.mxu0 %v1988
      %2019 = vmatpush.bf16.msra.mxu0 %v1986
      %2020 = vmatpush.bf16.msra.mxu0 %v1984
      %2021 = vmatpush.bf16.msra.mxu0 %v1982
      %2022 = vmatpush.bf16.msra.mxu0 %v1980
      %2023 = vmatpush.bf16.msra.mxu0 %v1978
      %2024 = vmatpush.bf16.msra.mxu0 %v1976
      %2025 = vmatpush.bf16.msra.mxu0 %v1974
      %2026 = vmatmul.bf16.gmra.mxu0 %v1923
      %v2027 = vpop.f32.mrf.mxu0
      %v2028 = vadd.f32 0.0, %v2027
      %v2029 = vpop.f32.mrf.mxu0
      %2030 = vdwg.mxu0
      %v2031 = vadd.f32 %v1903, %v2015
      %v2032 = vadd.f32 %v1904, %v2028
      %v2033 = vpack.c.bf16 %v1270, %v1270
      %s2034 = scalar_lea.vmem %s9, 768
      %v2035 = vld [vmem:[%s2034] sm:$0xff]
      %v2036 = vld [vmem:[%s2034 + $0x8] sm:$0xff]
      %v2037 = vld [vmem:[%s2034 + $0x10] sm:$0xff]
      %v2038 = vld [vmem:[%s2034 + $0x18] sm:$0xff]
      %v2039 = vld [vmem:[%s2034 + $0x20] sm:$0xff]
      %v2040 = vld [vmem:[%s2034 + $0x28] sm:$0xff]
      %v2041 = vld [vmem:[%s2034 + $0x30] sm:$0xff]
      %v2042 = vld [vmem:[%s2034 + $0x38] sm:$0xff]
      %v2043 = vld [vmem:[%s2034 + $0x40] sm:$0xff]
      %v2044 = vld [vmem:[%s2034 + $0x48] sm:$0xff]
      %v2045 = vld [vmem:[%s2034 + $0x50] sm:$0xff]
      %v2046 = vld [vmem:[%s2034 + $0x58] sm:$0xff]
      %v2047 = vld [vmem:[%s2034 + $0x60] sm:$0xff]
      %v2048 = vld [vmem:[%s2034 + $0x68] sm:$0xff]
      %v2049 = vld [vmem:[%s2034 + $0x70] sm:$0xff]
      %v2050 = vld [vmem:[%s2034 + $0x78] sm:$0xff]
      %v2067 = vunpack.c.l.b16 %v2035
      %v2068 = vunpack.c.h.b16 %v2035
      %v2069 = vunpack.c.l.b16 %v2036
      %v2070 = vunpack.c.h.b16 %v2036
      %v2071 = vunpack.c.l.b16 %v2037
      %v2072 = vunpack.c.h.b16 %v2037
      %v2073 = vunpack.c.l.b16 %v2038
      %v2074 = vunpack.c.h.b16 %v2038
      %v2075 = vunpack.c.l.b16 %v2039
      %v2076 = vunpack.c.h.b16 %v2039
      %v2077 = vunpack.c.l.b16 %v2040
      %v2078 = vunpack.c.h.b16 %v2040
      %v2079 = vunpack.c.l.b16 %v2041
      %v2080 = vunpack.c.h.b16 %v2041
      %v2081 = vunpack.c.l.b16 %v2042
      %v2082 = vunpack.c.h.b16 %v2042
      %v2083 = vunpack.c.l.b16 %v2043
      %v2084 = vunpack.c.h.b16 %v2043
      %v2085 = vunpack.c.l.b16 %v2044
      %v2086 = vunpack.c.h.b16 %v2044
      %v2087 = vunpack.c.l.b16 %v2045
      %v2088 = vunpack.c.h.b16 %v2045
      %v2089 = vunpack.c.l.b16 %v2046
      %v2090 = vunpack.c.h.b16 %v2046
      %v2091 = vunpack.c.l.b16 %v2047
      %v2092 = vunpack.c.h.b16 %v2047
      %v2093 = vunpack.c.l.b16 %v2048
      %v2094 = vunpack.c.h.b16 %v2048
      %v2095 = vunpack.c.l.b16 %v2049
      %v2096 = vunpack.c.h.b16 %v2049
      %v2097 = vunpack.c.l.b16 %v2050
      %v2098 = vunpack.c.h.b16 %v2050
      %v2099 = vpack.c.b16 %v2069, %v2067
      %v2100 = vpack.c.b16 %v2070, %v2068
      %v2101 = vpack.c.b16 %v2073, %v2071
      %v2102 = vpack.c.b16 %v2074, %v2072
      %v2103 = vpack.c.b16 %v2077, %v2075
      %v2104 = vpack.c.b16 %v2078, %v2076
      %v2105 = vpack.c.b16 %v2081, %v2079
      %v2106 = vpack.c.b16 %v2082, %v2080
      %v2107 = vpack.c.b16 %v2085, %v2083
      %v2108 = vpack.c.b16 %v2086, %v2084
      %v2109 = vpack.c.b16 %v2089, %v2087
      %v2110 = vpack.c.b16 %v2090, %v2088
      %v2111 = vpack.c.b16 %v2093, %v2091
      %v2112 = vpack.c.b16 %v2094, %v2092
      %v2113 = vpack.c.b16 %v2097, %v2095
      %v2114 = vpack.c.b16 %v2098, %v2096
      %2131 = vmatpush.bf16.msra.mxu0 %v2113
      %2132 = vmatpush.bf16.msra.mxu0 %v2111
      %2133 = vmatpush.bf16.msra.mxu0 %v2109
      %2134 = vmatpush.bf16.msra.mxu0 %v2107
      %2135 = vmatpush.bf16.msra.mxu0 %v2105
      %2136 = vmatpush.bf16.msra.mxu0 %v2103
      %2137 = vmatpush.bf16.msra.mxu0 %v2101
      %2138 = vmatpush.bf16.msra.mxu0 %v2099
      %2139 = vmatmul.bf16.gmra.mxu0 %v2033
      %v2140 = vpop.f32.mrf.mxu0
      %v2141 = vadd.f32 0.0, %v2140
      %v2142 = vpop.f32.mrf.mxu0
      %2143 = vdwg.mxu0
      %2144 = vmatpush.bf16.msra.mxu0 %v2114
      %2145 = vmatpush.bf16.msra.mxu0 %v2112
      %2146 = vmatpush.bf16.msra.mxu0 %v2110
      %2147 = vmatpush.bf16.msra.mxu0 %v2108
      %2148 = vmatpush.bf16.msra.mxu0 %v2106
      %2149 = vmatpush.bf16.msra.mxu0 %v2104
      %2150 = vmatpush.bf16.msra.mxu0 %v2102
      %2151 = vmatpush.bf16.msra.mxu0 %v2100
      %2152 = vmatmul.bf16.gmra.mxu0 %v2033
      %v2153 = vpop.f32.mrf.mxu0
      %v2154 = vadd.f32 0.0, %v2153
      %v2155 = vpop.f32.mrf.mxu0
      %2156 = vdwg.mxu0
      %v2157 = vadd.f32 %v2031, %v2141
      %v2158 = vadd.f32 %v2032, %v2154
      %s2159 = scalar_lea.vmem %s9, 896
      %v2160 = vld [vmem:[%s2159] sm:$0xff]
      %v2161 = vld [vmem:[%s2159 + $0x8] sm:$0xff]
      %v2162 = vld [vmem:[%s2159 + $0x10] sm:$0xff]
      %v2163 = vld [vmem:[%s2159 + $0x18] sm:$0xff]
      %v2164 = vld [vmem:[%s2159 + $0x20] sm:$0xff]
      %v2165 = vld [vmem:[%s2159 + $0x28] sm:$0xff]
      %v2166 = vld [vmem:[%s2159 + $0x30] sm:$0xff]
      %v2167 = vld [vmem:[%s2159 + $0x38] sm:$0xff]
      %v2168 = vld [vmem:[%s2159 + $0x40] sm:$0xff]
      %v2169 = vld [vmem:[%s2159 + $0x48] sm:$0xff]
      %v2170 = vld [vmem:[%s2159 + $0x50] sm:$0xff]
      %v2171 = vld [vmem:[%s2159 + $0x58] sm:$0xff]
      %v2172 = vld [vmem:[%s2159 + $0x60] sm:$0xff]
      %v2173 = vld [vmem:[%s2159 + $0x68] sm:$0xff]
      %v2174 = vld [vmem:[%s2159 + $0x70] sm:$0xff]
      %v2175 = vld [vmem:[%s2159 + $0x78] sm:$0xff]
      %v2177 = vrot.slane %v2033, 2
      %v2195 = vunpack.c.l.b16 %v2160
      %v2196 = vunpack.c.h.b16 %v2160
      %v2197 = vunpack.c.l.b16 %v2161
      %v2198 = vunpack.c.h.b16 %v2161
      %v2199 = vunpack.c.l.b16 %v2162
      %v2200 = vunpack.c.h.b16 %v2162
      %v2201 = vunpack.c.l.b16 %v2163
      %v2202 = vunpack.c.h.b16 %v2163
      %v2203 = vunpack.c.l.b16 %v2164
      %v2204 = vunpack.c.h.b16 %v2164
      %v2205 = vunpack.c.l.b16 %v2165
      %v2206 = vunpack.c.h.b16 %v2165
      %v2207 = vunpack.c.l.b16 %v2166
      %v2208 = vunpack.c.h.b16 %v2166
      %v2209 = vunpack.c.l.b16 %v2167
      %v2210 = vunpack.c.h.b16 %v2167
      %v2211 = vunpack.c.l.b16 %v2168
      %v2212 = vunpack.c.h.b16 %v2168
      %v2213 = vunpack.c.l.b16 %v2169
      %v2214 = vunpack.c.h.b16 %v2169
      %v2215 = vunpack.c.l.b16 %v2170
      %v2216 = vunpack.c.h.b16 %v2170
      %v2217 = vunpack.c.l.b16 %v2171
      %v2218 = vunpack.c.h.b16 %v2171
      %v2219 = vunpack.c.l.b16 %v2172
      %v2220 = vunpack.c.h.b16 %v2172
      %v2221 = vunpack.c.l.b16 %v2173
      %v2222 = vunpack.c.h.b16 %v2173
      %v2223 = vunpack.c.l.b16 %v2174
      %v2224 = vunpack.c.h.b16 %v2174
      %v2225 = vunpack.c.l.b16 %v2175
      %v2226 = vunpack.c.h.b16 %v2175
      %v2227 = vpack.c.b16 %v2197, %v2195
      %v2228 = vpack.c.b16 %v2198, %v2196
      %v2229 = vpack.c.b16 %v2201, %v2199
      %v2230 = vpack.c.b16 %v2202, %v2200
      %v2231 = vpack.c.b16 %v2205, %v2203
      %v2232 = vpack.c.b16 %v2206, %v2204
      %v2233 = vpack.c.b16 %v2209, %v2207
      %v2234 = vpack.c.b16 %v2210, %v2208
      %v2235 = vpack.c.b16 %v2213, %v2211
      %v2236 = vpack.c.b16 %v2214, %v2212
      %v2237 = vpack.c.b16 %v2217, %v2215
      %v2238 = vpack.c.b16 %v2218, %v2216
      %v2239 = vpack.c.b16 %v2221, %v2219
      %v2240 = vpack.c.b16 %v2222, %v2220
      %v2241 = vpack.c.b16 %v2225, %v2223
      %v2242 = vpack.c.b16 %v2226, %v2224
      %2259 = vmatpush.bf16.msra.mxu0 %v2241
      %2260 = vmatpush.bf16.msra.mxu0 %v2239
      %2261 = vmatpush.bf16.msra.mxu0 %v2237
      %2262 = vmatpush.bf16.msra.mxu0 %v2235
      %2263 = vmatpush.bf16.msra.mxu0 %v2233
      %2264 = vmatpush.bf16.msra.mxu0 %v2231
      %2265 = vmatpush.bf16.msra.mxu0 %v2229
      %2266 = vmatpush.bf16.msra.mxu0 %v2227
      %2267 = vmatmul.bf16.gmra.mxu0 %v2177
      %v2268 = vpop.f32.mrf.mxu0
      %v2269 = vadd.f32 0.0, %v2268
      %v2270 = vpop.f32.mrf.mxu0
      %2271 = vdwg.mxu0
      %2272 = vmatpush.bf16.msra.mxu0 %v2242
      %2273 = vmatpush.bf16.msra.mxu0 %v2240
      %2274 = vmatpush.bf16.msra.mxu0 %v2238
      %2275 = vmatpush.bf16.msra.mxu0 %v2236
      %2276 = vmatpush.bf16.msra.mxu0 %v2234
      %2277 = vmatpush.bf16.msra.mxu0 %v2232
      %2278 = vmatpush.bf16.msra.mxu0 %v2230
      %2279 = vmatpush.bf16.msra.mxu0 %v2228
      %2280 = vmatmul.bf16.gmra.mxu0 %v2177
      %v2281 = vpop.f32.mrf.mxu0
      %v2282 = vadd.f32 0.0, %v2281
      %v2283 = vpop.f32.mrf.mxu0
      %2284 = vdwg.mxu0
      %v2285 = vadd.f32 %v2157, %v2269
      %v2286 = vadd.f32 %v2158, %v2282
      %v2287 = vpack.c.bf16 %v1273, %v1273
      %s2288 = scalar_lea.vmem %s9, 1024
      %v2289 = vld [vmem:[%s2288] sm:$0xff]
      %v2290 = vld [vmem:[%s2288 + $0x8] sm:$0xff]
      %v2291 = vld [vmem:[%s2288 + $0x10] sm:$0xff]
      %v2292 = vld [vmem:[%s2288 + $0x18] sm:$0xff]
      %v2293 = vld [vmem:[%s2288 + $0x20] sm:$0xff]
      %v2294 = vld [vmem:[%s2288 + $0x28] sm:$0xff]
      %v2295 = vld [vmem:[%s2288 + $0x30] sm:$0xff]
      %v2296 = vld [vmem:[%s2288 + $0x38] sm:$0xff]
      %v2297 = vld [vmem:[%s2288 + $0x40] sm:$0xff]
      %v2298 = vld [vmem:[%s2288 + $0x48] sm:$0xff]
      %v2299 = vld [vmem:[%s2288 + $0x50] sm:$0xff]
      %v2300 = vld [vmem:[%s2288 + $0x58] sm:$0xff]
      %v2301 = vld [vmem:[%s2288 + $0x60] sm:$0xff]
      %v2302 = vld [vmem:[%s2288 + $0x68] sm:$0xff]
      %v2303 = vld [vmem:[%s2288 + $0x70] sm:$0xff]
      %v2304 = vld [vmem:[%s2288 + $0x78] sm:$0xff]
      %v2321 = vunpack.c.l.b16 %v2289
      %v2322 = vunpack.c.h.b16 %v2289
      %v2323 = vunpack.c.l.b16 %v2290
      %v2324 = vunpack.c.h.b16 %v2290
      %v2325 = vunpack.c.l.b16 %v2291
      %v2326 = vunpack.c.h.b16 %v2291
      %v2327 = vunpack.c.l.b16 %v2292
      %v2328 = vunpack.c.h.b16 %v2292
      %v2329 = vunpack.c.l.b16 %v2293
      %v2330 = vunpack.c.h.b16 %v2293
      %v2331 = vunpack.c.l.b16 %v2294
      %v2332 = vunpack.c.h.b16 %v2294
      %v2333 = vunpack.c.l.b16 %v2295
      %v2334 = vunpack.c.h.b16 %v2295
      %v2335 = vunpack.c.l.b16 %v2296
      %v2336 = vunpack.c.h.b16 %v2296
      %v2337 = vunpack.c.l.b16 %v2297
      %v2338 = vunpack.c.h.b16 %v2297
      %v2339 = vunpack.c.l.b16 %v2298
      %v2340 = vunpack.c.h.b16 %v2298
      %v2341 = vunpack.c.l.b16 %v2299
      %v2342 = vunpack.c.h.b16 %v2299
      %v2343 = vunpack.c.l.b16 %v2300
      %v2344 = vunpack.c.h.b16 %v2300
      %v2345 = vunpack.c.l.b16 %v2301
      %v2346 = vunpack.c.h.b16 %v2301
      %v2347 = vunpack.c.l.b16 %v2302
      %v2348 = vunpack.c.h.b16 %v2302
      %v2349 = vunpack.c.l.b16 %v2303
      %v2350 = vunpack.c.h.b16 %v2303
      %v2351 = vunpack.c.l.b16 %v2304
      %v2352 = vunpack.c.h.b16 %v2304
      %v2353 = vpack.c.b16 %v2323, %v2321
      %v2354 = vpack.c.b16 %v2324, %v2322
      %v2355 = vpack.c.b16 %v2327, %v2325
      %v2356 = vpack.c.b16 %v2328, %v2326
      %v2357 = vpack.c.b16 %v2331, %v2329
      %v2358 = vpack.c.b16 %v2332, %v2330
      %v2359 = vpack.c.b16 %v2335, %v2333
      %v2360 = vpack.c.b16 %v2336, %v2334
      %v2361 = vpack.c.b16 %v2339, %v2337
      %v2362 = vpack.c.b16 %v2340, %v2338
      %v2363 = vpack.c.b16 %v2343, %v2341
      %v2364 = vpack.c.b16 %v2344, %v2342
      %v2365 = vpack.c.b16 %v2347, %v2345
      %v2366 = vpack.c.b16 %v2348, %v2346
      %v2367 = vpack.c.b16 %v2351, %v2349
      %v2368 = vpack.c.b16 %v2352, %v2350
      %2385 = vmatpush.bf16.msra.mxu0 %v2367
      %2386 = vmatpush.bf16.msra.mxu0 %v2365
      %2387 = vmatpush.bf16.msra.mxu0 %v2363
      %2388 = vmatpush.bf16.msra.mxu0 %v2361
      %2389 = vmatpush.bf16.msra.mxu0 %v2359
      %2390 = vmatpush.bf16.msra.mxu0 %v2357
      %2391 = vmatpush.bf16.msra.mxu0 %v2355
      %2392 = vmatpush.bf16.msra.mxu0 %v2353
      %2393 = vmatmul.bf16.gmra.mxu0 %v2287
      %v2394 = vpop.f32.mrf.mxu0
      %v2395 = vadd.f32 0.0, %v2394
      %v2396 = vpop.f32.mrf.mxu0
      %2397 = vdwg.mxu0
      %2398 = vmatpush.bf16.msra.mxu0 %v2368
      %2399 = vmatpush.bf16.msra.mxu0 %v2366
      %2400 = vmatpush.bf16.msra.mxu0 %v2364
      %2401 = vmatpush.bf16.msra.mxu0 %v2362
      %2402 = vmatpush.bf16.msra.mxu0 %v2360
      %2403 = vmatpush.bf16.msra.mxu0 %v2358
      %2404 = vmatpush.bf16.msra.mxu0 %v2356
      %2405 = vmatpush.bf16.msra.mxu0 %v2354
      %2406 = vmatmul.bf16.gmra.mxu0 %v2287
      %v2407 = vpop.f32.mrf.mxu0
      %v2408 = vadd.f32 0.0, %v2407
      %v2409 = vpop.f32.mrf.mxu0
      %2410 = vdwg.mxu0
      %v2411 = vadd.f32 %v2285, %v2395
      %v2412 = vadd.f32 %v2286, %v2408
      %v2413 = vld [vmem:[%s10] sm:$0x3]
      %v2415 = vperm.slane %v2413, 0
      %v2416 = vperm.slane %v2413, 1
      %v2419 = vmul.f32 %v2411, %v2415
      %v2420 = vmul.f32 %v2412, %v2416
      %v2421 = vld [vmem:[%s11] sm:$0x3]
      %v2423 = vperm.slane %v2421, 0
      %v2424 = vperm.slane %v2421, 1
      %v2427 = vadd.f32 %v2419, %v2423
      %v2428 = vadd.f32 %v2420, %v2424
      %v2429 = vmax.f32 %v2427, 0.0
      %v2430 = vmax.f32 %v2428, 0.0
      %v2431 = vld [vmem:[%s13] sm:$0x1]
      %v2432 = vpack.c.bf16 %v2429, %v2429
      %v2433 = vpack.c.bf16 %v2430, %v2430
      %v2434 = vld [vmem:[%s12] sm:$0xf]
      %v2435 = vld [vmem:[%s12 + $0x4] sm:$0xf]
      %v2436 = vld [vmem:[%s12 + $0x8] sm:$0xf]
      %v2437 = vld [vmem:[%s12 + $0xc] sm:$0xf]
      %v2438 = vld [vmem:[%s12 + $0x10] sm:$0xf]
      %v2439 = vld [vmem:[%s12 + $0x14] sm:$0xf]
      %v2440 = vld [vmem:[%s12 + $0x18] sm:$0xf]
      %v2441 = vld [vmem:[%s12 + $0x1c] sm:$0xf]
      %v2442 = vld [vmem:[%s12 + $0x20] sm:$0xf]
      %v2443 = vld [vmem:[%s12 + $0x24] sm:$0xf]
      %v2444 = vld [vmem:[%s12 + $0x28] sm:$0xf]
      %v2445 = vld [vmem:[%s12 + $0x2c] sm:$0xf]
      %v2446 = vld [vmem:[%s12 + $0x30] sm:$0xf]
      %v2447 = vld [vmem:[%s12 + $0x34] sm:$0xf]
      %v2448 = vld [vmem:[%s12 + $0x38] sm:$0xf]
      %v2449 = vld [vmem:[%s12 + $0x3c] sm:$0xf]
      %v2450 = vld [vmem:[%s12 + $0x40] sm:$0xf]
      %v2451 = vld [vmem:[%s12 + $0x44] sm:$0xf]
      %v2452 = vld [vmem:[%s12 + $0x48] sm:$0xf]
      %v2453 = vld [vmem:[%s12 + $0x4c] sm:$0xf]
      %v2454 = vld [vmem:[%s12 + $0x50] sm:$0xf]
      %v2455 = vld [vmem:[%s12 + $0x54] sm:$0xf]
      %v2456 = vld [vmem:[%s12 + $0x58] sm:$0xf]
      %v2457 = vld [vmem:[%s12 + $0x5c] sm:$0xf]
      %v2458 = vld [vmem:[%s12 + $0x60] sm:$0xf]
      %v2459 = vld [vmem:[%s12 + $0x64] sm:$0xf]
      %v2460 = vld [vmem:[%s12 + $0x68] sm:$0xf]
      %v2461 = vld [vmem:[%s12 + $0x6c] sm:$0xf]
      %v2462 = vld [vmem:[%s12 + $0x70] sm:$0xf]
      %v2463 = vld [vmem:[%s12 + $0x74] sm:$0xf]
      %v2464 = vld [vmem:[%s12 + $0x78] sm:$0xf]
      %v2465 = vld [vmem:[%s12 + $0x7c] sm:$0xf]
      %v2498 = vunpack.c.l.b16 %v2434
      %v2499 = vunpack.c.l.b16 %v2435
      %v2500 = vunpack.c.l.b16 %v2436
      %v2501 = vunpack.c.l.b16 %v2437
      %v2502 = vunpack.c.l.b16 %v2438
      %v2503 = vunpack.c.l.b16 %v2439
      %v2504 = vunpack.c.l.b16 %v2440
      %v2505 = vunpack.c.l.b16 %v2441
      %v2506 = vunpack.c.l.b16 %v2442
      %v2507 = vunpack.c.l.b16 %v2443
      %v2508 = vunpack.c.l.b16 %v2444
      %v2509 = vunpack.c.l.b16 %v2445
      %v2510 = vunpack.c.l.b16 %v2446
      %v2511 = vunpack.c.l.b16 %v2447
      %v2512 = vunpack.c.l.b16 %v2448
      %v2513 = vunpack.c.l.b16 %v2449
      %v2514 = vunpack.c.l.b16 %v2450
      %v2515 = vunpack.c.l.b16 %v2451
      %v2516 = vunpack.c.l.b16 %v2452
      %v2517 = vunpack.c.l.b16 %v2453
      %v2518 = vunpack.c.l.b16 %v2454
      %v2519 = vunpack.c.l.b16 %v2455
      %v2520 = vunpack.c.l.b16 %v2456
      %v2521 = vunpack.c.l.b16 %v2457
      %v2522 = vunpack.c.l.b16 %v2458
      %v2523 = vunpack.c.l.b16 %v2459
      %v2524 = vunpack.c.l.b16 %v2460
      %v2525 = vunpack.c.l.b16 %v2461
      %v2526 = vunpack.c.l.b16 %v2462
      %v2527 = vunpack.c.l.b16 %v2463
      %v2528 = vunpack.c.l.b16 %v2464
      %v2529 = vunpack.c.l.b16 %v2465
      %v2530 = vpack.c.b16 %v2499, %v2498
      %v2531 = vpack.c.b16 %v2501, %v2500
      %v2532 = vpack.c.b16 %v2503, %v2502
      %v2533 = vpack.c.b16 %v2505, %v2504
      %v2534 = vpack.c.b16 %v2507, %v2506
      %v2535 = vpack.c.b16 %v2509, %v2508
      %v2536 = vpack.c.b16 %v2511, %v2510
      %v2537 = vpack.c.b16 %v2513, %v2512
      %v2538 = vpack.c.b16 %v2515, %v2514
      %v2539 = vpack.c.b16 %v2517, %v2516
      %v2540 = vpack.c.b16 %v2519, %v2518
      %v2541 = vpack.c.b16 %v2521, %v2520
      %v2542 = vpack.c.b16 %v2523, %v2522
      %v2543 = vpack.c.b16 %v2525, %v2524
      %v2544 = vpack.c.b16 %v2527, %v2526
      %v2545 = vpack.c.b16 %v2529, %v2528
      %2562 = vmatpush.bf16.msra.mxu0 %v2537
      %2563 = vmatpush.bf16.msra.mxu0 %v2536
      %2564 = vmatpush.bf16.msra.mxu0 %v2535
      %2565 = vmatpush.bf16.msra.mxu0 %v2534
      %2566 = vmatpush.bf16.msra.mxu0 %v2533
      %2567 = vmatpush.bf16.msra.mxu0 %v2532
      %2568 = vmatpush.bf16.msra.mxu0 %v2531
      %2569 = vmatpush.bf16.msra.mxu0 %v2530
      %2570 = vmatmul.bf16.gmra.mxu0 %v2432
      %v2571 = vpop.f32.mrf.mxu0
      %v2572 = vadd.f32 0.0, %v2571
      %v2573 = vpop.f32.mrf.mxu0
      %2574 = vdwg.mxu0
      %2575 = vmatpush.bf16.msra.mxu0 %v2545
      %2576 = vmatpush.bf16.msra.mxu0 %v2544
      %2577 = vmatpush.bf16.msra.mxu0 %v2543
      %2578 = vmatpush.bf16.msra.mxu0 %v2542
      %2579 = vmatpush.bf16.msra.mxu0 %v2541
      %2580 = vmatpush.bf16.msra.mxu0 %v2540
      %2581 = vmatpush.bf16.msra.mxu0 %v2539
      %2582 = vmatpush.bf16.msra.mxu0 %v2538
      %2583 = vmatmul.bf16.gmra.mxu0 %v2433
      %v2584 = vpop.f32.mrf.mxu0
      %v2585 = vadd.f32 %v2572, %v2584
      %v2586 = vpop.f32.mrf.mxu0
      %2587 = vdwg.mxu0
      %v2588 = vadd.f32 %v2431, %v2585
      %s2589 = scalar_lea.vmem %s12, 128
      %v2590 = vld [vmem:[%s2589] sm:$0xf]
      %v2591 = vld [vmem:[%s2589 + $0x4] sm:$0xf]
      %v2592 = vld [vmem:[%s2589 + $0x8] sm:$0xf]
      %v2593 = vld [vmem:[%s2589 + $0xc] sm:$0xf]
      %v2594 = vld [vmem:[%s2589 + $0x10] sm:$0xf]
      %v2595 = vld [vmem:[%s2589 + $0x14] sm:$0xf]
      %v2596 = vld [vmem:[%s2589 + $0x18] sm:$0xf]
      %v2597 = vld [vmem:[%s2589 + $0x1c] sm:$0xf]
      %v2598 = vld [vmem:[%s2589 + $0x20] sm:$0xf]
      %v2599 = vld [vmem:[%s2589 + $0x24] sm:$0xf]
      %v2600 = vld [vmem:[%s2589 + $0x28] sm:$0xf]
      %v2601 = vld [vmem:[%s2589 + $0x2c] sm:$0xf]
      %v2602 = vld [vmem:[%s2589 + $0x30] sm:$0xf]
      %v2603 = vld [vmem:[%s2589 + $0x34] sm:$0xf]
      %v2604 = vld [vmem:[%s2589 + $0x38] sm:$0xf]
      %v2605 = vld [vmem:[%s2589 + $0x3c] sm:$0xf]
      %v2606 = vld [vmem:[%s2589 + $0x40] sm:$0xf]
      %v2607 = vld [vmem:[%s2589 + $0x44] sm:$0xf]
      %v2608 = vld [vmem:[%s2589 + $0x48] sm:$0xf]
      %v2609 = vld [vmem:[%s2589 + $0x4c] sm:$0xf]
      %v2610 = vld [vmem:[%s2589 + $0x50] sm:$0xf]
      %v2611 = vld [vmem:[%s2589 + $0x54] sm:$0xf]
      %v2612 = vld [vmem:[%s2589 + $0x58] sm:$0xf]
      %v2613 = vld [vmem:[%s2589 + $0x5c] sm:$0xf]
      %v2614 = vld [vmem:[%s2589 + $0x60] sm:$0xf]
      %v2615 = vld [vmem:[%s2589 + $0x64] sm:$0xf]
      %v2616 = vld [vmem:[%s2589 + $0x68] sm:$0xf]
      %v2617 = vld [vmem:[%s2589 + $0x6c] sm:$0xf]
      %v2618 = vld [vmem:[%s2589 + $0x70] sm:$0xf]
      %v2619 = vld [vmem:[%s2589 + $0x74] sm:$0xf]
      %v2620 = vld [vmem:[%s2589 + $0x78] sm:$0xf]
      %v2621 = vld [vmem:[%s2589 + $0x7c] sm:$0xf]
      %v2623 = vshrl.u32 %v2432, 16
      %v2626 = vshrl.u32 %v2433, 16
      %v2662 = vunpack.c.l.b16 %v2590
      %v2663 = vunpack.c.l.b16 %v2591
      %v2664 = vunpack.c.l.b16 %v2592
      %v2665 = vunpack.c.l.b16 %v2593
      %v2666 = vunpack.c.l.b16 %v2594
      %v2667 = vunpack.c.l.b16 %v2595
      %v2668 = vunpack.c.l.b16 %v2596
      %v2669 = vunpack.c.l.b16 %v2597
      %v2670 = vunpack.c.l.b16 %v2598
      %v2671 = vunpack.c.l.b16 %v2599
      %v2672 = vunpack.c.l.b16 %v2600
      %v2673 = vunpack.c.l.b16 %v2601
      %v2674 = vunpack.c.l.b16 %v2602
      %v2675 = vunpack.c.l.b16 %v2603
      %v2676 = vunpack.c.l.b16 %v2604
      %v2677 = vunpack.c.l.b16 %v2605
      %v2678 = vunpack.c.l.b16 %v2606
      %v2679 = vunpack.c.l.b16 %v2607
      %v2680 = vunpack.c.l.b16 %v2608
      %v2681 = vunpack.c.l.b16 %v2609
      %v2682 = vunpack.c.l.b16 %v2610
      %v2683 = vunpack.c.l.b16 %v2611
      %v2684 = vunpack.c.l.b16 %v2612
      %v2685 = vunpack.c.l.b16 %v2613
      %v2686 = vunpack.c.l.b16 %v2614
      %v2687 = vunpack.c.l.b16 %v2615
      %v2688 = vunpack.c.l.b16 %v2616
      %v2689 = vunpack.c.l.b16 %v2617
      %v2690 = vunpack.c.l.b16 %v2618
      %v2691 = vunpack.c.l.b16 %v2619
      %v2692 = vunpack.c.l.b16 %v2620
      %v2693 = vunpack.c.l.b16 %v2621
      %v2694 = vpack.c.b16 %v2663, %v2662
      %v2695 = vpack.c.b16 %v2665, %v2664
      %v2696 = vpack.c.b16 %v2667, %v2666
      %v2697 = vpack.c.b16 %v2669, %v2668
      %v2698 = vpack.c.b16 %v2671, %v2670
      %v2699 = vpack.c.b16 %v2673, %v2672
      %v2700 = vpack.c.b16 %v2675, %v2674
      %v2701 = vpack.c.b16 %v2677, %v2676
      %v2702 = vpack.c.b16 %v2679, %v2678
      %v2703 = vpack.c.b16 %v2681, %v2680
      %v2704 = vpack.c.b16 %v2683, %v2682
      %v2705 = vpack.c.b16 %v2685, %v2684
      %v2706 = vpack.c.b16 %v2687, %v2686
      %v2707 = vpack.c.b16 %v2689, %v2688
      %v2708 = vpack.c.b16 %v2691, %v2690
      %v2709 = vpack.c.b16 %v2693, %v2692
      %2726 = vmatpush.bf16.msra.mxu0 %v2701
      %2727 = vmatpush.bf16.msra.mxu0 %v2700
      %2728 = vmatpush.bf16.msra.mxu0 %v2699
      %2729 = vmatpush.bf16.msra.mxu0 %v2698
      %2730 = vmatpush.bf16.msra.mxu0 %v2697
      %2731 = vmatpush.bf16.msra.mxu0 %v2696
      %2732 = vmatpush.bf16.msra.mxu0 %v2695
      %2733 = vmatpush.bf16.msra.mxu0 %v2694
      %2734 = vmatmul.bf16.gmra.mxu0 %v2623
      %v2735 = vpop.f32.mrf.mxu0
      %v2736 = vadd.f32 0.0, %v2735
      %v2737 = vpop.f32.mrf.mxu0
      %2738 = vdwg.mxu0
      %2739 = vmatpush.bf16.msra.mxu0 %v2709
      %2740 = vmatpush.bf16.msra.mxu0 %v2708
      %2741 = vmatpush.bf16.msra.mxu0 %v2707
      %2742 = vmatpush.bf16.msra.mxu0 %v2706
      %2743 = vmatpush.bf16.msra.mxu0 %v2705
      %2744 = vmatpush.bf16.msra.mxu0 %v2704
      %2745 = vmatpush.bf16.msra.mxu0 %v2703
      %2746 = vmatpush.bf16.msra.mxu0 %v2702
      %2747 = vmatmul.bf16.gmra.mxu0 %v2626
      %v2748 = vpop.f32.mrf.mxu0
      %v2749 = vadd.f32 %v2736, %v2748
      %v2750 = vpop.f32.mrf.mxu0
      %2751 = vdwg.mxu0
      %v2752 = vadd.f32 %v2588, %v2749
      %s2753 = scalar_lea.vmem %s12, 256
      %v2754 = vld [vmem:[%s2753] sm:$0xf]
      %v2755 = vld [vmem:[%s2753 + $0x4] sm:$0xf]
      %v2756 = vld [vmem:[%s2753 + $0x8] sm:$0xf]
      %v2757 = vld [vmem:[%s2753 + $0xc] sm:$0xf]
      %v2758 = vld [vmem:[%s2753 + $0x10] sm:$0xf]
      %v2759 = vld [vmem:[%s2753 + $0x14] sm:$0xf]
      %v2760 = vld [vmem:[%s2753 + $0x18] sm:$0xf]
      %v2761 = vld [vmem:[%s2753 + $0x1c] sm:$0xf]
      %v2762 = vld [vmem:[%s2753 + $0x20] sm:$0xf]
      %v2763 = vld [vmem:[%s2753 + $0x24] sm:$0xf]
      %v2764 = vld [vmem:[%s2753 + $0x28] sm:$0xf]
      %v2765 = vld [vmem:[%s2753 + $0x2c] sm:$0xf]
      %v2766 = vld [vmem:[%s2753 + $0x30] sm:$0xf]
      %v2767 = vld [vmem:[%s2753 + $0x34] sm:$0xf]
      %v2768 = vld [vmem:[%s2753 + $0x38] sm:$0xf]
      %v2769 = vld [vmem:[%s2753 + $0x3c] sm:$0xf]
      %v2770 = vld [vmem:[%s2753 + $0x40] sm:$0xf]
      %v2771 = vld [vmem:[%s2753 + $0x44] sm:$0xf]
      %v2772 = vld [vmem:[%s2753 + $0x48] sm:$0xf]
      %v2773 = vld [vmem:[%s2753 + $0x4c] sm:$0xf]
      %v2774 = vld [vmem:[%s2753 + $0x50] sm:$0xf]
      %v2775 = vld [vmem:[%s2753 + $0x54] sm:$0xf]
      %v2776 = vld [vmem:[%s2753 + $0x58] sm:$0xf]
      %v2777 = vld [vmem:[%s2753 + $0x5c] sm:$0xf]
      %v2778 = vld [vmem:[%s2753 + $0x60] sm:$0xf]
      %v2779 = vld [vmem:[%s2753 + $0x64] sm:$0xf]
      %v2780 = vld [vmem:[%s2753 + $0x68] sm:$0xf]
      %v2781 = vld [vmem:[%s2753 + $0x6c] sm:$0xf]
      %v2782 = vld [vmem:[%s2753 + $0x70] sm:$0xf]
      %v2783 = vld [vmem:[%s2753 + $0x74] sm:$0xf]
      %v2784 = vld [vmem:[%s2753 + $0x78] sm:$0xf]
      %v2785 = vld [vmem:[%s2753 + $0x7c] sm:$0xf]
      %v2788 = vrot.slane %v2432, 1
      %v2789 = vrot.slane %v2433, 1
      %v2824 = vunpack.c.l.b16 %v2754
      %v2825 = vunpack.c.l.b16 %v2755
      %v2826 = vunpack.c.l.b16 %v2756
      %v2827 = vunpack.c.l.b16 %v2757
      %v2828 = vunpack.c.l.b16 %v2758
      %v2829 = vunpack.c.l.b16 %v2759
      %v2830 = vunpack.c.l.b16 %v2760
      %v2831 = vunpack.c.l.b16 %v2761
      %v2832 = vunpack.c.l.b16 %v2762
      %v2833 = vunpack.c.l.b16 %v2763
      %v2834 = vunpack.c.l.b16 %v2764
      %v2835 = vunpack.c.l.b16 %v2765
      %v2836 = vunpack.c.l.b16 %v2766
      %v2837 = vunpack.c.l.b16 %v2767
      %v2838 = vunpack.c.l.b16 %v2768
      %v2839 = vunpack.c.l.b16 %v2769
      %v2840 = vunpack.c.l.b16 %v2770
      %v2841 = vunpack.c.l.b16 %v2771
      %v2842 = vunpack.c.l.b16 %v2772
      %v2843 = vunpack.c.l.b16 %v2773
      %v2844 = vunpack.c.l.b16 %v2774
      %v2845 = vunpack.c.l.b16 %v2775
      %v2846 = vunpack.c.l.b16 %v2776
      %v2847 = vunpack.c.l.b16 %v2777
      %v2848 = vunpack.c.l.b16 %v2778
      %v2849 = vunpack.c.l.b16 %v2779
      %v2850 = vunpack.c.l.b16 %v2780
      %v2851 = vunpack.c.l.b16 %v2781
      %v2852 = vunpack.c.l.b16 %v2782
      %v2853 = vunpack.c.l.b16 %v2783
      %v2854 = vunpack.c.l.b16 %v2784
      %v2855 = vunpack.c.l.b16 %v2785
      %v2856 = vpack.c.b16 %v2825, %v2824
      %v2857 = vpack.c.b16 %v2827, %v2826
      %v2858 = vpack.c.b16 %v2829, %v2828
      %v2859 = vpack.c.b16 %v2831, %v2830
      %v2860 = vpack.c.b16 %v2833, %v2832
      %v2861 = vpack.c.b16 %v2835, %v2834
      %v2862 = vpack.c.b16 %v2837, %v2836
      %v2863 = vpack.c.b16 %v2839, %v2838
      %v2864 = vpack.c.b16 %v2841, %v2840
      %v2865 = vpack.c.b16 %v2843, %v2842
      %v2866 = vpack.c.b16 %v2845, %v2844
      %v2867 = vpack.c.b16 %v2847, %v2846
      %v2868 = vpack.c.b16 %v2849, %v2848
      %v2869 = vpack.c.b16 %v2851, %v2850
      %v2870 = vpack.c.b16 %v2853, %v2852
      %v2871 = vpack.c.b16 %v2855, %v2854
      %2888 = vmatpush.bf16.msra.mxu0 %v2863
      %2889 = vmatpush.bf16.msra.mxu0 %v2862
      %2890 = vmatpush.bf16.msra.mxu0 %v2861
      %2891 = vmatpush.bf16.msra.mxu0 %v2860
      %2892 = vmatpush.bf16.msra.mxu0 %v2859
      %2893 = vmatpush.bf16.msra.mxu0 %v2858
      %2894 = vmatpush.bf16.msra.mxu0 %v2857
      %2895 = vmatpush.bf16.msra.mxu0 %v2856
      %2896 = vmatmul.bf16.gmra.mxu0 %v2788
      %v2897 = vpop.f32.mrf.mxu0
      %v2898 = vadd.f32 0.0, %v2897
      %v2899 = vpop.f32.mrf.mxu0
      %2900 = vdwg.mxu0
      %2901 = vmatpush.bf16.msra.mxu0 %v2871
      %2902 = vmatpush.bf16.msra.mxu0 %v2870
      %2903 = vmatpush.bf16.msra.mxu0 %v2869
      %2904 = vmatpush.bf16.msra.mxu0 %v2868
      %2905 = vmatpush.bf16.msra.mxu0 %v2867
      %2906 = vmatpush.bf16.msra.mxu0 %v2866
      %2907 = vmatpush.bf16.msra.mxu0 %v2865
      %2908 = vmatpush.bf16.msra.mxu0 %v2864
      %2909 = vmatmul.bf16.gmra.mxu0 %v2789
      %v2910 = vpop.f32.mrf.mxu0
      %v2911 = vadd.f32 %v2898, %v2910
      %v2912 = vpop.f32.mrf.mxu0
      %2913 = vdwg.mxu0
      %v2914 = vadd.f32 %v2752, %v2911
      %s2915 = scalar_lea.vmem %s12, 384
      %v2916 = vld [vmem:[%s2915] sm:$0xf]
      %v2917 = vld [vmem:[%s2915 + $0x4] sm:$0xf]
      %v2918 = vld [vmem:[%s2915 + $0x8] sm:$0xf]
      %v2919 = vld [vmem:[%s2915 + $0xc] sm:$0xf]
      %v2920 = vld [vmem:[%s2915 + $0x10] sm:$0xf]
      %v2921 = vld [vmem:[%s2915 + $0x14] sm:$0xf]
      %v2922 = vld [vmem:[%s2915 + $0x18] sm:$0xf]
      %v2923 = vld [vmem:[%s2915 + $0x1c] sm:$0xf]
      %v2924 = vld [vmem:[%s2915 + $0x20] sm:$0xf]
      %v2925 = vld [vmem:[%s2915 + $0x24] sm:$0xf]
      %v2926 = vld [vmem:[%s2915 + $0x28] sm:$0xf]
      %v2927 = vld [vmem:[%s2915 + $0x2c] sm:$0xf]
      %v2928 = vld [vmem:[%s2915 + $0x30] sm:$0xf]
      %v2929 = vld [vmem:[%s2915 + $0x34] sm:$0xf]
      %v2930 = vld [vmem:[%s2915 + $0x38] sm:$0xf]
      %v2931 = vld [vmem:[%s2915 + $0x3c] sm:$0xf]
      %v2932 = vld [vmem:[%s2915 + $0x40] sm:$0xf]
      %v2933 = vld [vmem:[%s2915 + $0x44] sm:$0xf]
      %v2934 = vld [vmem:[%s2915 + $0x48] sm:$0xf]
      %v2935 = vld [vmem:[%s2915 + $0x4c] sm:$0xf]
      %v2936 = vld [vmem:[%s2915 + $0x50] sm:$0xf]
      %v2937 = vld [vmem:[%s2915 + $0x54] sm:$0xf]
      %v2938 = vld [vmem:[%s2915 + $0x58] sm:$0xf]
      %v2939 = vld [vmem:[%s2915 + $0x5c] sm:$0xf]
      %v2940 = vld [vmem:[%s2915 + $0x60] sm:$0xf]
      %v2941 = vld [vmem:[%s2915 + $0x64] sm:$0xf]
      %v2942 = vld [vmem:[%s2915 + $0x68] sm:$0xf]
      %v2943 = vld [vmem:[%s2915 + $0x6c] sm:$0xf]
      %v2944 = vld [vmem:[%s2915 + $0x70] sm:$0xf]
      %v2945 = vld [vmem:[%s2915 + $0x74] sm:$0xf]
      %v2946 = vld [vmem:[%s2915 + $0x78] sm:$0xf]
      %v2947 = vld [vmem:[%s2915 + $0x7c] sm:$0xf]
      %v2948 = vrot.slane %v2623, 1
      %v2949 = vrot.slane %v2626, 1
      %v2984 = vunpack.c.l.b16 %v2916
      %v2985 = vunpack.c.l.b16 %v2917
      %v2986 = vunpack.c.l.b16 %v2918
      %v2987 = vunpack.c.l.b16 %v2919
      %v2988 = vunpack.c.l.b16 %v2920
      %v2989 = vunpack.c.l.b16 %v2921
      %v2990 = vunpack.c.l.b16 %v2922
      %v2991 = vunpack.c.l.b16 %v2923
      %v2992 = vunpack.c.l.b16 %v2924
      %v2993 = vunpack.c.l.b16 %v2925
      %v2994 = vunpack.c.l.b16 %v2926
      %v2995 = vunpack.c.l.b16 %v2927
      %v2996 = vunpack.c.l.b16 %v2928
      %v2997 = vunpack.c.l.b16 %v2929
      %v2998 = vunpack.c.l.b16 %v2930
      %v2999 = vunpack.c.l.b16 %v2931
      %v3000 = vunpack.c.l.b16 %v2932
      %v3001 = vunpack.c.l.b16 %v2933
      %v3002 = vunpack.c.l.b16 %v2934
      %v3003 = vunpack.c.l.b16 %v2935
      %v3004 = vunpack.c.l.b16 %v2936
      %v3005 = vunpack.c.l.b16 %v2937
      %v3006 = vunpack.c.l.b16 %v2938
      %v3007 = vunpack.c.l.b16 %v2939
      %v3008 = vunpack.c.l.b16 %v2940
      %v3009 = vunpack.c.l.b16 %v2941
      %v3010 = vunpack.c.l.b16 %v2942
      %v3011 = vunpack.c.l.b16 %v2943
      %v3012 = vunpack.c.l.b16 %v2944
      %v3013 = vunpack.c.l.b16 %v2945
      %v3014 = vunpack.c.l.b16 %v2946
      %v3015 = vunpack.c.l.b16 %v2947
      %v3016 = vpack.c.b16 %v2985, %v2984
      %v3017 = vpack.c.b16 %v2987, %v2986
      %v3018 = vpack.c.b16 %v2989, %v2988
      %v3019 = vpack.c.b16 %v2991, %v2990
      %v3020 = vpack.c.b16 %v2993, %v2992
      %v3021 = vpack.c.b16 %v2995, %v2994
      %v3022 = vpack.c.b16 %v2997, %v2996
      %v3023 = vpack.c.b16 %v2999, %v2998
      %v3024 = vpack.c.b16 %v3001, %v3000
      %v3025 = vpack.c.b16 %v3003, %v3002
      %v3026 = vpack.c.b16 %v3005, %v3004
      %v3027 = vpack.c.b16 %v3007, %v3006
      %v3028 = vpack.c.b16 %v3009, %v3008
      %v3029 = vpack.c.b16 %v3011, %v3010
      %v3030 = vpack.c.b16 %v3013, %v3012
      %v3031 = vpack.c.b16 %v3015, %v3014
      %3048 = vmatpush.bf16.msra.mxu0 %v3023
      %3049 = vmatpush.bf16.msra.mxu0 %v3022
      %3050 = vmatpush.bf16.msra.mxu0 %v3021
      %3051 = vmatpush.bf16.msra.mxu0 %v3020
      %3052 = vmatpush.bf16.msra.mxu0 %v3019
      %3053 = vmatpush.bf16.msra.mxu0 %v3018
      %3054 = vmatpush.bf16.msra.mxu0 %v3017
      %3055 = vmatpush.bf16.msra.mxu0 %v3016
      %3056 = vmatmul.bf16.gmra.mxu0 %v2948
      %v3057 = vpop.f32.mrf.mxu0
      %v3058 = vadd.f32 0.0, %v3057
      %v3059 = vpop.f32.mrf.mxu0
      %3060 = vdwg.mxu0
      %3061 = vmatpush.bf16.msra.mxu0 %v3031
      %3062 = vmatpush.bf16.msra.mxu0 %v3030
      %3063 = vmatpush.bf16.msra.mxu0 %v3029
      %3064 = vmatpush.bf16.msra.mxu0 %v3028
      %3065 = vmatpush.bf16.msra.mxu0 %v3027
      %3066 = vmatpush.bf16.msra.mxu0 %v3026
      %3067 = vmatpush.bf16.msra.mxu0 %v3025
      %3068 = vmatpush.bf16.msra.mxu0 %v3024
      %3069 = vmatmul.bf16.gmra.mxu0 %v2949
      %v3070 = vpop.f32.mrf.mxu0
      %v3071 = vadd.f32 %v3058, %v3070
      %v3072 = vpop.f32.mrf.mxu0
      %3073 = vdwg.mxu0
      %v3074 = vadd.f32 %v2914, %v3071
      %vm3075 = vcmask 516096
      %3076 = vst.msk [vmem:[%s463] sm:$0x1] %vm3075, %v3074
      %p3077 = scmp.lt.s32.totalorder %s25, 1
      %s3078 = scalar_select %p3077, %s25, 1
      %s3079 = scalar_lea.vmem %s14, %s3078
      // Predicated region
      $region77: #{encoder_forward.1} parent=75 // pred_check
        %p3080 = pneg %p342
      $region78: #{encoder_forward.1} parent=75 // pred_check_branch
        %3082 = sbr.rel (%p3080) target = $region80
      $region79: #{encoder_forward.1} parent=75 // pred_region
        _
      $region80: #{encoder_forward.1} parent=75 // pred_fallthru
        _
    $region76: #{encoder_forward.1} parent=5 // pred_fallthru
      _
    %p3083 = scmp.le.s32.totalorder 2, %s20
    // Predicated region
    $region81: #{encoder_forward.1} parent=5 // pred_check
      %p3084 = pneg %p3083
    $region82: #{encoder_forward.1} parent=5 // pred_check_branch
      %3086 = sbr.rel (%p3084) target = $region84
    $region83: #{encoder_forward.1} parent=5 // pred_region
      %s3087 = ssub.s32 %s20, 2
      // Predicated region
      $region85: #{encoder_forward.1} parent=83 // pred_check
        %p3088 = pneg %p348
      $region86: #{encoder_forward.1} parent=83 // pred_check_branch
        %3090 = sbr.rel (%p3088) target = $region88
      $region87: #{encoder_forward.1} parent=83 // pred_region
        %p3091 = scmp.lt.s32.totalorder %s26, 1
        %s3092 = scalar_select %p3091, %s26, 1
        %s3093 = scalar_lea.vmem %s14, %s3092
      $region88: #{encoder_forward.1} parent=83 // pred_fallthru
        _
    $region84: #{encoder_forward.1} parent=5 // pred_fallthru
      _
  $region6: #{encoder_forward.1} parent=0 // loop_footer
    %s24 = sadd.s32 1, %s20
  $region7: #{encoder_forward.1} parent=0 // loop_footer_branch
    %19 = sbr.rel target = $region3
  $region8: #{encoder_forward.1} parent=0 // loop_exit
    _

</llo_original>
